<compile_context>
chip_gen: v6e
topology: v6e:2x2x1
jax: 0.10.0
libtpu: 0.0.40
codegen_flags: <defaults>
</compile_context>

<pallas_src>
import jax
import jax.numpy as jnp
from jax.experimental import pallas as pl
from jax.experimental.pallas import tpu as pltpu

MATMUL_DTYPE = jnp.bfloat16  # MXU fast path on v6e/v7x; accumulation stays f32.


# ----------------------------------------------------------------------------- kernels
def conv_relu_pool_kernel(p_ref, w_ref, b_ref, o_ref):
    """Fused conv (as im2col matmul) + bias + ReLU + 2x2 max-pool for one image.

    p_ref: (1, 4, S, K)  patches, one set per pooling phase (bf16)
    w_ref: (K, C)        conv weights as a matmul matrix (bf16)
    b_ref: (1, C)        bias (f32)
    o_ref: (1, S, C)     pooled feature map, rows = pooled spatial positions (f32)
    """
    w = w_ref[...]
    z = jnp.dot(p_ref[0, 0], w, preferred_element_type=jnp.float32)
    for ph in range(1, 4):  # unrolled: elementwise max across the 4 pooling phases
        z = jnp.maximum(z, jnp.dot(p_ref[0, ph], w, preferred_element_type=jnp.float32))
    o_ref[0] = jnp.maximum(z + b_ref[...], 0.0)


def mlp_head_kernel(x_ref, w1_ref, b1_ref, w2_ref, b2_ref, o_ref):
    """fc1 + ReLU + fc2 + softmax over a batch tile.

    x_ref: (TB, 1600) bf16   w1_ref: (1600, 128) bf16   b1_ref: (1, 128) f32
    w2_ref: (128, 10) f32    b2_ref: (1, 10) f32        o_ref: (TB, 10) f32
    """
    h = jnp.dot(x_ref[...], w1_ref[...], preferred_element_type=jnp.float32)
    h = jnp.maximum(h + b1_ref[...], 0.0)
    z = jnp.dot(h, w2_ref[...], preferred_element_type=jnp.float32) + b2_ref[...]
    z = z - jnp.max(z, axis=-1, keepdims=True)          # stable softmax (lane reduce)
    e = jnp.exp(z)                                       # EUP
    o_ref[...] = e / jnp.sum(e, axis=-1, keepdims=True)


# ----------------------------------------------------------------------------- pallas wrappers
def conv_relu_pool(patches, w, b):
    """patches: (B, 4, S, K), w: (K, C), b: (1, C) -> (B, S, C) pooled feature map."""
    B, P, S, K = patches.shape
    C = w.shape[1]
    return pl.pallas_call(
        conv_relu_pool_kernel,
        out_shape=jax.ShapeDtypeStruct((B, S, C), jnp.float32),
        grid=(B,),
        in_specs=[
            pl.BlockSpec((1, P, S, K), lambda i: (i, 0, 0, 0)),
            pl.BlockSpec((K, C), lambda i: (0, 0)),
            pl.BlockSpec((1, C), lambda i: (0, 0)),
        ],
        out_specs=pl.BlockSpec((1, S, C), lambda i: (i, 0, 0)),
        compiler_params=pltpu.CompilerParams(dimension_semantics=("parallel",)),
    )(patches, w, b)


def mlp_head(x, w1, b1, w2, b2):
    """x: (B, 1600) -> (B, 10) softmax probabilities."""
    B, F = x.shape
    H = w1.shape[1]
    O = w2.shape[1]
    TB = B if B <= 512 else 512          # batch tile; small test batches fit in one block
    return pl.pallas_call(
        mlp_head_kernel,
        out_shape=jax.ShapeDtypeStruct((B, O), jnp.float32),
        grid=(pl.cdiv(B, TB),),
        in_specs=[
            pl.BlockSpec((TB, F), lambda i: (i, 0)),
            pl.BlockSpec((F, H), lambda i: (0, 0)),
            pl.BlockSpec((1, H), lambda i: (0, 0)),
            pl.BlockSpec((H, O), lambda i: (0, 0)),
            pl.BlockSpec((1, O), lambda i: (0, 0)),
        ],
        out_specs=pl.BlockSpec((TB, O), lambda i: (i, 0)),
        compiler_params=pltpu.CompilerParams(dimension_semantics=("parallel",)),
    )(x, w1, b1, w2, b2)


# ----------------------------------------------------------------------------- layout plumbing
def _pool_phase_patches_1ch(x):
    """x: (B, H, W) single-channel -> (B, 4, Ph*Pw, 9) 3x3-conv patches grouped by 2x2
    pooling phase (phase a*2+b holds conv-output positions (2i+a, 2j+b))."""
    B, H, W = x.shape
    Ph, Pw = (H - 2) // 2, (W - 2) // 2
    d = jnp.arange(3)
    phases = []
    for a in range(2):
        for b in range(2):
            hh = (2 * jnp.arange(Ph) + a)[:, None, None, None] + d[None, None, :, None]
            ww = (2 * jnp.arange(Pw) + b)[None, :, None, None] + d[None, None, None, :]
            p = x[:, hh, ww]                               # (B, Ph, Pw, 3, 3)
            phases.append(p.reshape(B, Ph * Pw, 9))
    return jnp.stack(phases, axis=1)


def _pool_phase_patches(fm):
    """fm: (B, H, W, C) -> (B, 4, Ph*Pw, 9*C), patch order = (dh, dw, cin)."""
    B, H, W, C = fm.shape
    Ph, Pw = (H - 2) // 2, (W - 2) // 2
    d = jnp.arange(3)
    phases = []
    for a in range(2):
        for b in range(2):
            hh = (2 * jnp.arange(Ph) + a)[:, None, None, None] + d[None, None, :, None]
            ww = (2 * jnp.arange(Pw) + b)[None, :, None, None] + d[None, None, None, :]
            p = fm[:, hh, ww, :]                           # (B, Ph, Pw, 3, 3, C)
            phases.append(p.reshape(B, Ph * Pw, 9 * C))
    return jnp.stack(phases, axis=1)


def prepare_params(params):
    """Rearrange PyTorch-layout params into the matmul layouts the kernels use."""
    c1w, c1b, c2w, c2b, f1w, f1b, f2w, f2b = params
    w1m = c1w.reshape(128, 9).T.astype(MATMUL_DTYPE)                       # (9, 128)
    b1m = c1b.reshape(1, 128)
    w2m = c2w.transpose(2, 3, 1, 0).reshape(9 * 128, 64).astype(MATMUL_DTYPE)  # (1152, 64)
    b2m = c2b.reshape(1, 64)
    # fc1 expects PyTorch flatten order (c, h, w); our flatten is (h, w, c) -> permute.
    wf1 = f1w.reshape(128, 64, 5, 5).transpose(2, 3, 1, 0).reshape(1600, 128).astype(MATMUL_DTYPE)
    bf1 = f1b.reshape(1, 128)
    wf2 = f2w.T.astype(jnp.float32)                                        # (128, 10)
    bf2 = f2b.reshape(1, 10)
    return w1m, b1m, w2m, b2m, wf1, bf1, wf2, bf2


@jax.jit
def pytorch_cnn_forward(x, params):
    """x: (B, 1, 28, 28) f32, params in PyTorch nn.Module layout -> (B, 10) softmax."""
    w1m, b1m, w2m, b2m, wf1, bf1, wf2, bf2 = prepare_params(params)
    B = x.shape[0]
    xs = x[:, 0, :, :]                                                     # single input channel
    p1 = _pool_phase_patches_1ch(xs).astype(MATMUL_DTYPE)                  # (B, 4, 169, 9)
    m1 = conv_relu_pool(p1, w1m, b1m)                                      # (B, 169, 128)
    p2 = _pool_phase_patches(m1.reshape(B, 13, 13, 128)).astype(MATMUL_DTYPE)  # (B, 4, 25, 1152)
    m2 = conv_relu_pool(p2, w2m, b2m)                                      # (B, 25, 64)
    flat = m2.reshape(B, 1600).astype(MATMUL_DTYPE)                        # (h, w, c) flatten
    return mlp_head(flat, wf1, bf1, wf2, bf2)                              # (B, 10)


# ----------------------------------------------------------------------------- init + reference
def init_torch_cnn_params(key):
    """PyTorch-layout params with nn default-style uniform(+-1/sqrt(fan_in)) init."""
    ks = jax.random.split(key, 8)

    def u(k, shape, fan_in):
        lim = 1.0 / (fan_in ** 0.5)
        return jax.random.uniform(k, shape, jnp.float32, -lim, lim)

    return (
        u(ks[0], (128, 1, 3, 3), 9), u(ks[1], (128,), 9),
        u(ks[2], (64, 128, 3, 3), 128 * 9), u(ks[3], (64,), 128 * 9),
        u(ks[4], (128, 1600), 1600), u(ks[5], (128,), 1600),
        u(ks[6], (10, 128), 128), u(ks[7], (10,), 128),
    )


def torch_cnn_reference(x, params):
    """Pure-XLA replica of PytorchCNN.forward, for cross-checking the Pallas path."""
    c1w, c1b, c2w, c2b, f1w, f1b, f2w, f2b = params
    dn = ("NCHW", "OIHW", "NCHW")
    y = jax.lax.conv_general_dilated(x, c1w, (1, 1), "VALID", dimension_numbers=dn)
    y = jax.nn.relu(y + c1b[None, :, None, None])
    y = jax.lax.reduce_window(y, -jnp.inf, jax.lax.max, (1, 1, 2, 2), (1, 1, 2, 2), "VALID")
    y = jax.lax.conv_general_dilated(y, c2w, (1, 1), "VALID", dimension_numbers=dn)
    y = jax.nn.relu(y + c2b[None, :, None, None])
    y = jax.lax.reduce_window(y, -jnp.inf, jax.lax.max, (1, 1, 2, 2), (1, 1, 2, 2), "VALID")
    y = y.reshape(y.shape[0], -1)
    y = jax.nn.relu(y @ f1w.T + f1b)
    y = y @ f2w.T + f2b
    return jax.nn.softmax(y, axis=1)


if __name__ == "__main__":
    key = jax.random.PRNGKey(0)
    kx, kp = jax.random.split(key)

    batch = 2
    x = jax.random.normal(kx, (batch, 1, 28, 28), dtype=jnp.float32)  # 28x28 implied by fc1=1600
    params = init_torch_cnn_params(kp)

    out = pytorch_cnn_forward(x, params)
    out = jax.block_until_ready(out)

    assert out.shape == (batch, 10)
    assert bool(jnp.all(jnp.abs(jnp.sum(out, axis=-1) - 1.0) < 1e-3))   # valid softmax rows

    ref = torch_cnn_reference(x, params)
    assert bool(jnp.max(jnp.abs(out - ref)) < 3e-2)                     # bf16-matmul tolerance

    print("KERNEL_OK")
</pallas_src>

<mosaic_0001>
module attributes {stable_mosaic.version = 11 : i64} {
  func.func @conv_relu_pool_kernel(%arg0: i32, %arg1: memref<1x4x169x9xbf16, #tpu.memory_space<vmem>>, %arg2: memref<9x128xbf16, #tpu.memory_space<vmem>>, %arg3: memref<1x128xf32, #tpu.memory_space<vmem>>, %arg4: memref<1x169x128xf32, #tpu.memory_space<vmem>>) attributes {dimension_semantics = [#tpu.dimension_semantics<parallel>], iteration_bounds = array<i64: 2>, scalar_prefetch = 0 : i64, scratch_operands = 0 : i64, tpu.core_type = #tpu.core_type<tc>, window_params = [{transform_indices = @transform_0, window_bounds = array<i64: 1, 4, 169, 9>}, {pipeline_mode = #tpu.pipeline_mode<synchronous>, transform_indices = @transform_1, window_bounds = array<i64: 9, 128>}, {pipeline_mode = #tpu.pipeline_mode<synchronous>, transform_indices = @transform_2, window_bounds = array<i64: 1, 128>}, {transform_indices = @transform_3, window_bounds = array<i64: 1, 169, 128>}]} {
    %c0 = arith.constant 0 : index
    %c0_0 = arith.constant 0 : index
    %0 = vector.load %arg2[%c0, %c0_0] : memref<9x128xbf16, #tpu.memory_space<vmem>>, vector<9x128xbf16>
    %c0_1 = arith.constant 0 : index
    %c0_2 = arith.constant 0 : index
    %c0_3 = arith.constant 0 : index
    %c0_4 = arith.constant 0 : index
    %1 = vector.load %arg1[%c0_1, %c0_2, %c0_3, %c0_4] : memref<1x4x169x9xbf16, #tpu.memory_space<vmem>>, vector<1x1x169x9xbf16>
    %2 = vector.shape_cast %1 : vector<1x1x169x9xbf16> to vector<169x9xbf16>
    %cst = arith.constant dense<0.000000e+00> : vector<169x128xf32>
    %3 = tpu.matmul %2, %0, %cst {dimension_numbers = #tpu.dot_dimension_numbers<[1], [0], [0], [1], [0, 0, 1, 1], [], []>} : vector<169x9xbf16>, vector<9x128xbf16>, vector<169x128xf32> -> vector<169x128xf32>
    %c0_5 = arith.constant 0 : index
    %c1 = arith.constant 1 : index
    %c0_6 = arith.constant 0 : index
    %c0_7 = arith.constant 0 : index
    %4 = vector.load %arg1[%c0_5, %c1, %c0_6, %c0_7] : memref<1x4x169x9xbf16, #tpu.memory_space<vmem>>, vector<1x1x169x9xbf16>
    %5 = vector.shape_cast %4 : vector<1x1x169x9xbf16> to vector<169x9xbf16>
    %cst_8 = arith.constant dense<0.000000e+00> : vector<169x128xf32>
    %6 = tpu.matmul %5, %0, %cst_8 {dimension_numbers = #tpu.dot_dimension_numbers<[1], [0], [0], [1], [0, 0, 1, 1], [], []>} : vector<169x9xbf16>, vector<9x128xbf16>, vector<169x128xf32> -> vector<169x128xf32>
    %7 = arith.maximumf %3, %6 : vector<169x128xf32>
    %c0_9 = arith.constant 0 : index
    %c2 = arith.constant 2 : index
    %c0_10 = arith.constant 0 : index
    %c0_11 = arith.constant 0 : index
    %8 = vector.load %arg1[%c0_9, %c2, %c0_10, %c0_11] : memref<1x4x169x9xbf16, #tpu.memory_space<vmem>>, vector<1x1x169x9xbf16>
    %9 = vector.shape_cast %8 : vector<1x1x169x9xbf16> to vector<169x9xbf16>
    %cst_12 = arith.constant dense<0.000000e+00> : vector<169x128xf32>
    %10 = tpu.matmul %9, %0, %cst_12 {dimension_numbers = #tpu.dot_dimension_numbers<[1], [0], [0], [1], [0, 0, 1, 1], [], []>} : vector<169x9xbf16>, vector<9x128xbf16>, vector<169x128xf32> -> vector<169x128xf32>
    %11 = arith.maximumf %7, %10 : vector<169x128xf32>
    %c0_13 = arith.constant 0 : index
    %c3 = arith.constant 3 : index
    %c0_14 = arith.constant 0 : index
    %c0_15 = arith.constant 0 : index
    %12 = vector.load %arg1[%c0_13, %c3, %c0_14, %c0_15] : memref<1x4x169x9xbf16, #tpu.memory_space<vmem>>, vector<1x1x169x9xbf16>
    %13 = vector.shape_cast %12 : vector<1x1x169x9xbf16> to vector<169x9xbf16>
    %cst_16 = arith.constant dense<0.000000e+00> : vector<169x128xf32>
    %14 = tpu.matmul %13, %0, %cst_16 {dimension_numbers = #tpu.dot_dimension_numbers<[1], [0], [0], [1], [0, 0, 1, 1], [], []>} : vector<169x9xbf16>, vector<9x128xbf16>, vector<169x128xf32> -> vector<169x128xf32>
    %15 = arith.maximumf %11, %14 : vector<169x128xf32>
    %c0_17 = arith.constant 0 : index
    %c0_18 = arith.constant 0 : index
    %16 = vector.load %arg3[%c0_17, %c0_18] : memref<1x128xf32, #tpu.memory_space<vmem>>, vector<1x128xf32>
    %17 = vector.broadcast %16 : vector<1x128xf32> to vector<169x128xf32>
    %18 = arith.addf %15, %17 : vector<169x128xf32>
    %cst_19 = arith.constant 0.000000e+00 : f32
    %19 = vector.broadcast %cst_19 : f32 to vector<169x128xf32>
    %20 = arith.maximumf %18, %19 : vector<169x128xf32>
    %c0_20 = arith.constant 0 : index
    %c0_21 = arith.constant 0 : index
    %c0_22 = arith.constant 0 : index
    %21 = vector.load %arg4[%c0_20, %c0_21, %c0_22] : memref<1x169x128xf32, #tpu.memory_space<vmem>>, vector<1x169x128xf32>
    %22 = vector.shape_cast %21 : vector<1x169x128xf32> to vector<169x128xf32>
    %23 = vector.shape_cast %20 : vector<169x128xf32> to vector<1x169x128xf32>
    tpu.vector_store %arg4[%c0_20, %c0_21, %c0_22], %23 {strides = array<i32>} : memref<1x169x128xf32, #tpu.memory_space<vmem>>, vector<1x169x128xf32>,
    return
  }
  func.func @transform_0(%arg0: i32) -> (i32, i32, i32, i32) {
    %c0_i32 = arith.constant 0 : i32
    %c0_i32_0 = arith.constant 0 : i32
    %c0_i32_1 = arith.constant 0 : i32
    %c0_i32_2 = arith.constant 0 : i32
    return %arg0, %c0_i32, %c0_i32_0, %c0_i32_1 : i32, i32, i32, i32
  }
  func.func @transform_1(%arg0: i32) -> (i32, i32) {
    %c0_i32 = arith.constant 0 : i32
    %c0_i32_0 = arith.constant 0 : i32
    %c0_i32_1 = arith.constant 0 : i32
    return %c0_i32, %c0_i32_0 : i32, i32
  }
  func.func @transform_2(%arg0: i32) -> (i32, i32) {
    %c0_i32 = arith.constant 0 : i32
    %c0_i32_0 = arith.constant 0 : i32
    %c0_i32_1 = arith.constant 0 : i32
    return %c0_i32, %c0_i32_0 : i32, i32
  }
  func.func @transform_3(%arg0: i32) -> (i32, i32, i32) {
    %c0_i32 = arith.constant 0 : i32
    %c0_i32_0 = arith.constant 0 : i32
    %c0_i32_1 = arith.constant 0 : i32
    return %arg0, %c0_i32, %c0_i32_0 : i32, i32, i32
  }
}

module attributes {stable_mosaic.version = 11 : i64} {
  func.func @conv_relu_pool_kernel(%arg0: i32, %arg1: memref<1x4x25x1152xbf16, #tpu.memory_space<vmem>>, %arg2: memref<1152x64xbf16, #tpu.memory_space<vmem>>, %arg3: memref<1x64xf32, #tpu.memory_space<vmem>>, %arg4: memref<1x25x64xf32, #tpu.memory_space<vmem>>) attributes {dimension_semantics = [#tpu.dimension_semantics<parallel>], iteration_bounds = array<i64: 2>, scalar_prefetch = 0 : i64, scratch_operands = 0 : i64, tpu.core_type = #tpu.core_type<tc>, window_params = [{transform_indices = @transform_0, window_bounds = array<i64: 1, 4, 25, 1152>}, {pipeline_mode = #tpu.pipeline_mode<synchronous>, transform_indices = @transform_1, window_bounds = array<i64: 1152, 64>}, {pipeline_mode = #tpu.pipeline_mode<synchronous>, transform_indices = @transform_2, window_bounds = array<i64: 1, 64>}, {transform_indices = @transform_3, window_bounds = array<i64: 1, 25, 64>}]} {
    %c0 = arith.constant 0 : index
    %c0_0 = arith.constant 0 : index
    %0 = vector.load %arg2[%c0, %c0_0] : memref<1152x64xbf16, #tpu.memory_space<vmem>>, vector<1152x64xbf16>
    %c0_1 = arith.constant 0 : index
    %c0_2 = arith.constant 0 : index
    %c0_3 = arith.constant 0 : index
    %c0_4 = arith.constant 0 : index
    %1 = vector.load %arg1[%c0_1, %c0_2, %c0_3, %c0_4] : memref<1x4x25x1152xbf16, #tpu.memory_space<vmem>>, vector<1x1x25x1152xbf16>
    %2 = vector.shape_cast %1 : vector<1x1x25x1152xbf16> to vector<25x1152xbf16>
    %cst = arith.constant dense<0.000000e+00> : vector<25x64xf32>
    %3 = tpu.matmul %2, %0, %cst {dimension_numbers = #tpu.dot_dimension_numbers<[1], [0], [0], [1], [0, 0, 1, 1], [], []>} : vector<25x1152xbf16>, vector<1152x64xbf16>, vector<25x64xf32> -> vector<25x64xf32>
    %c0_5 = arith.constant 0 : index
    %c1 = arith.constant 1 : index
    %c0_6 = arith.constant 0 : index
    %c0_7 = arith.constant 0 : index
    %4 = vector.load %arg1[%c0_5, %c1, %c0_6, %c0_7] : memref<1x4x25x1152xbf16, #tpu.memory_space<vmem>>, vector<1x1x25x1152xbf16>
    %5 = vector.shape_cast %4 : vector<1x1x25x1152xbf16> to vector<25x1152xbf16>
    %cst_8 = arith.constant dense<0.000000e+00> : vector<25x64xf32>
    %6 = tpu.matmul %5, %0, %cst_8 {dimension_numbers = #tpu.dot_dimension_numbers<[1], [0], [0], [1], [0, 0, 1, 1], [], []>} : vector<25x1152xbf16>, vector<1152x64xbf16>, vector<25x64xf32> -> vector<25x64xf32>
    %7 = arith.maximumf %3, %6 : vector<25x64xf32>
    %c0_9 = arith.constant 0 : index
    %c2 = arith.constant 2 : index
    %c0_10 = arith.constant 0 : index
    %c0_11 = arith.constant 0 : index
    %8 = vector.load %arg1[%c0_9, %c2, %c0_10, %c0_11] : memref<1x4x25x1152xbf16, #tpu.memory_space<vmem>>, vector<1x1x25x1152xbf16>
    %9 = vector.shape_cast %8 : vector<1x1x25x1152xbf16> to vector<25x1152xbf16>
    %cst_12 = arith.constant dense<0.000000e+00> : vector<25x64xf32>
    %10 = tpu.matmul %9, %0, %cst_12 {dimension_numbers = #tpu.dot_dimension_numbers<[1], [0], [0], [1], [0, 0, 1, 1], [], []>} : vector<25x1152xbf16>, vector<1152x64xbf16>, vector<25x64xf32> -> vector<25x64xf32>
    %11 = arith.maximumf %7, %10 : vector<25x64xf32>
    %c0_13 = arith.constant 0 : index
    %c3 = arith.constant 3 : index
    %c0_14 = arith.constant 0 : index
    %c0_15 = arith.constant 0 : index
    %12 = vector.load %arg1[%c0_13, %c3, %c0_14, %c0_15] : memref<1x4x25x1152xbf16, #tpu.memory_space<vmem>>, vector<1x1x25x1152xbf16>
    %13 = vector.shape_cast %12 : vector<1x1x25x1152xbf16> to vector<25x1152xbf16>
    %cst_16 = arith.constant dense<0.000000e+00> : vector<25x64xf32>
    %14 = tpu.matmul %13, %0, %cst_16 {dimension_numbers = #tpu.dot_dimension_numbers<[1], [0], [0], [1], [0, 0, 1, 1], [], []>} : vector<25x1152xbf16>, vector<1152x64xbf16>, vector<25x64xf32> -> vector<25x64xf32>
    %15 = arith.maximumf %11, %14 : vector<25x64xf32>
    %c0_17 = arith.constant 0 : index
    %c0_18 = arith.constant 0 : index
    %16 = vector.load %arg3[%c0_17, %c0_18] : memref<1x64xf32, #tpu.memory_space<vmem>>, vector<1x64xf32>
    %17 = vector.broadcast %16 : vector<1x64xf32> to vector<25x64xf32>
    %18 = arith.addf %15, %17 : vector<25x64xf32>
    %cst_19 = arith.constant 0.000000e+00 : f32
    %19 = vector.broadcast %cst_19 : f32 to vector<25x64xf32>
    %20 = arith.maximumf %18, %19 : vector<25x64xf32>
    %c0_20 = arith.constant 0 : index
    %c0_21 = arith.constant 0 : index
    %c0_22 = arith.constant 0 : index
    %21 = vector.load %arg4[%c0_20, %c0_21, %c0_22] : memref<1x25x64xf32, #tpu.memory_space<vmem>>, vector<1x25x64xf32>
    %22 = vector.shape_cast %21 : vector<1x25x64xf32> to vector<25x64xf32>
    %23 = vector.shape_cast %20 : vector<25x64xf32> to vector<1x25x64xf32>
    tpu.vector_store %arg4[%c0_20, %c0_21, %c0_22], %23 {strides = array<i32>} : memref<1x25x64xf32, #tpu.memory_space<vmem>>, vector<1x25x64xf32>,
    return
  }
  func.func @transform_0(%arg0: i32) -> (i32, i32, i32, i32) {
    %c0_i32 = arith.constant 0 : i32
    %c0_i32_0 = arith.constant 0 : i32
    %c0_i32_1 = arith.constant 0 : i32
    %c0_i32_2 = arith.constant 0 : i32
    return %arg0, %c0_i32, %c0_i32_0, %c0_i32_1 : i32, i32, i32, i32
  }
  func.func @transform_1(%arg0: i32) -> (i32, i32) {
    %c0_i32 = arith.constant 0 : i32
    %c0_i32_0 = arith.constant 0 : i32
    %c0_i32_1 = arith.constant 0 : i32
    return %c0_i32, %c0_i32_0 : i32, i32
  }
  func.func @transform_2(%arg0: i32) -> (i32, i32) {
    %c0_i32 = arith.constant 0 : i32
    %c0_i32_0 = arith.constant 0 : i32
    %c0_i32_1 = arith.constant 0 : i32
    return %c0_i32, %c0_i32_0 : i32, i32
  }
  func.func @transform_3(%arg0: i32) -> (i32, i32, i32) {
    %c0_i32 = arith.constant 0 : i32
    %c0_i32_0 = arith.constant 0 : i32
    %c0_i32_1 = arith.constant 0 : i32
    return %arg0, %c0_i32, %c0_i32_0 : i32, i32, i32
  }
}

module attributes {stable_mosaic.version = 11 : i64} {
  func.func @mlp_head_kernel(%arg0: i32, %arg1: memref<2x1600xbf16, #tpu.memory_space<vmem>>, %arg2: memref<1600x128xbf16, #tpu.memory_space<vmem>>, %arg3: memref<1x128xf32, #tpu.memory_space<vmem>>, %arg4: memref<128x10xf32, #tpu.memory_space<vmem>>, %arg5: memref<1x10xf32, #tpu.memory_space<vmem>>, %arg6: memref<2x10xf32, #tpu.memory_space<vmem>>) attributes {dimension_semantics = [#tpu.dimension_semantics<parallel>], iteration_bounds = array<i64: 1>, scalar_prefetch = 0 : i64, scratch_operands = 0 : i64, tpu.core_type = #tpu.core_type<tc>, window_params = [{transform_indices = @transform_0, window_bounds = array<i64: 2, 1600>}, {pipeline_mode = #tpu.pipeline_mode<synchronous>, transform_indices = @transform_1, window_bounds = array<i64: 1600, 128>}, {pipeline_mode = #tpu.pipeline_mode<synchronous>, transform_indices = @transform_2, window_bounds = array<i64: 1, 128>}, {pipeline_mode = #tpu.pipeline_mode<synchronous>, transform_indices = @transform_3, window_bounds = array<i64: 128, 10>}, {pipeline_mode = #tpu.pipeline_mode<synchronous>, transform_indices = @transform_4, window_bounds = array<i64: 1, 10>}, {transform_indices = @transform_5, window_bounds = array<i64: 2, 10>}]} {
    %c0 = arith.constant 0 : index
    %c0_0 = arith.constant 0 : index
    %0 = vector.load %arg1[%c0, %c0_0] : memref<2x1600xbf16, #tpu.memory_space<vmem>>, vector<2x1600xbf16>
    %c0_1 = arith.constant 0 : index
    %c0_2 = arith.constant 0 : index
    %1 = vector.load %arg2[%c0_1, %c0_2] : memref<1600x128xbf16, #tpu.memory_space<vmem>>, vector<1600x128xbf16>
    %cst = arith.constant dense<0.000000e+00> : vector<2x128xf32>
    %2 = tpu.matmul %0, %1, %cst {dimension_numbers = #tpu.dot_dimension_numbers<[1], [0], [0], [1], [0, 0, 1, 1], [], []>} : vector<2x1600xbf16>, vector<1600x128xbf16>, vector<2x128xf32> -> vector<2x128xf32>
    %c0_3 = arith.constant 0 : index
    %c0_4 = arith.constant 0 : index
    %3 = vector.load %arg3[%c0_3, %c0_4] : memref<1x128xf32, #tpu.memory_space<vmem>>, vector<1x128xf32>
    %4 = vector.broadcast %3 : vector<1x128xf32> to vector<2x128xf32>
    %5 = arith.addf %2, %4 : vector<2x128xf32>
    %cst_5 = arith.constant 0.000000e+00 : f32
    %6 = vector.broadcast %cst_5 : f32 to vector<2x128xf32>
    %7 = arith.maximumf %5, %6 : vector<2x128xf32>
    %c0_6 = arith.constant 0 : index
    %c0_7 = arith.constant 0 : index
    %8 = vector.load %arg4[%c0_6, %c0_7] : memref<128x10xf32, #tpu.memory_space<vmem>>, vector<128x10xf32>
    %cst_8 = arith.constant dense<0.000000e+00> : vector<2x10xf32>
    %9 = tpu.matmul %7, %8, %cst_8 {dimension_numbers = #tpu.dot_dimension_numbers<[1], [0], [0], [1], [0, 0, 1, 1], [], []>} : vector<2x128xf32>, vector<128x10xf32>, vector<2x10xf32> -> vector<2x10xf32>
    %c0_9 = arith.constant 0 : index
    %c0_10 = arith.constant 0 : index
    %10 = vector.load %arg5[%c0_9, %c0_10] : memref<1x10xf32, #tpu.memory_space<vmem>>, vector<1x10xf32>
    %11 = vector.broadcast %10 : vector<1x10xf32> to vector<2x10xf32>
    %12 = arith.addf %9, %11 : vector<2x10xf32>
    %cst_11 = arith.constant dense<0xFF800000> : vector<2xf32>
    %13 = vector.multi_reduction <maximumf>, %12, %cst_11 [1] : vector<2x10xf32> to vector<2xf32>
    %14 = vector.shape_cast %13 : vector<2xf32> to vector<2x1xf32>
    %15 = vector.broadcast %14 : vector<2x1xf32> to vector<2x10xf32>
    %16 = arith.subf %12, %15 : vector<2x10xf32>
    %17 = math.exp %16 : vector<2x10xf32>
    %cst_12 = arith.constant dense<0.000000e+00> : vector<2xf32>
    %18 = vector.multi_reduction <add>, %17, %cst_12 [1] : vector<2x10xf32> to vector<2xf32>
    %19 = vector.shape_cast %18 : vector<2xf32> to vector<2x1xf32>
    %20 = vector.broadcast %19 : vector<2x1xf32> to vector<2x10xf32>
    %21 = arith.divf %17, %20 : vector<2x10xf32>
    %c0_13 = arith.constant 0 : index
    %c0_14 = arith.constant 0 : index
    %22 = vector.load %arg6[%c0_13, %c0_14] : memref<2x10xf32, #tpu.memory_space<vmem>>, vector<2x10xf32>
    tpu.vector_store %arg6[%c0_13, %c0_14], %21 {strides = array<i32>} : memref<2x10xf32, #tpu.memory_space<vmem>>, vector<2x10xf32>,
    return
  }
  func.func @transform_0(%arg0: i32) -> (i32, i32) {
    %c0_i32 = arith.constant 0 : i32
    %c0_i32_0 = arith.constant 0 : i32
    return %arg0, %c0_i32 : i32, i32
  }
  func.func @transform_1(%arg0: i32) -> (i32, i32) {
    %c0_i32 = arith.constant 0 : i32
    %c0_i32_0 = arith.constant 0 : i32
    %c0_i32_1 = arith.constant 0 : i32
    return %c0_i32, %c0_i32_0 : i32, i32
  }
  func.func @transform_2(%arg0: i32) -> (i32, i32) {
    %c0_i32 = arith.constant 0 : i32
    %c0_i32_0 = arith.constant 0 : i32
    %c0_i32_1 = arith.constant 0 : i32
    return %c0_i32, %c0_i32_0 : i32, i32
  }
  func.func @transform_3(%arg0: i32) -> (i32, i32) {
    %c0_i32 = arith.constant 0 : i32
    %c0_i32_0 = arith.constant 0 : i32
    %c0_i32_1 = arith.constant 0 : i32
    return %c0_i32, %c0_i32_0 : i32, i32
  }
  func.func @transform_4(%arg0: i32) -> (i32, i32) {
    %c0_i32 = arith.constant 0 : i32
    %c0_i32_0 = arith.constant 0 : i32
    %c0_i32_1 = arith.constant 0 : i32
    return %c0_i32, %c0_i32_0 : i32, i32
  }
  func.func @transform_5(%arg0: i32) -> (i32, i32) {
    %c0_i32 = arith.constant 0 : i32
    %c0_i32_0 = arith.constant 0 : i32
    return %arg0, %c0_i32 : i32, i32
  }
}

</mosaic_0001>

<llo_original>
// kernel: pytorch_cnn_forward.3
$region0: #{pytorch_cnn_forward.3}
  #allocation0 [shape = 'u32[]', space=smem, size = 0x4, offset = 0x4, fixed_abs, tag = 'smem constant byte address 0x4 - core index']
  #allocation1 [shape = 'u32[144,128]{1,0:T(1,128)}', space=vmem, size = 0x12000, scoped, tag = 'internal scratch']
  %s0 = inlined_call_operand.vmem [shape: bf16[2,4,169,9], index: 0, kind: input, shape index: {}]
  %s1 = inlined_call_operand.vmem [shape: bf16[9,128], index: 1, kind: input, shape index: {}]
  %s2 = inlined_call_operand.vmem [shape: f32[1,128], index: 2, kind: input, shape index: {}]
  %s3 = inlined_call_operand.vmem [shape: f32[2,169,128], index: 3, kind: output, shape index: {}]
  %s4 = sld [smem:[#allocation0]]
  $region45: #{pytorch_cnn_forward.3} parent=0
    _
  %s6 = ssub.s32 1, %s4
  %s7 = scalar_select 0, %s6, %s4
  loop: start=0, step=1, limit=4
  $region2: #{pytorch_cnn_forward.3} parent=0 // loop_pre_header
    _
  $region3: #{pytorch_cnn_forward.3} parent=0 // loop_header
    %s9 = sphi 0, %s13
    %p10 = scmp.ge.s32.totalorder %s9, 4
    %s19 = sphi 0, %s21
    %s22 = sphi 0, %s19
    %s23 = sphi 0, %s22
    %s39 = sphi 0, %s23
    %s43 = sphi 0, %s43
    %s45 = sphi 0, %s43
    %s46 = sphi 0, %s45
    %s60 = sphi 0, %s46
    %s64 = sphi 0, %s64
    %s66 = sphi 0, %s64
    %s67 = sphi 0, %s66
    %s81 = sphi 0, %s67
    %s87 = sphi 0, %s89
    %s90 = sphi 0, %s87
    %s91 = sphi 0, %s90
    %s107 = sphi 0, %s91
  $region4: #{pytorch_cnn_forward.3} parent=0 // loop_header_branch
    %12 = sbr.rel (%p10) target = $region8
  $region5: #{pytorch_cnn_forward.3} parent=0 // loop_body
    %s14 = ssub.s32 %s9, 1
    %s15 = ssub.s32 %s9, 2
    %s16 = sadd.s32 %s9, 1
    %s17 = ssub.s32 %s9, %s16
    %p18 = scmp.eq.s32.totalorder %s17, 0
    %s20 = sadd.s32 %s19, 1
    %s21 = scalar_select %p18, %s19, %s20
    %p24 = pneg %p18
    %p25 = scmp.eq.s32.totalorder %s9, 1
    %p26 = por %p24, %p25
    %p27 = scmp.ne.s32.totalorder %s19, %s22
    %p28 = scmp.eq.s32.totalorder %s9, 0
    %p29 = por %p27, %p28
    %p30 = scmp.ne.s32.totalorder %s19, %s22
    %p31 = scmp.eq.s32.totalorder %s14, 1
    %p32 = por %p30, %p31
    %p33 = scmp.ne.s32.totalorder %s22, %s23
    %p34 = scmp.eq.s32.totalorder %s14, 0
    %p35 = por %p33, %p34
    %p36 = scmp.ne.s32.totalorder %s22, %s23
    %p37 = scmp.eq.s32.totalorder %s15, 1
    %p38 = por %p36, %p37
    %p40 = scmp.ne.s32.totalorder %s23, %s39
    %p41 = scmp.eq.s32.totalorder %s15, 0
    %p42 = por %p40, %p41
    %s44 = sadd.s32 %s43, 1
    %p47 = scmp.eq.s32.totalorder %s9, 1
    %p48 = scmp.ne.s32.totalorder %s43, %s45
    %p49 = scmp.eq.s32.totalorder %s9, 0
    %p50 = por %p48, %p49
    %p51 = scmp.ne.s32.totalorder %s43, %s45
    %p52 = scmp.eq.s32.totalorder %s14, 1
    %p53 = por %p51, %p52
    %p54 = scmp.ne.s32.totalorder %s45, %s46
    %p55 = scmp.eq.s32.totalorder %s14, 0
    %p56 = por %p54, %p55
    %p57 = scmp.ne.s32.totalorder %s45, %s46
    %p58 = scmp.eq.s32.totalorder %s15, 1
    %p59 = por %p57, %p58
    %p61 = scmp.ne.s32.totalorder %s46, %s60
    %p62 = scmp.eq.s32.totalorder %s15, 0
    %p63 = por %p61, %p62
    %s65 = sadd.s32 %s64, 1
    %p68 = scmp.eq.s32.totalorder %s9, 1
    %p69 = scmp.ne.s32.totalorder %s64, %s66
    %p70 = scmp.eq.s32.totalorder %s9, 0
    %p71 = por %p69, %p70
    %p72 = scmp.ne.s32.totalorder %s64, %s66
    %p73 = scmp.eq.s32.totalorder %s14, 1
    %p74 = por %p72, %p73
    %p75 = scmp.ne.s32.totalorder %s66, %s67
    %p76 = scmp.eq.s32.totalorder %s14, 0
    %p77 = por %p75, %p76
    %p78 = scmp.ne.s32.totalorder %s66, %s67
    %p79 = scmp.eq.s32.totalorder %s15, 1
    %p80 = por %p78, %p79
    %p82 = scmp.ne.s32.totalorder %s67, %s81
    %p83 = scmp.eq.s32.totalorder %s15, 0
    %p84 = por %p82, %p83
    %s85 = ssub.s32 %s9, %s16
    %p86 = scmp.eq.s32.totalorder %s85, 0
    %s88 = sadd.s32 %s87, 1
    %s89 = scalar_select %p86, %s87, %s88
    %p92 = pneg %p86
    %p93 = scmp.eq.s32.totalorder %s9, 1
    %p94 = por %p92, %p93
    %p95 = scmp.ne.s32.totalorder %s87, %s90
    %p96 = scmp.eq.s32.totalorder %s9, 0
    %p97 = por %p95, %p96
    %p98 = scmp.ne.s32.totalorder %s87, %s90
    %p99 = scmp.eq.s32.totalorder %s14, 1
    %p100 = por %p98, %p99
    %p101 = scmp.ne.s32.totalorder %s90, %s91
    %p102 = scmp.eq.s32.totalorder %s14, 0
    %p103 = por %p101, %p102
    %p104 = scmp.ne.s32.totalorder %s90, %s91
    %p105 = scmp.eq.s32.totalorder %s15, 1
    %p106 = por %p104, %p105
    %p108 = scmp.ne.s32.totalorder %s91, %s107
    %p109 = scmp.eq.s32.totalorder %s15, 0
    %p110 = por %p108, %p109
    %p111 = scmp.le.s32.totalorder 1, %s9
    %p112 = scmp.lt.s32.totalorder %s9, 3
    %p113 = pnand %p111, %p112
    %p114 = pneg %p113
    // Predicated region
    $region9: #{pytorch_cnn_forward.3} parent=5 // pred_check
      _
    $region10: #{pytorch_cnn_forward.3} parent=5 // pred_check_branch
      %116 = sbr.rel (%p113) target = $region12
    $region11: #{pytorch_cnn_forward.3} parent=5 // pred_region
      %s117 = ssub.s32 %s9, 1
      // Predicated region
      $region13: #{pytorch_cnn_forward.3} parent=11 // pred_check
        %p118 = pneg %p56
      $region14: #{pytorch_cnn_forward.3} parent=11 // pred_check_branch
        %120 = sbr.rel (%p118) target = $region16
      $region15: #{pytorch_cnn_forward.3} parent=11 // pred_region
        _
      $region16: #{pytorch_cnn_forward.3} parent=11 // pred_fallthru
        _
      // Predicated region
      $region17: #{pytorch_cnn_forward.3} parent=11 // pred_check
        %p121 = pneg %p77
      $region18: #{pytorch_cnn_forward.3} parent=11 // pred_check_branch
        %123 = sbr.rel (%p121) target = $region20
      $region19: #{pytorch_cnn_forward.3} parent=11 // pred_region
        _
      $region20: #{pytorch_cnn_forward.3} parent=11 // pred_fallthru
        _
    $region12: #{pytorch_cnn_forward.3} parent=5 // pred_fallthru
      _
    %p124 = scmp.lt.s32.totalorder %s9, 2
    // Predicated region
    $region21: #{pytorch_cnn_forward.3} parent=5 // pred_check
      %p125 = pneg %p124
    $region22: #{pytorch_cnn_forward.3} parent=5 // pred_check_branch
      %127 = sbr.rel (%p125) target = $region24
    $region23: #{pytorch_cnn_forward.3} parent=5 // pred_region
      // Predicated region
      $region25: #{pytorch_cnn_forward.3} parent=23 // pred_check
        %p128 = pneg %p29
      $region26: #{pytorch_cnn_forward.3} parent=23 // pred_check_branch
        %130 = sbr.rel (%p128) target = $region28
      $region27: #{pytorch_cnn_forward.3} parent=23 // pred_region
        %p131 = scmp.lt.s32.totalorder %s9, 1
        %s132 = scalar_select %p131, %s9, 1
        %s133 = smul.addr %s132, 88
        %s134 = smul.addr %s133, 4
        %s135 = scalar_lea.vmem %s0, %s134
      $region28: #{pytorch_cnn_forward.3} parent=23 // pred_fallthru
        _
    $region24: #{pytorch_cnn_forward.3} parent=5 // pred_fallthru
      _
    %p136 = scmp.le.s32.totalorder 1, %s9
    %p137 = scmp.lt.s32.totalorder %s9, 3
    %p138 = pnand %p136, %p137
    %p139 = pneg %p138
    // Predicated region
    $region29: #{pytorch_cnn_forward.3} parent=5 // pred_check
      _
    $region30: #{pytorch_cnn_forward.3} parent=5 // pred_check_branch
      %141 = sbr.rel (%p138) target = $region32
    $region31: #{pytorch_cnn_forward.3} parent=5 // pred_region
      %s142 = ssub.s32 %s9, 1
      %p143 = scmp.lt.s32.totalorder %s14, 1
      %s144 = scalar_select %p143, %s14, 1
      %s145 = smul.addr %s144, 88
      %s146 = smul.addr %s145, 4
      %s147 = scalar_lea.vmem %s0, %s146
      %p148 = pneg %p35
      %p149 = pneg %p32
      %p150 = pneg %p56
      %p151 = pneg %p53
      %p152 = pneg %p77
      %p153 = pneg %p74
      %p154 = pneg %p103
      %p155 = pneg %p100
      %p156 = scmp.lt.s32.totalorder %s14, 1
      %s157 = scalar_select %p156, %s14, 1
      %s158 = smul.addr %s157, 22
      %s159 = smul.addr %s158, 8
      %s160 = scalar_lea.vmem %s3, %s159
      %p161 = scmp.lt.s32.totalorder %s14, 1
      %s162 = scalar_select %p161, %s14, 1
      %s163 = smul.addr %s162, 88
      %s164 = smul.addr %s163, 4
      %s165 = scalar_lea.vmem %s0, %s164
      %p166 = scmp.lt.s32.totalorder %s14, 1
      %s167 = scalar_select %p166, %s14, 1
      %s168 = smul.addr %s167, 22
      %s169 = smul.addr %s168, 8
      %s170 = scalar_lea.vmem %s3, %s169
      %v172 = vld [vmem:[%s1] sm:$0xf]
      %v173 = vld [vmem:[%s1 + $0x4] sm:$0x1]
      %v174 = vld [vmem:[%s165] sm:$0xf]
      %v175 = vld [vmem:[%s165 + $0x4] sm:$0xf]
      %v176 = vld [vmem:[%s165 + $0x8] sm:$0xf]
      %v177 = vld [vmem:[%s165 + $0xc] sm:$0xf]
      %v178 = vld [vmem:[%s165 + $0x10] sm:$0xf]
      %v179 = vld [vmem:[%s165 + $0x14] sm:$0xf]
      %v180 = vld [vmem:[%s165 + $0x18] sm:$0xf]
      %v181 = vld [vmem:[%s165 + $0x1c] sm:$0xf]
      %v182 = vld [vmem:[%s165 + $0x20] sm:$0xf]
      %v183 = vld [vmem:[%s165 + $0x24] sm:$0xf]
      %v184 = vld [vmem:[%s165 + $0x28] sm:$0xf]
      %v185 = vld [vmem:[%s165 + $0x2c] sm:$0xf]
      %v186 = vld [vmem:[%s165 + $0x30] sm:$0xf]
      %v187 = vld [vmem:[%s165 + $0x34] sm:$0xf]
      %v188 = vld [vmem:[%s165 + $0x38] sm:$0xf]
      %v189 = vld [vmem:[%s165 + $0x3c] sm:$0xf]
      %v190 = vld [vmem:[%s165 + $0x40] sm:$0xf]
      %v191 = vld [vmem:[%s165 + $0x44] sm:$0xf]
      %v192 = vld [vmem:[%s165 + $0x48] sm:$0xf]
      %v193 = vld [vmem:[%s165 + $0x4c] sm:$0xf]
      %v194 = vld [vmem:[%s165 + $0x50] sm:$0xf]
      %v195 = vld [vmem:[%s165 + $0x54] sm:$0x1]
      %v218 = vunpack.c.l.b16 %v174
      %v219 = vunpack.c.l.b16 %v175
      %v220 = vunpack.c.l.b16 %v176
      %v221 = vunpack.c.l.b16 %v177
      %v222 = vunpack.c.l.b16 %v178
      %v223 = vunpack.c.l.b16 %v179
      %v224 = vunpack.c.l.b16 %v180
      %v225 = vunpack.c.l.b16 %v181
      %v226 = vunpack.c.l.b16 %v182
      %v227 = vunpack.c.l.b16 %v183
      %v228 = vunpack.c.l.b16 %v184
      %v229 = vunpack.c.l.b16 %v185
      %v230 = vunpack.c.l.b16 %v186
      %v231 = vunpack.c.l.b16 %v187
      %v232 = vunpack.c.l.b16 %v188
      %v233 = vunpack.c.l.b16 %v189
      %v234 = vunpack.c.l.b16 %v190
      %v235 = vunpack.c.l.b16 %v191
      %v236 = vunpack.c.l.b16 %v192
      %v237 = vunpack.c.l.b16 %v193
      %v238 = vunpack.c.l.b16 %v194
      %v239 = vunpack.c.l.b16 %v195
      %v240 = vpack.c.b16 %v219, %v218
      %v241 = vpack.c.b16 %v221, %v220
      %v242 = vpack.c.b16 %v223, %v222
      %v243 = vpack.c.b16 %v225, %v224
      %v244 = vpack.c.b16 %v227, %v226
      %v245 = vpack.c.b16 %v229, %v228
      %v246 = vpack.c.b16 %v231, %v230
      %v247 = vpack.c.b16 %v233, %v232
      %v248 = vpack.c.b16 %v235, %v234
      %v249 = vpack.c.b16 %v237, %v236
      %v250 = vpack.c.b16 %v239, %v238
      %v253 = vunpack.c.l.b16 %v172
      %v254 = vunpack.c.l.b16 %v173
      %v255 = vpack.c.b16 %v254, %v253
      %vm256 = vcmask 72704
      %v258 = vsel %vm256, %v240, 0
      %v261 = vsel %vm256, %v241, 0
      %v264 = vsel %vm256, %v242, 0
      %v267 = vsel %vm256, %v243, 0
      %v270 = vsel %vm256, %v244, 0
      %v273 = vsel %vm256, %v245, 0
      %v276 = vsel %vm256, %v246, 0
      %v279 = vsel %vm256, %v247, 0
      %v282 = vsel %vm256, %v248, 0
      %v285 = vsel %vm256, %v249, 0
      %v288 = vsel %vm256, %v250, 0
      %vm290 = vcmask 1043456
      %vm291 = vcmask 1044480
      %v292 = vsel %vm290, 4294967295, 65535
      %v293 = vsel %vm291, %v292, 0
      %v295 = vand.u32 %v255, %v293
      %297 = vmatprep.subr.bf16.mxu0 0
      %298 = vmatpush1.bf16.msra.mxu0 0
      %299 = vmatprep.subr.bf16.mxu0 0
      %300 = vmatpush1.bf16.msra.mxu0 0
      %301 = vmatprep.subr.bf16.mxu0 0
      %302 = vmatpush1.bf16.msra.mxu0 0
      %303 = vmatprep.subr.bf16.mxu0 0
      %304 = vmatpush1.bf16.msra.mxu0 0
      %305 = vmatprep.subr.bf16.mxu0 0
      %306 = vmatpush1.bf16.msra.mxu0 0
      %307 = vmatprep.subr.bf16.mxu0 0
      %308 = vmatpush1.bf16.msra.mxu0 0
      %309 = vmatprep.subr.bf16.mxu0 0
      %310 = vmatpush1.bf16.msra.mxu0 0
      %311 = vmatprep.subr.bf16.mxu0 0
      %312 = vmatpush1.bf16.msra.mxu0 %v295
      %313 = vmatprep.subr.bf16.mxu0 0
      %314 = vmatpush2.bf16.msra.mxu0 0
      %315 = vmatprep.subr.bf16.mxu0 0
      %316 = vmatpush2.bf16.msra.mxu0 0
      %317 = vmatprep.subr.bf16.mxu0 0
      %318 = vmatpush2.bf16.msra.mxu0 0
      %319 = vmatprep.subr.bf16.mxu0 0
      %320 = vmatpush2.bf16.msra.mxu0 0
      %321 = vmatprep.subr.bf16.mxu0 0
      %322 = vmatpush2.bf16.msra.mxu0 0
      %323 = vmatprep.subr.bf16.mxu0 0
      %324 = vmatpush2.bf16.msra.mxu0 0
      %325 = vmatprep.subr.bf16.mxu0 0
      %326 = vmatpush2.bf16.msra.mxu0 0
      %327 = vmatprep.subr.bf16.mxu0 0
      %328 = vmatpush2.bf16.msra.mxu0 0
      %329 = vmatprep.mubr.bf16.mxu0 0
      %330 = vmatmul.mubr.bf16.gmra.mxu0 %v258
      %v331 = vpop.f32.mrf.mxu0
      %v332 = vadd.f32 0.0, %v331
      %v333 = vpop.f32.mrf.mxu0
      %v334 = vpop.f32.mrf.mxu0
      %v335 = vadd.f32 0.0, %v334
      %v336 = vpop.f32.mrf.mxu0
      %337 = vmatprep.mubr.bf16.mxu0 0
      %338 = vmatmul.mubr.bf16.gmra.mxu0 %v261
      %v339 = vpop.f32.mrf.mxu0
      %v340 = vadd.f32 0.0, %v339
      %v341 = vpop.f32.mrf.mxu0
      %v342 = vpop.f32.mrf.mxu0
      %v343 = vadd.f32 0.0, %v342
      %v344 = vpop.f32.mrf.mxu0
      %345 = vmatprep.mubr.bf16.mxu0 0
      %346 = vmatmul.mubr.bf16.gmra.mxu0 %v264
      %v347 = vpop.f32.mrf.mxu0
      %v348 = vadd.f32 0.0, %v347
      %v349 = vpop.f32.mrf.mxu0
      %v350 = vpop.f32.mrf.mxu0
      %v351 = vadd.f32 0.0, %v350
      %v352 = vpop.f32.mrf.mxu0
      %353 = vmatprep.mubr.bf16.mxu0 0
      %354 = vmatmul.mubr.bf16.gmra.mxu0 %v267
      %v355 = vpop.f32.mrf.mxu0
      %v356 = vadd.f32 0.0, %v355
      %v357 = vpop.f32.mrf.mxu0
      %v358 = vpop.f32.mrf.mxu0
      %v359 = vadd.f32 0.0, %v358
      %v360 = vpop.f32.mrf.mxu0
      %361 = vmatprep.mubr.bf16.mxu0 0
      %362 = vmatmul.mubr.bf16.gmra.mxu0 %v270
      %v363 = vpop.f32.mrf.mxu0
      %v364 = vadd.f32 0.0, %v363
      %v365 = vpop.f32.mrf.mxu0
      %v366 = vpop.f32.mrf.mxu0
      %v367 = vadd.f32 0.0, %v366
      %v368 = vpop.f32.mrf.mxu0
      %369 = vmatprep.mubr.bf16.mxu0 0
      %370 = vmatmul.mubr.bf16.gmra.mxu0 %v273
      %v371 = vpop.f32.mrf.mxu0
      %v372 = vadd.f32 0.0, %v371
      %v373 = vpop.f32.mrf.mxu0
      %v374 = vpop.f32.mrf.mxu0
      %v375 = vadd.f32 0.0, %v374
      %v376 = vpop.f32.mrf.mxu0
      %377 = vmatprep.mubr.bf16.mxu0 0
      %378 = vmatmul.mubr.bf16.gmra.mxu0 %v276
      %v379 = vpop.f32.mrf.mxu0
      %v380 = vadd.f32 0.0, %v379
      %v381 = vpop.f32.mrf.mxu0
      %v382 = vpop.f32.mrf.mxu0
      %v383 = vadd.f32 0.0, %v382
      %v384 = vpop.f32.mrf.mxu0
      %385 = vmatprep.mubr.bf16.mxu0 0
      %386 = vmatmul.mubr.bf16.gmra.mxu0 %v279
      %v387 = vpop.f32.mrf.mxu0
      %v388 = vadd.f32 0.0, %v387
      %v389 = vpop.f32.mrf.mxu0
      %v390 = vpop.f32.mrf.mxu0
      %v391 = vadd.f32 0.0, %v390
      %v392 = vpop.f32.mrf.mxu0
      %393 = vmatprep.mubr.bf16.mxu0 0
      %394 = vmatmul.mubr.bf16.gmra.mxu0 %v282
      %v395 = vpop.f32.mrf.mxu0
      %v396 = vadd.f32 0.0, %v395
      %v397 = vpop.f32.mrf.mxu0
      %v398 = vpop.f32.mrf.mxu0
      %v399 = vadd.f32 0.0, %v398
      %v400 = vpop.f32.mrf.mxu0
      %401 = vmatprep.mubr.bf16.mxu0 0
      %402 = vmatmul.mubr.bf16.gmra.mxu0 %v285
      %v403 = vpop.f32.mrf.mxu0
      %v404 = vadd.f32 0.0, %v403
      %v405 = vpop.f32.mrf.mxu0
      %v406 = vpop.f32.mrf.mxu0
      %v407 = vadd.f32 0.0, %v406
      %v408 = vpop.f32.mrf.mxu0
      %409 = vmatprep.mubr.bf16.mxu0 0
      %410 = vmatmul.mubr.bf16.gmra.mxu0 %v288
      %v411 = vpop.f32.mrf.mxu0
      %v412 = vadd.f32 0.0, %v411
      %v413 = vpop.f32.mrf.mxu0
      %v414 = vpop.f32.mrf.mxu0
      %v415 = vadd.f32 0.0, %v414
      %v416 = vpop.f32.mrf.mxu0
      %417 = vdwg.mxu0
      %s418 = scalar_lea.vmem %s165, 88
      %v419 = vld [vmem:[%s418] sm:$0xf]
      %v420 = vld [vmem:[%s418 + $0x4] sm:$0xf]
      %v421 = vld [vmem:[%s418 + $0x8] sm:$0xf]
      %v422 = vld [vmem:[%s418 + $0xc] sm:$0xf]
      %v423 = vld [vmem:[%s418 + $0x10] sm:$0xf]
      %v424 = vld [vmem:[%s418 + $0x14] sm:$0xf]
      %v425 = vld [vmem:[%s418 + $0x18] sm:$0xf]
      %v426 = vld [vmem:[%s418 + $0x1c] sm:$0xf]
      %v427 = vld [vmem:[%s418 + $0x20] sm:$0xf]
      %v428 = vld [vmem:[%s418 + $0x24] sm:$0xf]
      %v429 = vld [vmem:[%s418 + $0x28] sm:$0xf]
      %v430 = vld [vmem:[%s418 + $0x2c] sm:$0xf]
      %v431 = vld [vmem:[%s418 + $0x30] sm:$0xf]
      %v432 = vld [vmem:[%s418 + $0x34] sm:$0xf]
      %v433 = vld [vmem:[%s418 + $0x38] sm:$0xf]
      %v434 = vld [vmem:[%s418 + $0x3c] sm:$0xf]
      %v435 = vld [vmem:[%s418 + $0x40] sm:$0xf]
      %v436 = vld [vmem:[%s418 + $0x44] sm:$0xf]
      %v437 = vld [vmem:[%s418 + $0x48] sm:$0xf]
      %v438 = vld [vmem:[%s418 + $0x4c] sm:$0xf]
      %v439 = vld [vmem:[%s418 + $0x50] sm:$0xf]
      %v440 = vld [vmem:[%s418 + $0x54] sm:$0x1]
      %v463 = vunpack.c.l.b16 %v419
      %v464 = vunpack.c.l.b16 %v420
      %v465 = vunpack.c.l.b16 %v421
      %v466 = vunpack.c.l.b16 %v422
      %v467 = vunpack.c.l.b16 %v423
      %v468 = vunpack.c.l.b16 %v424
      %v469 = vunpack.c.l.b16 %v425
      %v470 = vunpack.c.l.b16 %v426
      %v471 = vunpack.c.l.b16 %v427
      %v472 = vunpack.c.l.b16 %v428
      %v473 = vunpack.c.l.b16 %v429
      %v474 = vunpack.c.l.b16 %v430
      %v475 = vunpack.c.l.b16 %v431
      %v476 = vunpack.c.l.b16 %v432
      %v477 = vunpack.c.l.b16 %v433
      %v478 = vunpack.c.l.b16 %v434
      %v479 = vunpack.c.l.b16 %v435
      %v480 = vunpack.c.l.b16 %v436
      %v481 = vunpack.c.l.b16 %v437
      %v482 = vunpack.c.l.b16 %v438
      %v483 = vunpack.c.l.b16 %v439
      %v484 = vunpack.c.l.b16 %v440
      %v485 = vpack.c.b16 %v464, %v463
      %v486 = vpack.c.b16 %v466, %v465
      %v487 = vpack.c.b16 %v468, %v467
      %v488 = vpack.c.b16 %v470, %v469
      %v489 = vpack.c.b16 %v472, %v471
      %v490 = vpack.c.b16 %v474, %v473
      %v491 = vpack.c.b16 %v476, %v475
      %v492 = vpack.c.b16 %v478, %v477
      %v493 = vpack.c.b16 %v480, %v479
      %v494 = vpack.c.b16 %v482, %v481
      %v495 = vpack.c.b16 %v484, %v483
      %v497 = vsel %vm256, %v485, 0
      %v500 = vsel %vm256, %v486, 0
      %v503 = vsel %vm256, %v487, 0
      %v506 = vsel %vm256, %v488, 0
      %v509 = vsel %vm256, %v489, 0
      %v512 = vsel %vm256, %v490, 0
      %v515 = vsel %vm256, %v491, 0
      %v518 = vsel %vm256, %v492, 0
      %v521 = vsel %vm256, %v493, 0
      %v524 = vsel %vm256, %v494, 0
      %v527 = vsel %vm256, %v495, 0
      %529 = vmatprep.subr.bf16.mxu0 0
      %530 = vmatpush1.bf16.msra.mxu0 0
      %531 = vmatprep.subr.bf16.mxu0 0
      %532 = vmatpush1.bf16.msra.mxu0 0
      %533 = vmatprep.subr.bf16.mxu0 0
      %534 = vmatpush1.bf16.msra.mxu0 0
      %535 = vmatprep.subr.bf16.mxu0 0
      %536 = vmatpush1.bf16.msra.mxu0 0
      %537 = vmatprep.subr.bf16.mxu0 0
      %538 = vmatpush1.bf16.msra.mxu0 0
      %539 = vmatprep.subr.bf16.mxu0 0
      %540 = vmatpush1.bf16.msra.mxu0 0
      %541 = vmatprep.subr.bf16.mxu0 0
      %542 = vmatpush1.bf16.msra.mxu0 0
      %543 = vmatprep.subr.bf16.mxu0 0
      %544 = vmatpush1.bf16.msra.mxu0 %v295
      %545 = vmatprep.subr.bf16.mxu0 0
      %546 = vmatpush2.bf16.msra.mxu0 0
      %547 = vmatprep.subr.bf16.mxu0 0
      %548 = vmatpush2.bf16.msra.mxu0 0
      %549 = vmatprep.subr.bf16.mxu0 0
      %550 = vmatpush2.bf16.msra.mxu0 0
      %551 = vmatprep.subr.bf16.mxu0 0
      %552 = vmatpush2.bf16.msra.mxu0 0
      %553 = vmatprep.subr.bf16.mxu0 0
      %554 = vmatpush2.bf16.msra.mxu0 0
      %555 = vmatprep.subr.bf16.mxu0 0
      %556 = vmatpush2.bf16.msra.mxu0 0
      %557 = vmatprep.subr.bf16.mxu0 0
      %558 = vmatpush2.bf16.msra.mxu0 0
      %559 = vmatprep.subr.bf16.mxu0 0
      %560 = vmatpush2.bf16.msra.mxu0 0
      %561 = vmatprep.mubr.bf16.mxu0 0
      %562 = vmatmul.mubr.bf16.gmra.mxu0 %v497
      %v563 = vpop.f32.mrf.mxu0
      %v564 = vadd.f32 0.0, %v563
      %v565 = vpop.f32.mrf.mxu0
      %v566 = vpop.f32.mrf.mxu0
      %v567 = vadd.f32 0.0, %v566
      %v568 = vpop.f32.mrf.mxu0
      %569 = vmatprep.mubr.bf16.mxu0 0
      %570 = vmatmul.mubr.bf16.gmra.mxu0 %v500
      %v571 = vpop.f32.mrf.mxu0
      %v572 = vadd.f32 0.0, %v571
      %v573 = vpop.f32.mrf.mxu0
      %v574 = vpop.f32.mrf.mxu0
      %v575 = vadd.f32 0.0, %v574
      %v576 = vpop.f32.mrf.mxu0
      %577 = vmatprep.mubr.bf16.mxu0 0
      %578 = vmatmul.mubr.bf16.gmra.mxu0 %v503
      %v579 = vpop.f32.mrf.mxu0
      %v580 = vadd.f32 0.0, %v579
      %v581 = vpop.f32.mrf.mxu0
      %v582 = vpop.f32.mrf.mxu0
      %v583 = vadd.f32 0.0, %v582
      %v584 = vpop.f32.mrf.mxu0
      %585 = vmatprep.mubr.bf16.mxu0 0
      %586 = vmatmul.mubr.bf16.gmra.mxu0 %v506
      %v587 = vpop.f32.mrf.mxu0
      %v588 = vadd.f32 0.0, %v587
      %v589 = vpop.f32.mrf.mxu0
      %v590 = vpop.f32.mrf.mxu0
      %v591 = vadd.f32 0.0, %v590
      %v592 = vpop.f32.mrf.mxu0
      %593 = vmatprep.mubr.bf16.mxu0 0
      %594 = vmatmul.mubr.bf16.gmra.mxu0 %v509
      %v595 = vpop.f32.mrf.mxu0
      %v596 = vadd.f32 0.0, %v595
      %v597 = vpop.f32.mrf.mxu0
      %v598 = vpop.f32.mrf.mxu0
      %v599 = vadd.f32 0.0, %v598
      %v600 = vpop.f32.mrf.mxu0
      %601 = vmatprep.mubr.bf16.mxu0 0
      %602 = vmatmul.mubr.bf16.gmra.mxu0 %v512
      %v603 = vpop.f32.mrf.mxu0
      %v604 = vadd.f32 0.0, %v603
      %v605 = vpop.f32.mrf.mxu0
      %v606 = vpop.f32.mrf.mxu0
      %v607 = vadd.f32 0.0, %v606
      %v608 = vpop.f32.mrf.mxu0
      %609 = vmatprep.mubr.bf16.mxu0 0
      %610 = vmatmul.mubr.bf16.gmra.mxu0 %v515
      %v611 = vpop.f32.mrf.mxu0
      %v612 = vadd.f32 0.0, %v611
      %v613 = vpop.f32.mrf.mxu0
      %v614 = vpop.f32.mrf.mxu0
      %v615 = vadd.f32 0.0, %v614
      %v616 = vpop.f32.mrf.mxu0
      %617 = vmatprep.mubr.bf16.mxu0 0
      %618 = vmatmul.mubr.bf16.gmra.mxu0 %v518
      %v619 = vpop.f32.mrf.mxu0
      %v620 = vadd.f32 0.0, %v619
      %v621 = vpop.f32.mrf.mxu0
      %v622 = vpop.f32.mrf.mxu0
      %v623 = vadd.f32 0.0, %v622
      %v624 = vpop.f32.mrf.mxu0
      %625 = vmatprep.mubr.bf16.mxu0 0
      %626 = vmatmul.mubr.bf16.gmra.mxu0 %v521
      %v627 = vpop.f32.mrf.mxu0
      %v628 = vadd.f32 0.0, %v627
      %v629 = vpop.f32.mrf.mxu0
      %v630 = vpop.f32.mrf.mxu0
      %v631 = vadd.f32 0.0, %v630
      %v632 = vpop.f32.mrf.mxu0
      %633 = vmatprep.mubr.bf16.mxu0 0
      %634 = vmatmul.mubr.bf16.gmra.mxu0 %v524
      %v635 = vpop.f32.mrf.mxu0
      %v636 = vadd.f32 0.0, %v635
      %v637 = vpop.f32.mrf.mxu0
      %v638 = vpop.f32.mrf.mxu0
      %v639 = vadd.f32 0.0, %v638
      %v640 = vpop.f32.mrf.mxu0
      %641 = vmatprep.mubr.bf16.mxu0 0
      %642 = vmatmul.mubr.bf16.gmra.mxu0 %v527
      %v643 = vpop.f32.mrf.mxu0
      %v644 = vadd.f32 0.0, %v643
      %v645 = vpop.f32.mrf.mxu0
      %v646 = vpop.f32.mrf.mxu0
      %v647 = vadd.f32 0.0, %v646
      %v648 = vpop.f32.mrf.mxu0
      %649 = vdwg.mxu0
      %v650 = vmax.f32 %v332, %v564
      %v651 = vmax.f32 %v335, %v567
      %v652 = vmax.f32 %v340, %v572
      %v653 = vmax.f32 %v343, %v575
      %v654 = vmax.f32 %v348, %v580
      %v655 = vmax.f32 %v351, %v583
      %v656 = vmax.f32 %v356, %v588
      %v657 = vmax.f32 %v359, %v591
      %v658 = vmax.f32 %v364, %v596
      %v659 = vmax.f32 %v367, %v599
      %v660 = vmax.f32 %v372, %v604
      %v661 = vmax.f32 %v375, %v607
      %v662 = vmax.f32 %v380, %v612
      %v663 = vmax.f32 %v383, %v615
      %v664 = vmax.f32 %v388, %v620
      %v665 = vmax.f32 %v391, %v623
      %v666 = vmax.f32 %v396, %v628
      %v667 = vmax.f32 %v399, %v631
      %v668 = vmax.f32 %v404, %v636
      %v669 = vmax.f32 %v407, %v639
      %v670 = vmax.f32 %v412, %v644
      %v671 = vmax.f32 %v415, %v647
      %s672 = scalar_lea.vmem %s165, 176
      %v673 = vld [vmem:[%s672] sm:$0xf]
      %v674 = vld [vmem:[%s672 + $0x4] sm:$0xf]
      %v675 = vld [vmem:[%s672 + $0x8] sm:$0xf]
      %v676 = vld [vmem:[%s672 + $0xc] sm:$0xf]
      %v677 = vld [vmem:[%s672 + $0x10] sm:$0xf]
      %v678 = vld [vmem:[%s672 + $0x14] sm:$0xf]
      %v679 = vld [vmem:[%s672 + $0x18] sm:$0xf]
      %v680 = vld [vmem:[%s672 + $0x1c] sm:$0xf]
      %v681 = vld [vmem:[%s672 + $0x20] sm:$0xf]
      %v682 = vld [vmem:[%s672 + $0x24] sm:$0xf]
      %v683 = vld [vmem:[%s672 + $0x28] sm:$0xf]
      %v684 = vld [vmem:[%s672 + $0x2c] sm:$0xf]
      %v685 = vld [vmem:[%s672 + $0x30] sm:$0xf]
      %v686 = vld [vmem:[%s672 + $0x34] sm:$0xf]
      %v687 = vld [vmem:[%s672 + $0x38] sm:$0xf]
      %v688 = vld [vmem:[%s672 + $0x3c] sm:$0xf]
      %v689 = vld [vmem:[%s672 + $0x40] sm:$0xf]
      %v690 = vld [vmem:[%s672 + $0x44] sm:$0xf]
      %v691 = vld [vmem:[%s672 + $0x48] sm:$0xf]
      %v692 = vld [vmem:[%s672 + $0x4c] sm:$0xf]
      %v693 = vld [vmem:[%s672 + $0x50] sm:$0xf]
      %v694 = vld [vmem:[%s672 + $0x54] sm:$0x1]
      %v717 = vunpack.c.l.b16 %v673
      %v718 = vunpack.c.l.b16 %v674
      %v719 = vunpack.c.l.b16 %v675
      %v720 = vunpack.c.l.b16 %v676
      %v721 = vunpack.c.l.b16 %v677
      %v722 = vunpack.c.l.b16 %v678
      %v723 = vunpack.c.l.b16 %v679
      %v724 = vunpack.c.l.b16 %v680
      %v725 = vunpack.c.l.b16 %v681
      %v726 = vunpack.c.l.b16 %v682
      %v727 = vunpack.c.l.b16 %v683
      %v728 = vunpack.c.l.b16 %v684
      %v729 = vunpack.c.l.b16 %v685
      %v730 = vunpack.c.l.b16 %v686
      %v731 = vunpack.c.l.b16 %v687
      %v732 = vunpack.c.l.b16 %v688
      %v733 = vunpack.c.l.b16 %v689
      %v734 = vunpack.c.l.b16 %v690
      %v735 = vunpack.c.l.b16 %v691
      %v736 = vunpack.c.l.b16 %v692
      %v737 = vunpack.c.l.b16 %v693
      %v738 = vunpack.c.l.b16 %v694
      %v739 = vpack.c.b16 %v718, %v717
      %v740 = vpack.c.b16 %v720, %v719
      %v741 = vpack.c.b16 %v722, %v721
      %v742 = vpack.c.b16 %v724, %v723
      %v743 = vpack.c.b16 %v726, %v725
      %v744 = vpack.c.b16 %v728, %v727
      %v745 = vpack.c.b16 %v730, %v729
      %v746 = vpack.c.b16 %v732, %v731
      %v747 = vpack.c.b16 %v734, %v733
      %v748 = vpack.c.b16 %v736, %v735
      %v749 = vpack.c.b16 %v738, %v737
      %v751 = vsel %vm256, %v739, 0
      %v754 = vsel %vm256, %v740, 0
      %v757 = vsel %vm256, %v741, 0
      %v760 = vsel %vm256, %v742, 0
      %v763 = vsel %vm256, %v743, 0
      %v766 = vsel %vm256, %v744, 0
      %v769 = vsel %vm256, %v745, 0
      %v772 = vsel %vm256, %v746, 0
      %v775 = vsel %vm256, %v747, 0
      %v778 = vsel %vm256, %v748, 0
      %v781 = vsel %vm256, %v749, 0
      %783 = vmatprep.subr.bf16.mxu0 0
      %784 = vmatpush1.bf16.msra.mxu0 0
      %785 = vmatprep.subr.bf16.mxu0 0
      %786 = vmatpush1.bf16.msra.mxu0 0
      %787 = vmatprep.subr.bf16.mxu0 0
      %788 = vmatpush1.bf16.msra.mxu0 0
      %789 = vmatprep.subr.bf16.mxu0 0
      %790 = vmatpush1.bf16.msra.mxu0 0
      %791 = vmatprep.subr.bf16.mxu0 0
      %792 = vmatpush1.bf16.msra.mxu0 0
      %793 = vmatprep.subr.bf16.mxu0 0
      %794 = vmatpush1.bf16.msra.mxu0 0
      %795 = vmatprep.subr.bf16.mxu0 0
      %796 = vmatpush1.bf16.msra.mxu0 0
      %797 = vmatprep.subr.bf16.mxu0 0
      %798 = vmatpush1.bf16.msra.mxu0 %v295
      %799 = vmatprep.subr.bf16.mxu0 0
      %800 = vmatpush2.bf16.msra.mxu0 0
      %801 = vmatprep.subr.bf16.mxu0 0
      %802 = vmatpush2.bf16.msra.mxu0 0
      %803 = vmatprep.subr.bf16.mxu0 0
      %804 = vmatpush2.bf16.msra.mxu0 0
      %805 = vmatprep.subr.bf16.mxu0 0
      %806 = vmatpush2.bf16.msra.mxu0 0
      %807 = vmatprep.subr.bf16.mxu0 0
      %808 = vmatpush2.bf16.msra.mxu0 0
      %809 = vmatprep.subr.bf16.mxu0 0
      %810 = vmatpush2.bf16.msra.mxu0 0
      %811 = vmatprep.subr.bf16.mxu0 0
      %812 = vmatpush2.bf16.msra.mxu0 0
      %813 = vmatprep.subr.bf16.mxu0 0
      %814 = vmatpush2.bf16.msra.mxu0 0
      %815 = vmatprep.mubr.bf16.mxu0 0
      %816 = vmatmul.mubr.bf16.gmra.mxu0 %v751
      %v817 = vpop.f32.mrf.mxu0
      %v818 = vadd.f32 0.0, %v817
      %v819 = vpop.f32.mrf.mxu0
      %v820 = vpop.f32.mrf.mxu0
      %v821 = vadd.f32 0.0, %v820
      %v822 = vpop.f32.mrf.mxu0
      %823 = vmatprep.mubr.bf16.mxu0 0
      %824 = vmatmul.mubr.bf16.gmra.mxu0 %v754
      %v825 = vpop.f32.mrf.mxu0
      %v826 = vadd.f32 0.0, %v825
      %v827 = vpop.f32.mrf.mxu0
      %v828 = vpop.f32.mrf.mxu0
      %v829 = vadd.f32 0.0, %v828
      %v830 = vpop.f32.mrf.mxu0
      %831 = vmatprep.mubr.bf16.mxu0 0
      %832 = vmatmul.mubr.bf16.gmra.mxu0 %v757
      %v833 = vpop.f32.mrf.mxu0
      %v834 = vadd.f32 0.0, %v833
      %v835 = vpop.f32.mrf.mxu0
      %v836 = vpop.f32.mrf.mxu0
      %v837 = vadd.f32 0.0, %v836
      %v838 = vpop.f32.mrf.mxu0
      %839 = vmatprep.mubr.bf16.mxu0 0
      %840 = vmatmul.mubr.bf16.gmra.mxu0 %v760
      %v841 = vpop.f32.mrf.mxu0
      %v842 = vadd.f32 0.0, %v841
      %v843 = vpop.f32.mrf.mxu0
      %v844 = vpop.f32.mrf.mxu0
      %v845 = vadd.f32 0.0, %v844
      %v846 = vpop.f32.mrf.mxu0
      %847 = vmatprep.mubr.bf16.mxu0 0
      %848 = vmatmul.mubr.bf16.gmra.mxu0 %v763
      %v849 = vpop.f32.mrf.mxu0
      %v850 = vadd.f32 0.0, %v849
      %v851 = vpop.f32.mrf.mxu0
      %v852 = vpop.f32.mrf.mxu0
      %v853 = vadd.f32 0.0, %v852
      %v854 = vpop.f32.mrf.mxu0
      %855 = vmatprep.mubr.bf16.mxu0 0
      %856 = vmatmul.mubr.bf16.gmra.mxu0 %v766
      %v857 = vpop.f32.mrf.mxu0
      %v858 = vadd.f32 0.0, %v857
      %v859 = vpop.f32.mrf.mxu0
      %v860 = vpop.f32.mrf.mxu0
      %v861 = vadd.f32 0.0, %v860
      %v862 = vpop.f32.mrf.mxu0
      %863 = vmatprep.mubr.bf16.mxu0 0
      %864 = vmatmul.mubr.bf16.gmra.mxu0 %v769
      %v865 = vpop.f32.mrf.mxu0
      %v866 = vadd.f32 0.0, %v865
      %v867 = vpop.f32.mrf.mxu0
      %v868 = vpop.f32.mrf.mxu0
      %v869 = vadd.f32 0.0, %v868
      %v870 = vpop.f32.mrf.mxu0
      %871 = vmatprep.mubr.bf16.mxu0 0
      %872 = vmatmul.mubr.bf16.gmra.mxu0 %v772
      %v873 = vpop.f32.mrf.mxu0
      %v874 = vadd.f32 0.0, %v873
      %v875 = vpop.f32.mrf.mxu0
      %v876 = vpop.f32.mrf.mxu0
      %v877 = vadd.f32 0.0, %v876
      %v878 = vpop.f32.mrf.mxu0
      %879 = vmatprep.mubr.bf16.mxu0 0
      %880 = vmatmul.mubr.bf16.gmra.mxu0 %v775
      %v881 = vpop.f32.mrf.mxu0
      %v882 = vadd.f32 0.0, %v881
      %v883 = vpop.f32.mrf.mxu0
      %v884 = vpop.f32.mrf.mxu0
      %v885 = vadd.f32 0.0, %v884
      %v886 = vpop.f32.mrf.mxu0
      %887 = vmatprep.mubr.bf16.mxu0 0
      %888 = vmatmul.mubr.bf16.gmra.mxu0 %v778
      %v889 = vpop.f32.mrf.mxu0
      %v890 = vadd.f32 0.0, %v889
      %v891 = vpop.f32.mrf.mxu0
      %v892 = vpop.f32.mrf.mxu0
      %v893 = vadd.f32 0.0, %v892
      %v894 = vpop.f32.mrf.mxu0
      %895 = vmatprep.mubr.bf16.mxu0 0
      %896 = vmatmul.mubr.bf16.gmra.mxu0 %v781
      %v897 = vpop.f32.mrf.mxu0
      %v898 = vadd.f32 0.0, %v897
      %v899 = vpop.f32.mrf.mxu0
      %v900 = vpop.f32.mrf.mxu0
      %v901 = vadd.f32 0.0, %v900
      %v902 = vpop.f32.mrf.mxu0
      %903 = vdwg.mxu0
      %v904 = vmax.f32 %v650, %v818
      %v905 = vmax.f32 %v651, %v821
      %v906 = vmax.f32 %v652, %v826
      %v907 = vmax.f32 %v653, %v829
      %v908 = vmax.f32 %v654, %v834
      %v909 = vmax.f32 %v655, %v837
      %v910 = vmax.f32 %v656, %v842
      %v911 = vmax.f32 %v657, %v845
      %v912 = vmax.f32 %v658, %v850
      %v913 = vmax.f32 %v659, %v853
      %v914 = vmax.f32 %v660, %v858
      %v915 = vmax.f32 %v661, %v861
      %v916 = vmax.f32 %v662, %v866
      %v917 = vmax.f32 %v663, %v869
      %v918 = vmax.f32 %v664, %v874
      %v919 = vmax.f32 %v665, %v877
      %v920 = vmax.f32 %v666, %v882
      %v921 = vmax.f32 %v667, %v885
      %v922 = vmax.f32 %v668, %v890
      %v923 = vmax.f32 %v669, %v893
      %v924 = vmax.f32 %v670, %v898
      %v925 = vmax.f32 %v671, %v901
      %s926 = scalar_lea.vmem %s165, 264
      %v927 = vld [vmem:[%s926] sm:$0xf]
      %v928 = vld [vmem:[%s926 + $0x4] sm:$0xf]
      %v929 = vld [vmem:[%s926 + $0x8] sm:$0xf]
      %v930 = vld [vmem:[%s926 + $0xc] sm:$0xf]
      %v931 = vld [vmem:[%s926 + $0x10] sm:$0xf]
      %v932 = vld [vmem:[%s926 + $0x14] sm:$0xf]
      %v933 = vld [vmem:[%s926 + $0x18] sm:$0xf]
      %v934 = vld [vmem:[%s926 + $0x1c] sm:$0xf]
      %v935 = vld [vmem:[%s926 + $0x20] sm:$0xf]
      %v936 = vld [vmem:[%s926 + $0x24] sm:$0xf]
      %v937 = vld [vmem:[%s926 + $0x28] sm:$0xf]
      %v938 = vld [vmem:[%s926 + $0x2c] sm:$0xf]
      %v939 = vld [vmem:[%s926 + $0x30] sm:$0xf]
      %v940 = vld [vmem:[%s926 + $0x34] sm:$0xf]
      %v941 = vld [vmem:[%s926 + $0x38] sm:$0xf]
      %v942 = vld [vmem:[%s926 + $0x3c] sm:$0xf]
      %v943 = vld [vmem:[%s926 + $0x40] sm:$0xf]
      %v944 = vld [vmem:[%s926 + $0x44] sm:$0xf]
      %v945 = vld [vmem:[%s926 + $0x48] sm:$0xf]
      %v946 = vld [vmem:[%s926 + $0x4c] sm:$0xf]
      %v947 = vld [vmem:[%s926 + $0x50] sm:$0xf]
      %v948 = vld [vmem:[%s926 + $0x54] sm:$0x1]
      %v971 = vunpack.c.l.b16 %v927
      %v972 = vunpack.c.l.b16 %v928
      %v973 = vunpack.c.l.b16 %v929
      %v974 = vunpack.c.l.b16 %v930
      %v975 = vunpack.c.l.b16 %v931
      %v976 = vunpack.c.l.b16 %v932
      %v977 = vunpack.c.l.b16 %v933
      %v978 = vunpack.c.l.b16 %v934
      %v979 = vunpack.c.l.b16 %v935
      %v980 = vunpack.c.l.b16 %v936
      %v981 = vunpack.c.l.b16 %v937
      %v982 = vunpack.c.l.b16 %v938
      %v983 = vunpack.c.l.b16 %v939
      %v984 = vunpack.c.l.b16 %v940
      %v985 = vunpack.c.l.b16 %v941
      %v986 = vunpack.c.l.b16 %v942
      %v987 = vunpack.c.l.b16 %v943
      %v988 = vunpack.c.l.b16 %v944
      %v989 = vunpack.c.l.b16 %v945
      %v990 = vunpack.c.l.b16 %v946
      %v991 = vunpack.c.l.b16 %v947
      %v992 = vunpack.c.l.b16 %v948
      %v993 = vpack.c.b16 %v972, %v971
      %v994 = vpack.c.b16 %v974, %v973
      %v995 = vpack.c.b16 %v976, %v975
      %v996 = vpack.c.b16 %v978, %v977
      %v997 = vpack.c.b16 %v980, %v979
      %v998 = vpack.c.b16 %v982, %v981
      %v999 = vpack.c.b16 %v984, %v983
      %v1000 = vpack.c.b16 %v986, %v985
      %v1001 = vpack.c.b16 %v988, %v987
      %v1002 = vpack.c.b16 %v990, %v989
      %v1003 = vpack.c.b16 %v992, %v991
      %v1005 = vsel %vm256, %v993, 0
      %v1008 = vsel %vm256, %v994, 0
      %v1011 = vsel %vm256, %v995, 0
      %v1014 = vsel %vm256, %v996, 0
      %v1017 = vsel %vm256, %v997, 0
      %v1020 = vsel %vm256, %v998, 0
      %v1023 = vsel %vm256, %v999, 0
      %v1026 = vsel %vm256, %v1000, 0
      %v1029 = vsel %vm256, %v1001, 0
      %v1032 = vsel %vm256, %v1002, 0
      %v1035 = vsel %vm256, %v1003, 0
      %1037 = vmatprep.subr.bf16.mxu0 0
      %1038 = vmatpush1.bf16.msra.mxu0 0
      %1039 = vmatprep.subr.bf16.mxu0 0
      %1040 = vmatpush1.bf16.msra.mxu0 0
      %1041 = vmatprep.subr.bf16.mxu0 0
      %1042 = vmatpush1.bf16.msra.mxu0 0
      %1043 = vmatprep.subr.bf16.mxu0 0
      %1044 = vmatpush1.bf16.msra.mxu0 0
      %1045 = vmatprep.subr.bf16.mxu0 0
      %1046 = vmatpush1.bf16.msra.mxu0 0
      %1047 = vmatprep.subr.bf16.mxu0 0
      %1048 = vmatpush1.bf16.msra.mxu0 0
      %1049 = vmatprep.subr.bf16.mxu0 0
      %1050 = vmatpush1.bf16.msra.mxu0 0
      %1051 = vmatprep.subr.bf16.mxu0 0
      %1052 = vmatpush1.bf16.msra.mxu0 %v295
      %1053 = vmatprep.subr.bf16.mxu0 0
      %1054 = vmatpush2.bf16.msra.mxu0 0
      %1055 = vmatprep.subr.bf16.mxu0 0
      %1056 = vmatpush2.bf16.msra.mxu0 0
      %1057 = vmatprep.subr.bf16.mxu0 0
      %1058 = vmatpush2.bf16.msra.mxu0 0
      %1059 = vmatprep.subr.bf16.mxu0 0
      %1060 = vmatpush2.bf16.msra.mxu0 0
      %1061 = vmatprep.subr.bf16.mxu0 0
      %1062 = vmatpush2.bf16.msra.mxu0 0
      %1063 = vmatprep.subr.bf16.mxu0 0
      %1064 = vmatpush2.bf16.msra.mxu0 0
      %1065 = vmatprep.subr.bf16.mxu0 0
      %1066 = vmatpush2.bf16.msra.mxu0 0
      %1067 = vmatprep.subr.bf16.mxu0 0
      %1068 = vmatpush2.bf16.msra.mxu0 0
      %1069 = vmatprep.mubr.bf16.mxu0 0
      %1070 = vmatmul.mubr.bf16.gmra.mxu0 %v1005
      %v1071 = vpop.f32.mrf.mxu0
      %v1072 = vadd.f32 0.0, %v1071
      %v1073 = vpop.f32.mrf.mxu0
      %v1074 = vpop.f32.mrf.mxu0
      %v1075 = vadd.f32 0.0, %v1074
      %v1076 = vpop.f32.mrf.mxu0
      %1077 = vmatprep.mubr.bf16.mxu0 0
      %1078 = vmatmul.mubr.bf16.gmra.mxu0 %v1008
      %v1079 = vpop.f32.mrf.mxu0
      %v1080 = vadd.f32 0.0, %v1079
      %v1081 = vpop.f32.mrf.mxu0
      %v1082 = vpop.f32.mrf.mxu0
      %v1083 = vadd.f32 0.0, %v1082
      %v1084 = vpop.f32.mrf.mxu0
      %1085 = vmatprep.mubr.bf16.mxu0 0
      %1086 = vmatmul.mubr.bf16.gmra.mxu0 %v1011
      %v1087 = vpop.f32.mrf.mxu0
      %v1088 = vadd.f32 0.0, %v1087
      %v1089 = vpop.f32.mrf.mxu0
      %v1090 = vpop.f32.mrf.mxu0
      %v1091 = vadd.f32 0.0, %v1090
      %v1092 = vpop.f32.mrf.mxu0
      %1093 = vmatprep.mubr.bf16.mxu0 0
      %1094 = vmatmul.mubr.bf16.gmra.mxu0 %v1014
      %v1095 = vpop.f32.mrf.mxu0
      %v1096 = vadd.f32 0.0, %v1095
      %v1097 = vpop.f32.mrf.mxu0
      %v1098 = vpop.f32.mrf.mxu0
      %v1099 = vadd.f32 0.0, %v1098
      %v1100 = vpop.f32.mrf.mxu0
      %1101 = vmatprep.mubr.bf16.mxu0 0
      %1102 = vmatmul.mubr.bf16.gmra.mxu0 %v1017
      %v1103 = vpop.f32.mrf.mxu0
      %v1104 = vadd.f32 0.0, %v1103
      %v1105 = vpop.f32.mrf.mxu0
      %v1106 = vpop.f32.mrf.mxu0
      %v1107 = vadd.f32 0.0, %v1106
      %v1108 = vpop.f32.mrf.mxu0
      %1109 = vmatprep.mubr.bf16.mxu0 0
      %1110 = vmatmul.mubr.bf16.gmra.mxu0 %v1020
      %v1111 = vpop.f32.mrf.mxu0
      %v1112 = vadd.f32 0.0, %v1111
      %v1113 = vpop.f32.mrf.mxu0
      %v1114 = vpop.f32.mrf.mxu0
      %v1115 = vadd.f32 0.0, %v1114
      %v1116 = vpop.f32.mrf.mxu0
      %1117 = vmatprep.mubr.bf16.mxu0 0
      %1118 = vmatmul.mubr.bf16.gmra.mxu0 %v1023
      %v1119 = vpop.f32.mrf.mxu0
      %v1120 = vadd.f32 0.0, %v1119
      %v1121 = vpop.f32.mrf.mxu0
      %v1122 = vpop.f32.mrf.mxu0
      %v1123 = vadd.f32 0.0, %v1122
      %v1124 = vpop.f32.mrf.mxu0
      %1125 = vmatprep.mubr.bf16.mxu0 0
      %1126 = vmatmul.mubr.bf16.gmra.mxu0 %v1026
      %v1127 = vpop.f32.mrf.mxu0
      %v1128 = vadd.f32 0.0, %v1127
      %v1129 = vpop.f32.mrf.mxu0
      %v1130 = vpop.f32.mrf.mxu0
      %v1131 = vadd.f32 0.0, %v1130
      %v1132 = vpop.f32.mrf.mxu0
      %1133 = vmatprep.mubr.bf16.mxu0 0
      %1134 = vmatmul.mubr.bf16.gmra.mxu0 %v1029
      %v1135 = vpop.f32.mrf.mxu0
      %v1136 = vadd.f32 0.0, %v1135
      %v1137 = vpop.f32.mrf.mxu0
      %v1138 = vpop.f32.mrf.mxu0
      %v1139 = vadd.f32 0.0, %v1138
      %v1140 = vpop.f32.mrf.mxu0
      %1141 = vmatprep.mubr.bf16.mxu0 0
      %1142 = vmatmul.mubr.bf16.gmra.mxu0 %v1032
      %v1143 = vpop.f32.mrf.mxu0
      %v1144 = vadd.f32 0.0, %v1143
      %v1145 = vpop.f32.mrf.mxu0
      %v1146 = vpop.f32.mrf.mxu0
      %v1147 = vadd.f32 0.0, %v1146
      %v1148 = vpop.f32.mrf.mxu0
      %1149 = vmatprep.mubr.bf16.mxu0 0
      %1150 = vmatmul.mubr.bf16.gmra.mxu0 %v1035
      %v1151 = vpop.f32.mrf.mxu0
      %v1152 = vadd.f32 0.0, %v1151
      %v1153 = vpop.f32.mrf.mxu0
      %v1154 = vpop.f32.mrf.mxu0
      %v1155 = vadd.f32 0.0, %v1154
      %v1156 = vpop.f32.mrf.mxu0
      %1157 = vdwg.mxu0
      %v1158 = vmax.f32 %v904, %v1072
      %v1159 = vmax.f32 %v905, %v1075
      %v1160 = vmax.f32 %v906, %v1080
      %v1161 = vmax.f32 %v907, %v1083
      %v1162 = vmax.f32 %v908, %v1088
      %v1163 = vmax.f32 %v909, %v1091
      %v1164 = vmax.f32 %v910, %v1096
      %v1165 = vmax.f32 %v911, %v1099
      %v1166 = vmax.f32 %v912, %v1104
      %v1167 = vmax.f32 %v913, %v1107
      %v1168 = vmax.f32 %v914, %v1112
      %v1169 = vmax.f32 %v915, %v1115
      %v1170 = vmax.f32 %v916, %v1120
      %v1171 = vmax.f32 %v917, %v1123
      %v1172 = vmax.f32 %v918, %v1128
      %v1173 = vmax.f32 %v919, %v1131
      %v1174 = vmax.f32 %v920, %v1136
      %v1175 = vmax.f32 %v921, %v1139
      %v1176 = vmax.f32 %v922, %v1144
      %v1177 = vmax.f32 %v923, %v1147
      %v1178 = vmax.f32 %v924, %v1152
      %v1179 = vmax.f32 %v925, %v1155
      %v1180 = vld [vmem:[%s2] sm:$0x1]
      %v1182 = vlaneseq
      %v1183 = vshrl.u32 %v1182, 7
      %v1184 = vsub.s32 0, %v1183
      %v1185 = vrot.slane %v1180, %v1184
      %v1187 = vadd.f32 %v1158, %v1185
      %v1188 = vadd.f32 %v1159, %v1185
      %v1189 = vadd.f32 %v1160, %v1185
      %v1190 = vadd.f32 %v1161, %v1185
      %v1191 = vadd.f32 %v1162, %v1185
      %v1192 = vadd.f32 %v1163, %v1185
      %v1193 = vadd.f32 %v1164, %v1185
      %v1194 = vadd.f32 %v1165, %v1185
      %v1195 = vadd.f32 %v1166, %v1185
      %v1196 = vadd.f32 %v1167, %v1185
      %v1197 = vadd.f32 %v1168, %v1185
      %v1198 = vadd.f32 %v1169, %v1185
      %v1199 = vadd.f32 %v1170, %v1185
      %v1200 = vadd.f32 %v1171, %v1185
      %v1201 = vadd.f32 %v1172, %v1185
      %v1202 = vadd.f32 %v1173, %v1185
      %v1203 = vadd.f32 %v1174, %v1185
      %v1204 = vadd.f32 %v1175, %v1185
      %v1205 = vadd.f32 %v1176, %v1185
      %v1206 = vadd.f32 %v1177, %v1185
      %v1207 = vadd.f32 %v1178, %v1185
      %v1208 = vadd.f32 %v1179, %v1185
      %v1209 = vmax.f32 %v1187, 0.0
      %v1210 = vmax.f32 %v1188, 0.0
      %v1211 = vmax.f32 %v1189, 0.0
      %v1212 = vmax.f32 %v1190, 0.0
      %v1213 = vmax.f32 %v1191, 0.0
      %v1214 = vmax.f32 %v1192, 0.0
      %v1215 = vmax.f32 %v1193, 0.0
      %v1216 = vmax.f32 %v1194, 0.0
      %v1217 = vmax.f32 %v1195, 0.0
      %v1218 = vmax.f32 %v1196, 0.0
      %v1219 = vmax.f32 %v1197, 0.0
      %v1220 = vmax.f32 %v1198, 0.0
      %v1221 = vmax.f32 %v1199, 0.0
      %v1222 = vmax.f32 %v1200, 0.0
      %v1223 = vmax.f32 %v1201, 0.0
      %v1224 = vmax.f32 %v1202, 0.0
      %v1225 = vmax.f32 %v1203, 0.0
      %v1226 = vmax.f32 %v1204, 0.0
      %v1227 = vmax.f32 %v1205, 0.0
      %v1228 = vmax.f32 %v1206, 0.0
      %v1229 = vmax.f32 %v1207, 0.0
      %v1230 = vmax.f32 %v1208, 0.0
      %1231 = vst [vmem:[%s170] sm:$0xff] %v1209
      %1232 = vst [vmem:[%s170 + $0x8] sm:$0xff] %v1210
      %1233 = vst [vmem:[%s170 + $0x10] sm:$0xff] %v1211
      %1234 = vst [vmem:[%s170 + $0x18] sm:$0xff] %v1212
      %1235 = vst [vmem:[%s170 + $0x20] sm:$0xff] %v1213
      %1236 = vst [vmem:[%s170 + $0x28] sm:$0xff] %v1214
      %1237 = vst [vmem:[%s170 + $0x30] sm:$0xff] %v1215
      %1238 = vst [vmem:[%s170 + $0x38] sm:$0xff] %v1216
      %1239 = vst [vmem:[%s170 + $0x40] sm:$0xff] %v1217
      %1240 = vst [vmem:[%s170 + $0x48] sm:$0xff] %v1218
      %1241 = vst [vmem:[%s170 + $0x50] sm:$0xff] %v1219
      %1242 = vst [vmem:[%s170 + $0x58] sm:$0xff] %v1220
      %1243 = vst [vmem:[%s170 + $0x60] sm:$0xff] %v1221
      %1244 = vst [vmem:[%s170 + $0x68] sm:$0xff] %v1222
      %1245 = vst [vmem:[%s170 + $0x70] sm:$0xff] %v1223
      %1246 = vst [vmem:[%s170 + $0x78] sm:$0xff] %v1224
      %1247 = vst [vmem:[%s170 + $0x80] sm:$0xff] %v1225
      %1248 = vst [vmem:[%s170 + $0x88] sm:$0xff] %v1226
      %1249 = vst [vmem:[%s170 + $0x90] sm:$0xff] %v1227
      %1250 = vst [vmem:[%s170 + $0x98] sm:$0xff] %v1228
      %1251 = vst [vmem:[%s170 + $0xa0] sm:$0xff] %v1229
      %1252 = vst [vmem:[%s170 + $0xa8] sm:$0x1] %v1230
      %p1253 = scmp.lt.s32.totalorder %s14, 1
      %s1254 = scalar_select %p1253, %s14, 1
      %s1255 = smul.addr %s1254, 22
      %s1256 = smul.addr %s1255, 8
      %s1257 = scalar_lea.vmem %s3, %s1256
      // Predicated region
      $region33: #{pytorch_cnn_forward.3} parent=31 // pred_check
        %p1258 = pneg %p100
      $region34: #{pytorch_cnn_forward.3} parent=31 // pred_check_branch
        %1260 = sbr.rel (%p1258) target = $region36
      $region35: #{pytorch_cnn_forward.3} parent=31 // pred_region
        _
      $region36: #{pytorch_cnn_forward.3} parent=31 // pred_fallthru
        _
    $region32: #{pytorch_cnn_forward.3} parent=5 // pred_fallthru
      _
    %p1261 = scmp.le.s32.totalorder 2, %s9
    // Predicated region
    $region37: #{pytorch_cnn_forward.3} parent=5 // pred_check
      %p1262 = pneg %p1261
    $region38: #{pytorch_cnn_forward.3} parent=5 // pred_check_branch
      %1264 = sbr.rel (%p1262) target = $region40
    $region39: #{pytorch_cnn_forward.3} parent=5 // pred_region
      %s1265 = ssub.s32 %s9, 2
      // Predicated region
      $region41: #{pytorch_cnn_forward.3} parent=39 // pred_check
        %p1266 = pneg %p106
      $region42: #{pytorch_cnn_forward.3} parent=39 // pred_check_branch
        %1268 = sbr.rel (%p1266) target = $region44
      $region43: #{pytorch_cnn_forward.3} parent=39 // pred_region
        %p1269 = scmp.lt.s32.totalorder %s15, 1
        %s1270 = scalar_select %p1269, %s15, 1
        %s1271 = smul.addr %s1270, 22
        %s1272 = smul.addr %s1271, 8
        %s1273 = scalar_lea.vmem %s3, %s1272
      $region44: #{pytorch_cnn_forward.3} parent=39 // pred_fallthru
        _
    $region40: #{pytorch_cnn_forward.3} parent=5 // pred_fallthru
      _
  $region6: #{pytorch_cnn_forward.3} parent=0 // loop_footer
    %s13 = sadd.s32 1, %s9
  $region7: #{pytorch_cnn_forward.3} parent=0 // loop_footer_branch
    %8 = sbr.rel target = $region3
  $region8: #{pytorch_cnn_forward.3} parent=0 // loop_exit
    _

// kernel: pytorch_cnn_forward.4
$region0: #{pytorch_cnn_forward.4}
  #allocation0 [shape = 'u32[]', space=smem, size = 0x4, offset = 0x4, fixed_abs, tag = 'smem constant byte address 0x4 - core index']
  #allocation1 [shape = 'u32[144,128]{1,0:T(1,128)}', space=vmem, size = 0x12000, scoped, tag = 'internal scratch']
  %s0 = inlined_call_operand.vmem [shape: bf16[2,4,25,1152], index: 0, kind: input, shape index: {}]
  %s1 = inlined_call_operand.vmem [shape: bf16[1152,64], index: 1, kind: input, shape index: {}]
  %s2 = inlined_call_operand.vmem [shape: f32[1,64], index: 2, kind: input, shape index: {}]
  %s3 = inlined_call_operand.vmem [shape: f32[2,25,64], index: 3, kind: output, shape index: {}]
  %s4 = sld [smem:[#allocation0]]
  $region45: #{pytorch_cnn_forward.4} parent=0
    _
  %s6 = ssub.s32 1, %s4
  %s7 = scalar_select 0, %s6, %s4
  loop: start=0, step=1, limit=4
  $region2: #{pytorch_cnn_forward.4} parent=0 // loop_pre_header
    _
  $region3: #{pytorch_cnn_forward.4} parent=0 // loop_header
    %s9 = sphi 0, %s13
    %p10 = scmp.ge.s32.totalorder %s9, 4
    %s19 = sphi 0, %s21
    %s22 = sphi 0, %s19
    %s23 = sphi 0, %s22
    %s39 = sphi 0, %s23
    %s43 = sphi 0, %s43
    %s45 = sphi 0, %s43
    %s46 = sphi 0, %s45
    %s60 = sphi 0, %s46
    %s64 = sphi 0, %s64
    %s66 = sphi 0, %s64
    %s67 = sphi 0, %s66
    %s81 = sphi 0, %s67
    %s87 = sphi 0, %s89
    %s90 = sphi 0, %s87
    %s91 = sphi 0, %s90
    %s107 = sphi 0, %s91
  $region4: #{pytorch_cnn_forward.4} parent=0 // loop_header_branch
    %12 = sbr.rel (%p10) target = $region8
  $region5: #{pytorch_cnn_forward.4} parent=0 // loop_body
    %s14 = ssub.s32 %s9, 1
    %s15 = ssub.s32 %s9, 2
    %s16 = sadd.s32 %s9, 1
    %s17 = ssub.s32 %s9, %s16
    %p18 = scmp.eq.s32.totalorder %s17, 0
    %s20 = sadd.s32 %s19, 1
    %s21 = scalar_select %p18, %s19, %s20
    %p24 = pneg %p18
    %p25 = scmp.eq.s32.totalorder %s9, 1
    %p26 = por %p24, %p25
    %p27 = scmp.ne.s32.totalorder %s19, %s22
    %p28 = scmp.eq.s32.totalorder %s9, 0
    %p29 = por %p27, %p28
    %p30 = scmp.ne.s32.totalorder %s19, %s22
    %p31 = scmp.eq.s32.totalorder %s14, 1
    %p32 = por %p30, %p31
    %p33 = scmp.ne.s32.totalorder %s22, %s23
    %p34 = scmp.eq.s32.totalorder %s14, 0
    %p35 = por %p33, %p34
    %p36 = scmp.ne.s32.totalorder %s22, %s23
    %p37 = scmp.eq.s32.totalorder %s15, 1
    %p38 = por %p36, %p37
    %p40 = scmp.ne.s32.totalorder %s23, %s39
    %p41 = scmp.eq.s32.totalorder %s15, 0
    %p42 = por %p40, %p41
    %s44 = sadd.s32 %s43, 1
    %p47 = scmp.eq.s32.totalorder %s9, 1
    %p48 = scmp.ne.s32.totalorder %s43, %s45
    %p49 = scmp.eq.s32.totalorder %s9, 0
    %p50 = por %p48, %p49
    %p51 = scmp.ne.s32.totalorder %s43, %s45
    %p52 = scmp.eq.s32.totalorder %s14, 1
    %p53 = por %p51, %p52
    %p54 = scmp.ne.s32.totalorder %s45, %s46
    %p55 = scmp.eq.s32.totalorder %s14, 0
    %p56 = por %p54, %p55
    %p57 = scmp.ne.s32.totalorder %s45, %s46
    %p58 = scmp.eq.s32.totalorder %s15, 1
    %p59 = por %p57, %p58
    %p61 = scmp.ne.s32.totalorder %s46, %s60
    %p62 = scmp.eq.s32.totalorder %s15, 0
    %p63 = por %p61, %p62
    %s65 = sadd.s32 %s64, 1
    %p68 = scmp.eq.s32.totalorder %s9, 1
    %p69 = scmp.ne.s32.totalorder %s64, %s66
    %p70 = scmp.eq.s32.totalorder %s9, 0
    %p71 = por %p69, %p70
    %p72 = scmp.ne.s32.totalorder %s64, %s66
    %p73 = scmp.eq.s32.totalorder %s14, 1
    %p74 = por %p72, %p73
    %p75 = scmp.ne.s32.totalorder %s66, %s67
    %p76 = scmp.eq.s32.totalorder %s14, 0
    %p77 = por %p75, %p76
    %p78 = scmp.ne.s32.totalorder %s66, %s67
    %p79 = scmp.eq.s32.totalorder %s15, 1
    %p80 = por %p78, %p79
    %p82 = scmp.ne.s32.totalorder %s67, %s81
    %p83 = scmp.eq.s32.totalorder %s15, 0
    %p84 = por %p82, %p83
    %s85 = ssub.s32 %s9, %s16
    %p86 = scmp.eq.s32.totalorder %s85, 0
    %s88 = sadd.s32 %s87, 1
    %s89 = scalar_select %p86, %s87, %s88
    %p92 = pneg %p86
    %p93 = scmp.eq.s32.totalorder %s9, 1
    %p94 = por %p92, %p93
    %p95 = scmp.ne.s32.totalorder %s87, %s90
    %p96 = scmp.eq.s32.totalorder %s9, 0
    %p97 = por %p95, %p96
    %p98 = scmp.ne.s32.totalorder %s87, %s90
    %p99 = scmp.eq.s32.totalorder %s14, 1
    %p100 = por %p98, %p99
    %p101 = scmp.ne.s32.totalorder %s90, %s91
    %p102 = scmp.eq.s32.totalorder %s14, 0
    %p103 = por %p101, %p102
    %p104 = scmp.ne.s32.totalorder %s90, %s91
    %p105 = scmp.eq.s32.totalorder %s15, 1
    %p106 = por %p104, %p105
    %p108 = scmp.ne.s32.totalorder %s91, %s107
    %p109 = scmp.eq.s32.totalorder %s15, 0
    %p110 = por %p108, %p109
    %p111 = scmp.le.s32.totalorder 1, %s9
    %p112 = scmp.lt.s32.totalorder %s9, 3
    %p113 = pnand %p111, %p112
    %p114 = pneg %p113
    // Predicated region
    $region9: #{pytorch_cnn_forward.4} parent=5 // pred_check
      _
    $region10: #{pytorch_cnn_forward.4} parent=5 // pred_check_branch
      %116 = sbr.rel (%p113) target = $region12
    $region11: #{pytorch_cnn_forward.4} parent=5 // pred_region
      %s117 = ssub.s32 %s9, 1
      // Predicated region
      $region13: #{pytorch_cnn_forward.4} parent=11 // pred_check
        %p118 = pneg %p56
      $region14: #{pytorch_cnn_forward.4} parent=11 // pred_check_branch
        %120 = sbr.rel (%p118) target = $region16
      $region15: #{pytorch_cnn_forward.4} parent=11 // pred_region
        _
      $region16: #{pytorch_cnn_forward.4} parent=11 // pred_fallthru
        _
      // Predicated region
      $region17: #{pytorch_cnn_forward.4} parent=11 // pred_check
        %p121 = pneg %p77
      $region18: #{pytorch_cnn_forward.4} parent=11 // pred_check_branch
        %123 = sbr.rel (%p121) target = $region20
      $region19: #{pytorch_cnn_forward.4} parent=11 // pred_region
        _
      $region20: #{pytorch_cnn_forward.4} parent=11 // pred_fallthru
        _
    $region12: #{pytorch_cnn_forward.4} parent=5 // pred_fallthru
      _
    %p124 = scmp.lt.s32.totalorder %s9, 2
    // Predicated region
    $region21: #{pytorch_cnn_forward.4} parent=5 // pred_check
      %p125 = pneg %p124
    $region22: #{pytorch_cnn_forward.4} parent=5 // pred_check_branch
      %127 = sbr.rel (%p125) target = $region24
    $region23: #{pytorch_cnn_forward.4} parent=5 // pred_region
      // Predicated region
      $region25: #{pytorch_cnn_forward.4} parent=23 // pred_check
        %p128 = pneg %p29
      $region26: #{pytorch_cnn_forward.4} parent=23 // pred_check_branch
        %130 = sbr.rel (%p128) target = $region28
      $region27: #{pytorch_cnn_forward.4} parent=23 // pred_region
        %p131 = scmp.lt.s32.totalorder %s9, 1
        %s132 = scalar_select %p131, %s9, 1
        %s133 = smul.addr %s132, 144
        %s134 = smul.addr %s133, 4
        %s135 = scalar_lea.vmem %s0, %s134
      $region28: #{pytorch_cnn_forward.4} parent=23 // pred_fallthru
        _
    $region24: #{pytorch_cnn_forward.4} parent=5 // pred_fallthru
      _
    %p136 = scmp.le.s32.totalorder 1, %s9
    %p137 = scmp.lt.s32.totalorder %s9, 3
    %p138 = pnand %p136, %p137
    %p139 = pneg %p138
    // Predicated region
    $region29: #{pytorch_cnn_forward.4} parent=5 // pred_check
      _
    $region30: #{pytorch_cnn_forward.4} parent=5 // pred_check_branch
      %141 = sbr.rel (%p138) target = $region32
    $region31: #{pytorch_cnn_forward.4} parent=5 // pred_region
      %s142 = ssub.s32 %s9, 1
      %p143 = scmp.lt.s32.totalorder %s14, 1
      %s144 = scalar_select %p143, %s14, 1
      %s145 = smul.addr %s144, 144
      %s146 = smul.addr %s145, 4
      %s147 = scalar_lea.vmem %s0, %s146
      %p148 = pneg %p35
      %p149 = pneg %p32
      %p150 = pneg %p56
      %p151 = pneg %p53
      %p152 = pneg %p77
      %p153 = pneg %p74
      %p154 = pneg %p103
      %p155 = pneg %p100
      %p156 = scmp.lt.s32.totalorder %s14, 1
      %s157 = scalar_select %p156, %s14, 1
      %s158 = smul.addr %s157, 4
      %s159 = smul.addr %s158, 8
      %s160 = scalar_lea.vmem %s3, %s159
      %p161 = scmp.lt.s32.totalorder %s14, 1
      %s162 = scalar_select %p161, %s14, 1
      %s163 = smul.addr %s162, 144
      %s164 = smul.addr %s163, 4
      %s165 = scalar_lea.vmem %s0, %s164
      %p166 = scmp.lt.s32.totalorder %s14, 1
      %s167 = scalar_select %p166, %s14, 1
      %s168 = smul.addr %s167, 4
      %s169 = smul.addr %s168, 8
      %s170 = scalar_lea.vmem %s3, %s169
      %v172 = vld [vmem:[%s1] sm:$0xf]
      %v173 = vld [vmem:[%s1 + $0x4] sm:$0xf]
      %v174 = vld [vmem:[%s1 + $0x8] sm:$0xf]
      %v175 = vld [vmem:[%s1 + $0xc] sm:$0xf]
      %v176 = vld [vmem:[%s1 + $0x10] sm:$0xf]
      %v177 = vld [vmem:[%s1 + $0x14] sm:$0xf]
      %v178 = vld [vmem:[%s1 + $0x18] sm:$0xf]
      %v179 = vld [vmem:[%s1 + $0x1c] sm:$0xf]
      %v180 = vld [vmem:[%s1 + $0x20] sm:$0xf]
      %v181 = vld [vmem:[%s1 + $0x24] sm:$0xf]
      %v182 = vld [vmem:[%s1 + $0x28] sm:$0xf]
      %v183 = vld [vmem:[%s1 + $0x2c] sm:$0xf]
      %v184 = vld [vmem:[%s1 + $0x30] sm:$0xf]
      %v185 = vld [vmem:[%s1 + $0x34] sm:$0xf]
      %v186 = vld [vmem:[%s1 + $0x38] sm:$0xf]
      %v187 = vld [vmem:[%s1 + $0x3c] sm:$0xf]
      %v188 = vld [vmem:[%s1 + $0x40] sm:$0xf]
      %v189 = vld [vmem:[%s1 + $0x44] sm:$0xf]
      %v190 = vld [vmem:[%s1 + $0x48] sm:$0xf]
      %v191 = vld [vmem:[%s1 + $0x4c] sm:$0xf]
      %v192 = vld [vmem:[%s1 + $0x50] sm:$0xf]
      %v193 = vld [vmem:[%s1 + $0x54] sm:$0xf]
      %v194 = vld [vmem:[%s1 + $0x58] sm:$0xf]
      %v195 = vld [vmem:[%s1 + $0x5c] sm:$0xf]
      %v196 = vld [vmem:[%s1 + $0x60] sm:$0xf]
      %v197 = vld [vmem:[%s1 + $0x64] sm:$0xf]
      %v198 = vld [vmem:[%s1 + $0x68] sm:$0xf]
      %v199 = vld [vmem:[%s1 + $0x6c] sm:$0xf]
      %v200 = vld [vmem:[%s1 + $0x70] sm:$0xf]
      %v201 = vld [vmem:[%s1 + $0x74] sm:$0xf]
      %v202 = vld [vmem:[%s1 + $0x78] sm:$0xf]
      %v203 = vld [vmem:[%s1 + $0x7c] sm:$0xf]
      %v204 = vld [vmem:[%s1 + $0x80] sm:$0xf]
      %v205 = vld [vmem:[%s1 + $0x84] sm:$0xf]
      %v206 = vld [vmem:[%s1 + $0x88] sm:$0xf]
      %v207 = vld [vmem:[%s1 + $0x8c] sm:$0xf]
      %v208 = vld [vmem:[%s1 + $0x90] sm:$0xf]
      %v209 = vld [vmem:[%s1 + $0x94] sm:$0xf]
      %v210 = vld [vmem:[%s1 + $0x98] sm:$0xf]
      %v211 = vld [vmem:[%s1 + $0x9c] sm:$0xf]
      %v212 = vld [vmem:[%s1 + $0xa0] sm:$0xf]
      %v213 = vld [vmem:[%s1 + $0xa4] sm:$0xf]
      %v214 = vld [vmem:[%s1 + $0xa8] sm:$0xf]
      %v215 = vld [vmem:[%s1 + $0xac] sm:$0xf]
      %v216 = vld [vmem:[%s1 + $0xb0] sm:$0xf]
      %v217 = vld [vmem:[%s1 + $0xb4] sm:$0xf]
      %v218 = vld [vmem:[%s1 + $0xb8] sm:$0xf]
      %v219 = vld [vmem:[%s1 + $0xbc] sm:$0xf]
      %v220 = vld [vmem:[%s1 + $0xc0] sm:$0xf]
      %v221 = vld [vmem:[%s1 + $0xc4] sm:$0xf]
      %v222 = vld [vmem:[%s1 + $0xc8] sm:$0xf]
      %v223 = vld [vmem:[%s1 + $0xcc] sm:$0xf]
      %v224 = vld [vmem:[%s1 + $0xd0] sm:$0xf]
      %v225 = vld [vmem:[%s1 + $0xd4] sm:$0xf]
      %v226 = vld [vmem:[%s1 + $0xd8] sm:$0xf]
      %v227 = vld [vmem:[%s1 + $0xdc] sm:$0xf]
      %v228 = vld [vmem:[%s1 + $0xe0] sm:$0xf]
      %v229 = vld [vmem:[%s1 + $0xe4] sm:$0xf]
      %v230 = vld [vmem:[%s1 + $0xe8] sm:$0xf]
      %v231 = vld [vmem:[%s1 + $0xec] sm:$0xf]
      %v232 = vld [vmem:[%s1 + $0xf0] sm:$0xf]
      %v233 = vld [vmem:[%s1 + $0xf4] sm:$0xf]
      %v234 = vld [vmem:[%s1 + $0xf8] sm:$0xf]
      %v235 = vld [vmem:[%s1 + $0xfc] sm:$0xf]
      %v236 = vld [vmem:[%s1 + $0x100] sm:$0xf]
      %v237 = vld [vmem:[%s1 + $0x104] sm:$0xf]
      %v238 = vld [vmem:[%s1 + $0x108] sm:$0xf]
      %v239 = vld [vmem:[%s1 + $0x10c] sm:$0xf]
      %v240 = vld [vmem:[%s1 + $0x110] sm:$0xf]
      %v241 = vld [vmem:[%s1 + $0x114] sm:$0xf]
      %v242 = vld [vmem:[%s1 + $0x118] sm:$0xf]
      %v243 = vld [vmem:[%s1 + $0x11c] sm:$0xf]
      %v244 = vld [vmem:[%s1 + $0x120] sm:$0xf]
      %v245 = vld [vmem:[%s1 + $0x124] sm:$0xf]
      %v246 = vld [vmem:[%s1 + $0x128] sm:$0xf]
      %v247 = vld [vmem:[%s1 + $0x12c] sm:$0xf]
      %v248 = vld [vmem:[%s1 + $0x130] sm:$0xf]
      %v249 = vld [vmem:[%s1 + $0x134] sm:$0xf]
      %v250 = vld [vmem:[%s1 + $0x138] sm:$0xf]
      %v251 = vld [vmem:[%s1 + $0x13c] sm:$0xf]
      %v252 = vld [vmem:[%s1 + $0x140] sm:$0xf]
      %v253 = vld [vmem:[%s1 + $0x144] sm:$0xf]
      %v254 = vld [vmem:[%s1 + $0x148] sm:$0xf]
      %v255 = vld [vmem:[%s1 + $0x14c] sm:$0xf]
      %v256 = vld [vmem:[%s1 + $0x150] sm:$0xf]
      %v257 = vld [vmem:[%s1 + $0x154] sm:$0xf]
      %v258 = vld [vmem:[%s1 + $0x158] sm:$0xf]
      %v259 = vld [vmem:[%s1 + $0x15c] sm:$0xf]
      %v260 = vld [vmem:[%s1 + $0x160] sm:$0xf]
      %v261 = vld [vmem:[%s1 + $0x164] sm:$0xf]
      %v262 = vld [vmem:[%s1 + $0x168] sm:$0xf]
      %v263 = vld [vmem:[%s1 + $0x16c] sm:$0xf]
      %v264 = vld [vmem:[%s1 + $0x170] sm:$0xf]
      %v265 = vld [vmem:[%s1 + $0x174] sm:$0xf]
      %v266 = vld [vmem:[%s1 + $0x178] sm:$0xf]
      %v267 = vld [vmem:[%s1 + $0x17c] sm:$0xf]
      %v268 = vld [vmem:[%s1 + $0x180] sm:$0xf]
      %v269 = vld [vmem:[%s1 + $0x184] sm:$0xf]
      %v270 = vld [vmem:[%s1 + $0x188] sm:$0xf]
      %v271 = vld [vmem:[%s1 + $0x18c] sm:$0xf]
      %v272 = vld [vmem:[%s1 + $0x190] sm:$0xf]
      %v273 = vld [vmem:[%s1 + $0x194] sm:$0xf]
      %v274 = vld [vmem:[%s1 + $0x198] sm:$0xf]
      %v275 = vld [vmem:[%s1 + $0x19c] sm:$0xf]
      %v276 = vld [vmem:[%s1 + $0x1a0] sm:$0xf]
      %v277 = vld [vmem:[%s1 + $0x1a4] sm:$0xf]
      %v278 = vld [vmem:[%s1 + $0x1a8] sm:$0xf]
      %v279 = vld [vmem:[%s1 + $0x1ac] sm:$0xf]
      %v280 = vld [vmem:[%s1 + $0x1b0] sm:$0xf]
      %v281 = vld [vmem:[%s1 + $0x1b4] sm:$0xf]
      %v282 = vld [vmem:[%s1 + $0x1b8] sm:$0xf]
      %v283 = vld [vmem:[%s1 + $0x1bc] sm:$0xf]
      %v284 = vld [vmem:[%s1 + $0x1c0] sm:$0xf]
      %v285 = vld [vmem:[%s1 + $0x1c4] sm:$0xf]
      %v286 = vld [vmem:[%s1 + $0x1c8] sm:$0xf]
      %v287 = vld [vmem:[%s1 + $0x1cc] sm:$0xf]
      %v288 = vld [vmem:[%s1 + $0x1d0] sm:$0xf]
      %v289 = vld [vmem:[%s1 + $0x1d4] sm:$0xf]
      %v290 = vld [vmem:[%s1 + $0x1d8] sm:$0xf]
      %v291 = vld [vmem:[%s1 + $0x1dc] sm:$0xf]
      %v292 = vld [vmem:[%s1 + $0x1e0] sm:$0xf]
      %v293 = vld [vmem:[%s1 + $0x1e4] sm:$0xf]
      %v294 = vld [vmem:[%s1 + $0x1e8] sm:$0xf]
      %v295 = vld [vmem:[%s1 + $0x1ec] sm:$0xf]
      %v296 = vld [vmem:[%s1 + $0x1f0] sm:$0xf]
      %v297 = vld [vmem:[%s1 + $0x1f4] sm:$0xf]
      %v298 = vld [vmem:[%s1 + $0x1f8] sm:$0xf]
      %v299 = vld [vmem:[%s1 + $0x1fc] sm:$0xf]
      %v300 = vld [vmem:[%s1 + $0x200] sm:$0xf]
      %v301 = vld [vmem:[%s1 + $0x204] sm:$0xf]
      %v302 = vld [vmem:[%s1 + $0x208] sm:$0xf]
      %v303 = vld [vmem:[%s1 + $0x20c] sm:$0xf]
      %v304 = vld [vmem:[%s1 + $0x210] sm:$0xf]
      %v305 = vld [vmem:[%s1 + $0x214] sm:$0xf]
      %v306 = vld [vmem:[%s1 + $0x218] sm:$0xf]
      %v307 = vld [vmem:[%s1 + $0x21c] sm:$0xf]
      %v308 = vld [vmem:[%s1 + $0x220] sm:$0xf]
      %v309 = vld [vmem:[%s1 + $0x224] sm:$0xf]
      %v310 = vld [vmem:[%s1 + $0x228] sm:$0xf]
      %v311 = vld [vmem:[%s1 + $0x22c] sm:$0xf]
      %v312 = vld [vmem:[%s1 + $0x230] sm:$0xf]
      %v313 = vld [vmem:[%s1 + $0x234] sm:$0xf]
      %v314 = vld [vmem:[%s1 + $0x238] sm:$0xf]
      %v315 = vld [vmem:[%s1 + $0x23c] sm:$0xf]
      %v316 = vld [vmem:[%s165] sm:$0xff]
      %v317 = vld [vmem:[%s165 + $0x8] sm:$0xff]
      %v318 = vld [vmem:[%s165 + $0x10] sm:$0xff]
      %v319 = vld [vmem:[%s165 + $0x18] sm:$0xff]
      %v320 = vld [vmem:[%s165 + $0x20] sm:$0xf]
      %v321 = vld [vmem:[%s165 + $0x24] sm:$0xff]
      %v322 = vld [vmem:[%s165 + $0x2c] sm:$0xff]
      %v323 = vld [vmem:[%s165 + $0x34] sm:$0xff]
      %v324 = vld [vmem:[%s165 + $0x3c] sm:$0xff]
      %v325 = vld [vmem:[%s165 + $0x44] sm:$0xf]
      %v326 = vld [vmem:[%s165 + $0x48] sm:$0xff]
      %v327 = vld [vmem:[%s165 + $0x50] sm:$0xff]
      %v328 = vld [vmem:[%s165 + $0x58] sm:$0xff]
      %v329 = vld [vmem:[%s165 + $0x60] sm:$0xff]
      %v330 = vld [vmem:[%s165 + $0x68] sm:$0xf]
      %v331 = vld [vmem:[%s165 + $0x6c] sm:$0x11]
      %v332 = vld [vmem:[%s165 + $0x74] sm:$0x11]
      %v333 = vld [vmem:[%s165 + $0x7c] sm:$0x11]
      %v334 = vld [vmem:[%s165 + $0x84] sm:$0x11]
      %v335 = vld [vmem:[%s165 + $0x8c] sm:$0x1]
      %v356 = vunpack.c.l.b16 %v316
      %v357 = vunpack.c.h.b16 %v316
      %v358 = vunpack.c.l.b16 %v317
      %v359 = vunpack.c.h.b16 %v317
      %v360 = vunpack.c.l.b16 %v318
      %v361 = vunpack.c.h.b16 %v318
      %v362 = vunpack.c.l.b16 %v319
      %v363 = vunpack.c.h.b16 %v319
      %v364 = vunpack.c.l.b16 %v320
      %v365 = vunpack.c.l.b16 %v321
      %v366 = vunpack.c.h.b16 %v321
      %v367 = vunpack.c.l.b16 %v322
      %v368 = vunpack.c.h.b16 %v322
      %v369 = vunpack.c.l.b16 %v323
      %v370 = vunpack.c.h.b16 %v323
      %v371 = vunpack.c.l.b16 %v324
      %v372 = vunpack.c.h.b16 %v324
      %v373 = vunpack.c.l.b16 %v325
      %v374 = vunpack.c.l.b16 %v326
      %v375 = vunpack.c.h.b16 %v326
      %v376 = vunpack.c.l.b16 %v327
      %v377 = vunpack.c.h.b16 %v327
      %v378 = vunpack.c.l.b16 %v328
      %v379 = vunpack.c.h.b16 %v328
      %v380 = vunpack.c.l.b16 %v329
      %v381 = vunpack.c.h.b16 %v329
      %v382 = vunpack.c.l.b16 %v330
      %v383 = vunpack.c.l.b16 %v331
      %v384 = vunpack.c.h.b16 %v331
      %v385 = vunpack.c.l.b16 %v332
      %v386 = vunpack.c.h.b16 %v332
      %v387 = vunpack.c.l.b16 %v333
      %v388 = vunpack.c.h.b16 %v333
      %v389 = vunpack.c.l.b16 %v334
      %v390 = vunpack.c.h.b16 %v334
      %v391 = vunpack.c.l.b16 %v335
      %v392 = vpack.c.b16 %v365, %v356
      %v393 = vpack.c.b16 %v366, %v357
      %v394 = vpack.c.b16 %v367, %v358
      %v395 = vpack.c.b16 %v368, %v359
      %v396 = vpack.c.b16 %v369, %v360
      %v397 = vpack.c.b16 %v370, %v361
      %v398 = vpack.c.b16 %v371, %v362
      %v399 = vpack.c.b16 %v372, %v363
      %v400 = vpack.c.b16 %v373, %v364
      %v401 = vpack.c.b16 %v383, %v374
      %v402 = vpack.c.b16 %v384, %v375
      %v403 = vpack.c.b16 %v385, %v376
      %v404 = vpack.c.b16 %v386, %v377
      %v405 = vpack.c.b16 %v387, %v378
      %v406 = vpack.c.b16 %v388, %v379
      %v407 = vpack.c.b16 %v389, %v380
      %v408 = vpack.c.b16 %v390, %v381
      %v409 = vpack.c.b16 %v391, %v382
      %v572 = vunpack.c.l.b16 %v172
      %v573 = vunpack.c.l.b16 %v173
      %v574 = vunpack.c.l.b16 %v174
      %v575 = vunpack.c.l.b16 %v175
      %v576 = vunpack.c.l.b16 %v176
      %v577 = vunpack.c.l.b16 %v177
      %v578 = vunpack.c.l.b16 %v178
      %v579 = vunpack.c.l.b16 %v179
      %v580 = vunpack.c.l.b16 %v180
      %v581 = vunpack.c.l.b16 %v181
      %v582 = vunpack.c.l.b16 %v182
      %v583 = vunpack.c.l.b16 %v183
      %v584 = vunpack.c.l.b16 %v184
      %v585 = vunpack.c.l.b16 %v185
      %v586 = vunpack.c.l.b16 %v186
      %v587 = vunpack.c.l.b16 %v187
      %v588 = vunpack.c.l.b16 %v188
      %v589 = vunpack.c.l.b16 %v189
      %v590 = vunpack.c.l.b16 %v190
      %v591 = vunpack.c.l.b16 %v191
      %v592 = vunpack.c.l.b16 %v192
      %v593 = vunpack.c.l.b16 %v193
      %v594 = vunpack.c.l.b16 %v194
      %v595 = vunpack.c.l.b16 %v195
      %v596 = vunpack.c.l.b16 %v196
      %v597 = vunpack.c.l.b16 %v197
      %v598 = vunpack.c.l.b16 %v198
      %v599 = vunpack.c.l.b16 %v199
      %v600 = vunpack.c.l.b16 %v200
      %v601 = vunpack.c.l.b16 %v201
      %v602 = vunpack.c.l.b16 %v202
      %v603 = vunpack.c.l.b16 %v203
      %v604 = vunpack.c.l.b16 %v204
      %v605 = vunpack.c.l.b16 %v205
      %v606 = vunpack.c.l.b16 %v206
      %v607 = vunpack.c.l.b16 %v207
      %v608 = vunpack.c.l.b16 %v208
      %v609 = vunpack.c.l.b16 %v209
      %v610 = vunpack.c.l.b16 %v210
      %v611 = vunpack.c.l.b16 %v211
      %v612 = vunpack.c.l.b16 %v212
      %v613 = vunpack.c.l.b16 %v213
      %v614 = vunpack.c.l.b16 %v214
      %v615 = vunpack.c.l.b16 %v215
      %v616 = vunpack.c.l.b16 %v216
      %v617 = vunpack.c.l.b16 %v217
      %v618 = vunpack.c.l.b16 %v218
      %v619 = vunpack.c.l.b16 %v219
      %v620 = vunpack.c.l.b16 %v220
      %v621 = vunpack.c.l.b16 %v221
      %v622 = vunpack.c.l.b16 %v222
      %v623 = vunpack.c.l.b16 %v223
      %v624 = vunpack.c.l.b16 %v224
      %v625 = vunpack.c.l.b16 %v225
      %v626 = vunpack.c.l.b16 %v226
      %v627 = vunpack.c.l.b16 %v227
      %v628 = vunpack.c.l.b16 %v228
      %v629 = vunpack.c.l.b16 %v229
      %v630 = vunpack.c.l.b16 %v230
      %v631 = vunpack.c.l.b16 %v231
      %v632 = vunpack.c.l.b16 %v232
      %v633 = vunpack.c.l.b16 %v233
      %v634 = vunpack.c.l.b16 %v234
      %v635 = vunpack.c.l.b16 %v235
      %v636 = vunpack.c.l.b16 %v236
      %v637 = vunpack.c.l.b16 %v237
      %v638 = vunpack.c.l.b16 %v238
      %v639 = vunpack.c.l.b16 %v239
      %v640 = vunpack.c.l.b16 %v240
      %v641 = vunpack.c.l.b16 %v241
      %v642 = vunpack.c.l.b16 %v242
      %v643 = vunpack.c.l.b16 %v243
      %v644 = vunpack.c.l.b16 %v244
      %v645 = vunpack.c.l.b16 %v245
      %v646 = vunpack.c.l.b16 %v246
      %v647 = vunpack.c.l.b16 %v247
      %v648 = vunpack.c.l.b16 %v248
      %v649 = vunpack.c.l.b16 %v249
      %v650 = vunpack.c.l.b16 %v250
      %v651 = vunpack.c.l.b16 %v251
      %v652 = vunpack.c.l.b16 %v252
      %v653 = vunpack.c.l.b16 %v253
      %v654 = vunpack.c.l.b16 %v254
      %v655 = vunpack.c.l.b16 %v255
      %v656 = vunpack.c.l.b16 %v256
      %v657 = vunpack.c.l.b16 %v257
      %v658 = vunpack.c.l.b16 %v258
      %v659 = vunpack.c.l.b16 %v259
      %v660 = vunpack.c.l.b16 %v260
      %v661 = vunpack.c.l.b16 %v261
      %v662 = vunpack.c.l.b16 %v262
      %v663 = vunpack.c.l.b16 %v263
      %v664 = vunpack.c.l.b16 %v264
      %v665 = vunpack.c.l.b16 %v265
      %v666 = vunpack.c.l.b16 %v266
      %v667 = vunpack.c.l.b16 %v267
      %v668 = vunpack.c.l.b16 %v268
      %v669 = vunpack.c.l.b16 %v269
      %v670 = vunpack.c.l.b16 %v270
      %v671 = vunpack.c.l.b16 %v271
      %v672 = vunpack.c.l.b16 %v272
      %v673 = vunpack.c.l.b16 %v273
      %v674 = vunpack.c.l.b16 %v274
      %v675 = vunpack.c.l.b16 %v275
      %v676 = vunpack.c.l.b16 %v276
      %v677 = vunpack.c.l.b16 %v277
      %v678 = vunpack.c.l.b16 %v278
      %v679 = vunpack.c.l.b16 %v279
      %v680 = vunpack.c.l.b16 %v280
      %v681 = vunpack.c.l.b16 %v281
      %v682 = vunpack.c.l.b16 %v282
      %v683 = vunpack.c.l.b16 %v283
      %v684 = vunpack.c.l.b16 %v284
      %v685 = vunpack.c.l.b16 %v285
      %v686 = vunpack.c.l.b16 %v286
      %v687 = vunpack.c.l.b16 %v287
      %v688 = vunpack.c.l.b16 %v288
      %v689 = vunpack.c.l.b16 %v289
      %v690 = vunpack.c.l.b16 %v290
      %v691 = vunpack.c.l.b16 %v291
      %v692 = vunpack.c.l.b16 %v292
      %v693 = vunpack.c.l.b16 %v293
      %v694 = vunpack.c.l.b16 %v294
      %v695 = vunpack.c.l.b16 %v295
      %v696 = vunpack.c.l.b16 %v296
      %v697 = vunpack.c.l.b16 %v297
      %v698 = vunpack.c.l.b16 %v298
      %v699 = vunpack.c.l.b16 %v299
      %v700 = vunpack.c.l.b16 %v300
      %v701 = vunpack.c.l.b16 %v301
      %v702 = vunpack.c.l.b16 %v302
      %v703 = vunpack.c.l.b16 %v303
      %v704 = vunpack.c.l.b16 %v304
      %v705 = vunpack.c.l.b16 %v305
      %v706 = vunpack.c.l.b16 %v306
      %v707 = vunpack.c.l.b16 %v307
      %v708 = vunpack.c.l.b16 %v308
      %v709 = vunpack.c.l.b16 %v309
      %v710 = vunpack.c.l.b16 %v310
      %v711 = vunpack.c.l.b16 %v311
      %v712 = vunpack.c.l.b16 %v312
      %v713 = vunpack.c.l.b16 %v313
      %v714 = vunpack.c.l.b16 %v314
      %v715 = vunpack.c.l.b16 %v315
      %v716 = vpack.c.b16 %v573, %v572
      %v717 = vpack.c.b16 %v575, %v574
      %v718 = vpack.c.b16 %v577, %v576
      %v719 = vpack.c.b16 %v579, %v578
      %v720 = vpack.c.b16 %v581, %v580
      %v721 = vpack.c.b16 %v583, %v582
      %v722 = vpack.c.b16 %v585, %v584
      %v723 = vpack.c.b16 %v587, %v586
      %v724 = vpack.c.b16 %v589, %v588
      %v725 = vpack.c.b16 %v591, %v590
      %v726 = vpack.c.b16 %v593, %v592
      %v727 = vpack.c.b16 %v595, %v594
      %v728 = vpack.c.b16 %v597, %v596
      %v729 = vpack.c.b16 %v599, %v598
      %v730 = vpack.c.b16 %v601, %v600
      %v731 = vpack.c.b16 %v603, %v602
      %v732 = vpack.c.b16 %v605, %v604
      %v733 = vpack.c.b16 %v607, %v606
      %v734 = vpack.c.b16 %v609, %v608
      %v735 = vpack.c.b16 %v611, %v610
      %v736 = vpack.c.b16 %v613, %v612
      %v737 = vpack.c.b16 %v615, %v614
      %v738 = vpack.c.b16 %v617, %v616
      %v739 = vpack.c.b16 %v619, %v618
      %v740 = vpack.c.b16 %v621, %v620
      %v741 = vpack.c.b16 %v623, %v622
      %v742 = vpack.c.b16 %v625, %v624
      %v743 = vpack.c.b16 %v627, %v626
      %v744 = vpack.c.b16 %v629, %v628
      %v745 = vpack.c.b16 %v631, %v630
      %v746 = vpack.c.b16 %v633, %v632
      %v747 = vpack.c.b16 %v635, %v634
      %v748 = vpack.c.b16 %v637, %v636
      %v749 = vpack.c.b16 %v639, %v638
      %v750 = vpack.c.b16 %v641, %v640
      %v751 = vpack.c.b16 %v643, %v642
      %v752 = vpack.c.b16 %v645, %v644
      %v753 = vpack.c.b16 %v647, %v646
      %v754 = vpack.c.b16 %v649, %v648
      %v755 = vpack.c.b16 %v651, %v650
      %v756 = vpack.c.b16 %v653, %v652
      %v757 = vpack.c.b16 %v655, %v654
      %v758 = vpack.c.b16 %v657, %v656
      %v759 = vpack.c.b16 %v659, %v658
      %v760 = vpack.c.b16 %v661, %v660
      %v761 = vpack.c.b16 %v663, %v662
      %v762 = vpack.c.b16 %v665, %v664
      %v763 = vpack.c.b16 %v667, %v666
      %v764 = vpack.c.b16 %v669, %v668
      %v765 = vpack.c.b16 %v671, %v670
      %v766 = vpack.c.b16 %v673, %v672
      %v767 = vpack.c.b16 %v675, %v674
      %v768 = vpack.c.b16 %v677, %v676
      %v769 = vpack.c.b16 %v679, %v678
      %v770 = vpack.c.b16 %v681, %v680
      %v771 = vpack.c.b16 %v683, %v682
      %v772 = vpack.c.b16 %v685, %v684
      %v773 = vpack.c.b16 %v687, %v686
      %v774 = vpack.c.b16 %v689, %v688
      %v775 = vpack.c.b16 %v691, %v690
      %v776 = vpack.c.b16 %v693, %v692
      %v777 = vpack.c.b16 %v695, %v694
      %v778 = vpack.c.b16 %v697, %v696
      %v779 = vpack.c.b16 %v699, %v698
      %v780 = vpack.c.b16 %v701, %v700
      %v781 = vpack.c.b16 %v703, %v702
      %v782 = vpack.c.b16 %v705, %v704
      %v783 = vpack.c.b16 %v707, %v706
      %v784 = vpack.c.b16 %v709, %v708
      %v785 = vpack.c.b16 %v711, %v710
      %v786 = vpack.c.b16 %v713, %v712
      %v787 = vpack.c.b16 %v715, %v714
      %860 = vmatprep.subr.bf16.mxu0 0
      %861 = vmatpush1.bf16.msra.mxu0 %v723
      %862 = vmatprep.subr.bf16.mxu0 0
      %863 = vmatpush1.bf16.msra.mxu0 %v722
      %864 = vmatprep.subr.bf16.mxu0 0
      %865 = vmatpush1.bf16.msra.mxu0 %v721
      %866 = vmatprep.subr.bf16.mxu0 0
      %867 = vmatpush1.bf16.msra.mxu0 %v720
      %868 = vmatprep.subr.bf16.mxu0 0
      %869 = vmatpush1.bf16.msra.mxu0 %v719
      %870 = vmatprep.subr.bf16.mxu0 0
      %871 = vmatpush1.bf16.msra.mxu0 %v718
      %872 = vmatprep.subr.bf16.mxu0 0
      %873 = vmatpush1.bf16.msra.mxu0 %v717
      %874 = vmatprep.subr.bf16.mxu0 0
      %875 = vmatpush1.bf16.msra.mxu0 %v716
      %876 = vmatprep.subr.bf16.mxu0 0
      %877 = vmatpush2.bf16.msra.mxu0 %v731
      %878 = vmatprep.subr.bf16.mxu0 0
      %879 = vmatpush2.bf16.msra.mxu0 %v730
      %880 = vmatprep.subr.bf16.mxu0 0
      %881 = vmatpush2.bf16.msra.mxu0 %v729
      %882 = vmatprep.subr.bf16.mxu0 0
      %883 = vmatpush2.bf16.msra.mxu0 %v728
      %884 = vmatprep.subr.bf16.mxu0 0
      %885 = vmatpush2.bf16.msra.mxu0 %v727
      %886 = vmatprep.subr.bf16.mxu0 0
      %887 = vmatpush2.bf16.msra.mxu0 %v726
      %888 = vmatprep.subr.bf16.mxu0 0
      %889 = vmatpush2.bf16.msra.mxu0 %v725
      %890 = vmatprep.subr.bf16.mxu0 0
      %891 = vmatpush2.bf16.msra.mxu0 %v724
      %892 = vmatprep.mubr.bf16.mxu0 %v393
      %893 = vmatmul.mubr.bf16.gmra.mxu0 %v392
      %v894 = vpop.f32.mrf.mxu0
      %v895 = vadd.f32 0.0, %v894
      %v896 = vpop.f32.mrf.mxu0
      %v897 = vpop.f32.mrf.mxu0
      %v898 = vadd.f32 0.0, %v897
      %v899 = vpop.f32.mrf.mxu0
      %900 = vmatprep.mubr.bf16.mxu0 %v402
      %901 = vmatmul.mubr.bf16.gmra.mxu0 %v401
      %v902 = vpop.f32.mrf.mxu0
      %v903 = vadd.f32 0.0, %v902
      %v904 = vpop.f32.mrf.mxu0
      %v905 = vpop.f32.mrf.mxu0
      %v906 = vadd.f32 0.0, %v905
      %v907 = vpop.f32.mrf.mxu0
      %908 = vdwg.mxu0
      %909 = vmatprep.subr.bf16.mxu0 0
      %910 = vmatpush1.bf16.msra.mxu0 %v739
      %911 = vmatprep.subr.bf16.mxu0 0
      %912 = vmatpush1.bf16.msra.mxu0 %v738
      %913 = vmatprep.subr.bf16.mxu0 0
      %914 = vmatpush1.bf16.msra.mxu0 %v737
      %915 = vmatprep.subr.bf16.mxu0 0
      %916 = vmatpush1.bf16.msra.mxu0 %v736
      %917 = vmatprep.subr.bf16.mxu0 0
      %918 = vmatpush1.bf16.msra.mxu0 %v735
      %919 = vmatprep.subr.bf16.mxu0 0
      %920 = vmatpush1.bf16.msra.mxu0 %v734
      %921 = vmatprep.subr.bf16.mxu0 0
      %922 = vmatpush1.bf16.msra.mxu0 %v733
      %923 = vmatprep.subr.bf16.mxu0 0
      %924 = vmatpush1.bf16.msra.mxu0 %v732
      %925 = vmatprep.subr.bf16.mxu0 0
      %926 = vmatpush2.bf16.msra.mxu0 %v747
      %927 = vmatprep.subr.bf16.mxu0 0
      %928 = vmatpush2.bf16.msra.mxu0 %v746
      %929 = vmatprep.subr.bf16.mxu0 0
      %930 = vmatpush2.bf16.msra.mxu0 %v745
      %931 = vmatprep.subr.bf16.mxu0 0
      %932 = vmatpush2.bf16.msra.mxu0 %v744
      %933 = vmatprep.subr.bf16.mxu0 0
      %934 = vmatpush2.bf16.msra.mxu0 %v743
      %935 = vmatprep.subr.bf16.mxu0 0
      %936 = vmatpush2.bf16.msra.mxu0 %v742
      %937 = vmatprep.subr.bf16.mxu0 0
      %938 = vmatpush2.bf16.msra.mxu0 %v741
      %939 = vmatprep.subr.bf16.mxu0 0
      %940 = vmatpush2.bf16.msra.mxu0 %v740
      %941 = vmatprep.mubr.bf16.mxu0 %v395
      %942 = vmatmul.mubr.bf16.gmra.mxu0 %v394
      %v943 = vpop.f32.mrf.mxu0
      %v944 = vadd.f32 %v895, %v943
      %v945 = vpop.f32.mrf.mxu0
      %v946 = vpop.f32.mrf.mxu0
      %v947 = vadd.f32 %v898, %v946
      %v948 = vpop.f32.mrf.mxu0
      %949 = vmatprep.mubr.bf16.mxu0 %v404
      %950 = vmatmul.mubr.bf16.gmra.mxu0 %v403
      %v951 = vpop.f32.mrf.mxu0
      %v952 = vadd.f32 %v903, %v951
      %v953 = vpop.f32.mrf.mxu0
      %v954 = vpop.f32.mrf.mxu0
      %v955 = vadd.f32 %v906, %v954
      %v956 = vpop.f32.mrf.mxu0
      %957 = vdwg.mxu0
      %958 = vmatprep.subr.bf16.mxu0 0
      %959 = vmatpush1.bf16.msra.mxu0 %v755
      %960 = vmatprep.subr.bf16.mxu0 0
      %961 = vmatpush1.bf16.msra.mxu0 %v754
      %962 = vmatprep.subr.bf16.mxu0 0
      %963 = vmatpush1.bf16.msra.mxu0 %v753
      %964 = vmatprep.subr.bf16.mxu0 0
      %965 = vmatpush1.bf16.msra.mxu0 %v752
      %966 = vmatprep.subr.bf16.mxu0 0
      %967 = vmatpush1.bf16.msra.mxu0 %v751
      %968 = vmatprep.subr.bf16.mxu0 0
      %969 = vmatpush1.bf16.msra.mxu0 %v750
      %970 = vmatprep.subr.bf16.mxu0 0
      %971 = vmatpush1.bf16.msra.mxu0 %v749
      %972 = vmatprep.subr.bf16.mxu0 0
      %973 = vmatpush1.bf16.msra.mxu0 %v748
      %974 = vmatprep.subr.bf16.mxu0 0
      %975 = vmatpush2.bf16.msra.mxu0 %v763
      %976 = vmatprep.subr.bf16.mxu0 0
      %977 = vmatpush2.bf16.msra.mxu0 %v762
      %978 = vmatprep.subr.bf16.mxu0 0
      %979 = vmatpush2.bf16.msra.mxu0 %v761
      %980 = vmatprep.subr.bf16.mxu0 0
      %981 = vmatpush2.bf16.msra.mxu0 %v760
      %982 = vmatprep.subr.bf16.mxu0 0
      %983 = vmatpush2.bf16.msra.mxu0 %v759
      %984 = vmatprep.subr.bf16.mxu0 0
      %985 = vmatpush2.bf16.msra.mxu0 %v758
      %986 = vmatprep.subr.bf16.mxu0 0
      %987 = vmatpush2.bf16.msra.mxu0 %v757
      %988 = vmatprep.subr.bf16.mxu0 0
      %989 = vmatpush2.bf16.msra.mxu0 %v756
      %990 = vmatprep.mubr.bf16.mxu0 %v397
      %991 = vmatmul.mubr.bf16.gmra.mxu0 %v396
      %v992 = vpop.f32.mrf.mxu0
      %v993 = vadd.f32 %v944, %v992
      %v994 = vpop.f32.mrf.mxu0
      %v995 = vpop.f32.mrf.mxu0
      %v996 = vadd.f32 %v947, %v995
      %v997 = vpop.f32.mrf.mxu0
      %998 = vmatprep.mubr.bf16.mxu0 %v406
      %999 = vmatmul.mubr.bf16.gmra.mxu0 %v405
      %v1000 = vpop.f32.mrf.mxu0
      %v1001 = vadd.f32 %v952, %v1000
      %v1002 = vpop.f32.mrf.mxu0
      %v1003 = vpop.f32.mrf.mxu0
      %v1004 = vadd.f32 %v955, %v1003
      %v1005 = vpop.f32.mrf.mxu0
      %1006 = vdwg.mxu0
      %1007 = vmatprep.subr.bf16.mxu0 0
      %1008 = vmatpush1.bf16.msra.mxu0 %v771
      %1009 = vmatprep.subr.bf16.mxu0 0
      %1010 = vmatpush1.bf16.msra.mxu0 %v770
      %1011 = vmatprep.subr.bf16.mxu0 0
      %1012 = vmatpush1.bf16.msra.mxu0 %v769
      %1013 = vmatprep.subr.bf16.mxu0 0
      %1014 = vmatpush1.bf16.msra.mxu0 %v768
      %1015 = vmatprep.subr.bf16.mxu0 0
      %1016 = vmatpush1.bf16.msra.mxu0 %v767
      %1017 = vmatprep.subr.bf16.mxu0 0
      %1018 = vmatpush1.bf16.msra.mxu0 %v766
      %1019 = vmatprep.subr.bf16.mxu0 0
      %1020 = vmatpush1.bf16.msra.mxu0 %v765
      %1021 = vmatprep.subr.bf16.mxu0 0
      %1022 = vmatpush1.bf16.msra.mxu0 %v764
      %1023 = vmatprep.subr.bf16.mxu0 0
      %1024 = vmatpush2.bf16.msra.mxu0 %v779
      %1025 = vmatprep.subr.bf16.mxu0 0
      %1026 = vmatpush2.bf16.msra.mxu0 %v778
      %1027 = vmatprep.subr.bf16.mxu0 0
      %1028 = vmatpush2.bf16.msra.mxu0 %v777
      %1029 = vmatprep.subr.bf16.mxu0 0
      %1030 = vmatpush2.bf16.msra.mxu0 %v776
      %1031 = vmatprep.subr.bf16.mxu0 0
      %1032 = vmatpush2.bf16.msra.mxu0 %v775
      %1033 = vmatprep.subr.bf16.mxu0 0
      %1034 = vmatpush2.bf16.msra.mxu0 %v774
      %1035 = vmatprep.subr.bf16.mxu0 0
      %1036 = vmatpush2.bf16.msra.mxu0 %v773
      %1037 = vmatprep.subr.bf16.mxu0 0
      %1038 = vmatpush2.bf16.msra.mxu0 %v772
      %1039 = vmatprep.mubr.bf16.mxu0 %v399
      %1040 = vmatmul.mubr.bf16.gmra.mxu0 %v398
      %v1041 = vpop.f32.mrf.mxu0
      %v1042 = vadd.f32 %v993, %v1041
      %v1043 = vpop.f32.mrf.mxu0
      %v1044 = vpop.f32.mrf.mxu0
      %v1045 = vadd.f32 %v996, %v1044
      %v1046 = vpop.f32.mrf.mxu0
      %1047 = vmatprep.mubr.bf16.mxu0 %v408
      %1048 = vmatmul.mubr.bf16.gmra.mxu0 %v407
      %v1049 = vpop.f32.mrf.mxu0
      %v1050 = vadd.f32 %v1001, %v1049
      %v1051 = vpop.f32.mrf.mxu0
      %v1052 = vpop.f32.mrf.mxu0
      %v1053 = vadd.f32 %v1004, %v1052
      %v1054 = vpop.f32.mrf.mxu0
      %1055 = vdwg.mxu0
      %1056 = vmatprep.subr.bf16.mxu0 0
      %1057 = vmatpush1.bf16.msra.mxu0 %v787
      %1058 = vmatprep.subr.bf16.mxu0 0
      %1059 = vmatpush1.bf16.msra.mxu0 %v786
      %1060 = vmatprep.subr.bf16.mxu0 0
      %1061 = vmatpush1.bf16.msra.mxu0 %v785
      %1062 = vmatprep.subr.bf16.mxu0 0
      %1063 = vmatpush1.bf16.msra.mxu0 %v784
      %1064 = vmatprep.subr.bf16.mxu0 0
      %1065 = vmatpush1.bf16.msra.mxu0 %v783
      %1066 = vmatprep.subr.bf16.mxu0 0
      %1067 = vmatpush1.bf16.msra.mxu0 %v782
      %1068 = vmatprep.subr.bf16.mxu0 0
      %1069 = vmatpush1.bf16.msra.mxu0 %v781
      %1070 = vmatprep.subr.bf16.mxu0 0
      %1071 = vmatpush1.bf16.msra.mxu0 %v780
      %1072 = vmatprep.subr.bf16.mxu0 0
      %1073 = vmatpush2.bf16.msra.mxu0 0
      %1074 = vmatprep.subr.bf16.mxu0 0
      %1075 = vmatpush2.bf16.msra.mxu0 0
      %1076 = vmatprep.subr.bf16.mxu0 0
      %1077 = vmatpush2.bf16.msra.mxu0 0
      %1078 = vmatprep.subr.bf16.mxu0 0
      %1079 = vmatpush2.bf16.msra.mxu0 0
      %1080 = vmatprep.subr.bf16.mxu0 0
      %1081 = vmatpush2.bf16.msra.mxu0 0
      %1082 = vmatprep.subr.bf16.mxu0 0
      %1083 = vmatpush2.bf16.msra.mxu0 0
      %1084 = vmatprep.subr.bf16.mxu0 0
      %1085 = vmatpush2.bf16.msra.mxu0 0
      %1086 = vmatprep.subr.bf16.mxu0 0
      %1087 = vmatpush2.bf16.msra.mxu0 0
      %1088 = vmatprep.mubr.bf16.mxu0 0
      %1089 = vmatmul.mubr.bf16.gmra.mxu0 %v400
      %v1090 = vpop.f32.mrf.mxu0
      %v1091 = vadd.f32 %v1042, %v1090
      %v1092 = vpop.f32.mrf.mxu0
      %v1093 = vpop.f32.mrf.mxu0
      %v1094 = vadd.f32 %v1045, %v1093
      %v1095 = vpop.f32.mrf.mxu0
      %1096 = vmatprep.mubr.bf16.mxu0 0
      %1097 = vmatmul.mubr.bf16.gmra.mxu0 %v409
      %v1098 = vpop.f32.mrf.mxu0
      %v1099 = vadd.f32 %v1050, %v1098
      %v1100 = vpop.f32.mrf.mxu0
      %v1101 = vpop.f32.mrf.mxu0
      %v1102 = vadd.f32 %v1053, %v1101
      %v1103 = vpop.f32.mrf.mxu0
      %1104 = vdwg.mxu0
      %s1105 = scalar_lea.vmem %s165, 144
      %v1106 = vld [vmem:[%s1105] sm:$0xff]
      %v1107 = vld [vmem:[%s1105 + $0x8] sm:$0xff]
      %v1108 = vld [vmem:[%s1105 + $0x10] sm:$0xff]
      %v1109 = vld [vmem:[%s1105 + $0x18] sm:$0xff]
      %v1110 = vld [vmem:[%s1105 + $0x20] sm:$0xf]
      %v1111 = vld [vmem:[%s1105 + $0x24] sm:$0xff]
      %v1112 = vld [vmem:[%s1105 + $0x2c] sm:$0xff]
      %v1113 = vld [vmem:[%s1105 + $0x34] sm:$0xff]
      %v1114 = vld [vmem:[%s1105 + $0x3c] sm:$0xff]
      %v1115 = vld [vmem:[%s1105 + $0x44] sm:$0xf]
      %v1116 = vld [vmem:[%s1105 + $0x48] sm:$0xff]
      %v1117 = vld [vmem:[%s1105 + $0x50] sm:$0xff]
      %v1118 = vld [vmem:[%s1105 + $0x58] sm:$0xff]
      %v1119 = vld [vmem:[%s1105 + $0x60] sm:$0xff]
      %v1120 = vld [vmem:[%s1105 + $0x68] sm:$0xf]
      %v1121 = vld [vmem:[%s1105 + $0x6c] sm:$0x11]
      %v1122 = vld [vmem:[%s1105 + $0x74] sm:$0x11]
      %v1123 = vld [vmem:[%s1105 + $0x7c] sm:$0x11]
      %v1124 = vld [vmem:[%s1105 + $0x84] sm:$0x11]
      %v1125 = vld [vmem:[%s1105 + $0x8c] sm:$0x1]
      %v1146 = vunpack.c.l.b16 %v1106
      %v1147 = vunpack.c.h.b16 %v1106
      %v1148 = vunpack.c.l.b16 %v1107
      %v1149 = vunpack.c.h.b16 %v1107
      %v1150 = vunpack.c.l.b16 %v1108
      %v1151 = vunpack.c.h.b16 %v1108
      %v1152 = vunpack.c.l.b16 %v1109
      %v1153 = vunpack.c.h.b16 %v1109
      %v1154 = vunpack.c.l.b16 %v1110
      %v1155 = vunpack.c.l.b16 %v1111
      %v1156 = vunpack.c.h.b16 %v1111
      %v1157 = vunpack.c.l.b16 %v1112
      %v1158 = vunpack.c.h.b16 %v1112
      %v1159 = vunpack.c.l.b16 %v1113
      %v1160 = vunpack.c.h.b16 %v1113
      %v1161 = vunpack.c.l.b16 %v1114
      %v1162 = vunpack.c.h.b16 %v1114
      %v1163 = vunpack.c.l.b16 %v1115
      %v1164 = vunpack.c.l.b16 %v1116
      %v1165 = vunpack.c.h.b16 %v1116
      %v1166 = vunpack.c.l.b16 %v1117
      %v1167 = vunpack.c.h.b16 %v1117
      %v1168 = vunpack.c.l.b16 %v1118
      %v1169 = vunpack.c.h.b16 %v1118
      %v1170 = vunpack.c.l.b16 %v1119
      %v1171 = vunpack.c.h.b16 %v1119
      %v1172 = vunpack.c.l.b16 %v1120
      %v1173 = vunpack.c.l.b16 %v1121
      %v1174 = vunpack.c.h.b16 %v1121
      %v1175 = vunpack.c.l.b16 %v1122
      %v1176 = vunpack.c.h.b16 %v1122
      %v1177 = vunpack.c.l.b16 %v1123
      %v1178 = vunpack.c.h.b16 %v1123
      %v1179 = vunpack.c.l.b16 %v1124
      %v1180 = vunpack.c.h.b16 %v1124
      %v1181 = vunpack.c.l.b16 %v1125
      %v1182 = vpack.c.b16 %v1155, %v1146
      %v1183 = vpack.c.b16 %v1156, %v1147
      %v1184 = vpack.c.b16 %v1157, %v1148
      %v1185 = vpack.c.b16 %v1158, %v1149
      %v1186 = vpack.c.b16 %v1159, %v1150
      %v1187 = vpack.c.b16 %v1160, %v1151
      %v1188 = vpack.c.b16 %v1161, %v1152
      %v1189 = vpack.c.b16 %v1162, %v1153
      %v1190 = vpack.c.b16 %v1163, %v1154
      %v1191 = vpack.c.b16 %v1173, %v1164
      %v1192 = vpack.c.b16 %v1174, %v1165
      %v1193 = vpack.c.b16 %v1175, %v1166
      %v1194 = vpack.c.b16 %v1176, %v1167
      %v1195 = vpack.c.b16 %v1177, %v1168
      %v1196 = vpack.c.b16 %v1178, %v1169
      %v1197 = vpack.c.b16 %v1179, %v1170
      %v1198 = vpack.c.b16 %v1180, %v1171
      %v1199 = vpack.c.b16 %v1181, %v1172
      %1218 = vmatprep.subr.bf16.mxu0 0
      %1219 = vmatpush1.bf16.msra.mxu0 %v723
      %1220 = vmatprep.subr.bf16.mxu0 0
      %1221 = vmatpush1.bf16.msra.mxu0 %v722
      %1222 = vmatprep.subr.bf16.mxu0 0
      %1223 = vmatpush1.bf16.msra.mxu0 %v721
      %1224 = vmatprep.subr.bf16.mxu0 0
      %1225 = vmatpush1.bf16.msra.mxu0 %v720
      %1226 = vmatprep.subr.bf16.mxu0 0
      %1227 = vmatpush1.bf16.msra.mxu0 %v719
      %1228 = vmatprep.subr.bf16.mxu0 0
      %1229 = vmatpush1.bf16.msra.mxu0 %v718
      %1230 = vmatprep.subr.bf16.mxu0 0
      %1231 = vmatpush1.bf16.msra.mxu0 %v717
      %1232 = vmatprep.subr.bf16.mxu0 0
      %1233 = vmatpush1.bf16.msra.mxu0 %v716
      %1234 = vmatprep.subr.bf16.mxu0 0
      %1235 = vmatpush2.bf16.msra.mxu0 %v731
      %1236 = vmatprep.subr.bf16.mxu0 0
      %1237 = vmatpush2.bf16.msra.mxu0 %v730
      %1238 = vmatprep.subr.bf16.mxu0 0
      %1239 = vmatpush2.bf16.msra.mxu0 %v729
      %1240 = vmatprep.subr.bf16.mxu0 0
      %1241 = vmatpush2.bf16.msra.mxu0 %v728
      %1242 = vmatprep.subr.bf16.mxu0 0
      %1243 = vmatpush2.bf16.msra.mxu0 %v727
      %1244 = vmatprep.subr.bf16.mxu0 0
      %1245 = vmatpush2.bf16.msra.mxu0 %v726
      %1246 = vmatprep.subr.bf16.mxu0 0
      %1247 = vmatpush2.bf16.msra.mxu0 %v725
      %1248 = vmatprep.subr.bf16.mxu0 0
      %1249 = vmatpush2.bf16.msra.mxu0 %v724
      %1250 = vmatprep.mubr.bf16.mxu0 %v1183
      %1251 = vmatmul.mubr.bf16.gmra.mxu0 %v1182
      %v1252 = vpop.f32.mrf.mxu0
      %v1253 = vadd.f32 0.0, %v1252
      %v1254 = vpop.f32.mrf.mxu0
      %v1255 = vpop.f32.mrf.mxu0
      %v1256 = vadd.f32 0.0, %v1255
      %v1257 = vpop.f32.mrf.mxu0
      %1258 = vmatprep.mubr.bf16.mxu0 %v1192
      %1259 = vmatmul.mubr.bf16.gmra.mxu0 %v1191
      %v1260 = vpop.f32.mrf.mxu0
      %v1261 = vadd.f32 0.0, %v1260
      %v1262 = vpop.f32.mrf.mxu0
      %v1263 = vpop.f32.mrf.mxu0
      %v1264 = vadd.f32 0.0, %v1263
      %v1265 = vpop.f32.mrf.mxu0
      %1266 = vdwg.mxu0
      %1267 = vmatprep.subr.bf16.mxu0 0
      %1268 = vmatpush1.bf16.msra.mxu0 %v739
      %1269 = vmatprep.subr.bf16.mxu0 0
      %1270 = vmatpush1.bf16.msra.mxu0 %v738
      %1271 = vmatprep.subr.bf16.mxu0 0
      %1272 = vmatpush1.bf16.msra.mxu0 %v737
      %1273 = vmatprep.subr.bf16.mxu0 0
      %1274 = vmatpush1.bf16.msra.mxu0 %v736
      %1275 = vmatprep.subr.bf16.mxu0 0
      %1276 = vmatpush1.bf16.msra.mxu0 %v735
      %1277 = vmatprep.subr.bf16.mxu0 0
      %1278 = vmatpush1.bf16.msra.mxu0 %v734
      %1279 = vmatprep.subr.bf16.mxu0 0
      %1280 = vmatpush1.bf16.msra.mxu0 %v733
      %1281 = vmatprep.subr.bf16.mxu0 0
      %1282 = vmatpush1.bf16.msra.mxu0 %v732
      %1283 = vmatprep.subr.bf16.mxu0 0
      %1284 = vmatpush2.bf16.msra.mxu0 %v747
      %1285 = vmatprep.subr.bf16.mxu0 0
      %1286 = vmatpush2.bf16.msra.mxu0 %v746
      %1287 = vmatprep.subr.bf16.mxu0 0
      %1288 = vmatpush2.bf16.msra.mxu0 %v745
      %1289 = vmatprep.subr.bf16.mxu0 0
      %1290 = vmatpush2.bf16.msra.mxu0 %v744
      %1291 = vmatprep.subr.bf16.mxu0 0
      %1292 = vmatpush2.bf16.msra.mxu0 %v743
      %1293 = vmatprep.subr.bf16.mxu0 0
      %1294 = vmatpush2.bf16.msra.mxu0 %v742
      %1295 = vmatprep.subr.bf16.mxu0 0
      %1296 = vmatpush2.bf16.msra.mxu0 %v741
      %1297 = vmatprep.subr.bf16.mxu0 0
      %1298 = vmatpush2.bf16.msra.mxu0 %v740
      %1299 = vmatprep.mubr.bf16.mxu0 %v1185
      %1300 = vmatmul.mubr.bf16.gmra.mxu0 %v1184
      %v1301 = vpop.f32.mrf.mxu0
      %v1302 = vadd.f32 %v1253, %v1301
      %v1303 = vpop.f32.mrf.mxu0
      %v1304 = vpop.f32.mrf.mxu0
      %v1305 = vadd.f32 %v1256, %v1304
      %v1306 = vpop.f32.mrf.mxu0
      %1307 = vmatprep.mubr.bf16.mxu0 %v1194
      %1308 = vmatmul.mubr.bf16.gmra.mxu0 %v1193
      %v1309 = vpop.f32.mrf.mxu0
      %v1310 = vadd.f32 %v1261, %v1309
      %v1311 = vpop.f32.mrf.mxu0
      %v1312 = vpop.f32.mrf.mxu0
      %v1313 = vadd.f32 %v1264, %v1312
      %v1314 = vpop.f32.mrf.mxu0
      %1315 = vdwg.mxu0
      %1316 = vmatprep.subr.bf16.mxu0 0
      %1317 = vmatpush1.bf16.msra.mxu0 %v755
      %1318 = vmatprep.subr.bf16.mxu0 0
      %1319 = vmatpush1.bf16.msra.mxu0 %v754
      %1320 = vmatprep.subr.bf16.mxu0 0
      %1321 = vmatpush1.bf16.msra.mxu0 %v753
      %1322 = vmatprep.subr.bf16.mxu0 0
      %1323 = vmatpush1.bf16.msra.mxu0 %v752
      %1324 = vmatprep.subr.bf16.mxu0 0
      %1325 = vmatpush1.bf16.msra.mxu0 %v751
      %1326 = vmatprep.subr.bf16.mxu0 0
      %1327 = vmatpush1.bf16.msra.mxu0 %v750
      %1328 = vmatprep.subr.bf16.mxu0 0
      %1329 = vmatpush1.bf16.msra.mxu0 %v749
      %1330 = vmatprep.subr.bf16.mxu0 0
      %1331 = vmatpush1.bf16.msra.mxu0 %v748
      %1332 = vmatprep.subr.bf16.mxu0 0
      %1333 = vmatpush2.bf16.msra.mxu0 %v763
      %1334 = vmatprep.subr.bf16.mxu0 0
      %1335 = vmatpush2.bf16.msra.mxu0 %v762
      %1336 = vmatprep.subr.bf16.mxu0 0
      %1337 = vmatpush2.bf16.msra.mxu0 %v761
      %1338 = vmatprep.subr.bf16.mxu0 0
      %1339 = vmatpush2.bf16.msra.mxu0 %v760
      %1340 = vmatprep.subr.bf16.mxu0 0
      %1341 = vmatpush2.bf16.msra.mxu0 %v759
      %1342 = vmatprep.subr.bf16.mxu0 0
      %1343 = vmatpush2.bf16.msra.mxu0 %v758
      %1344 = vmatprep.subr.bf16.mxu0 0
      %1345 = vmatpush2.bf16.msra.mxu0 %v757
      %1346 = vmatprep.subr.bf16.mxu0 0
      %1347 = vmatpush2.bf16.msra.mxu0 %v756
      %1348 = vmatprep.mubr.bf16.mxu0 %v1187
      %1349 = vmatmul.mubr.bf16.gmra.mxu0 %v1186
      %v1350 = vpop.f32.mrf.mxu0
      %v1351 = vadd.f32 %v1302, %v1350
      %v1352 = vpop.f32.mrf.mxu0
      %v1353 = vpop.f32.mrf.mxu0
      %v1354 = vadd.f32 %v1305, %v1353
      %v1355 = vpop.f32.mrf.mxu0
      %1356 = vmatprep.mubr.bf16.mxu0 %v1196
      %1357 = vmatmul.mubr.bf16.gmra.mxu0 %v1195
      %v1358 = vpop.f32.mrf.mxu0
      %v1359 = vadd.f32 %v1310, %v1358
      %v1360 = vpop.f32.mrf.mxu0
      %v1361 = vpop.f32.mrf.mxu0
      %v1362 = vadd.f32 %v1313, %v1361
      %v1363 = vpop.f32.mrf.mxu0
      %1364 = vdwg.mxu0
      %1365 = vmatprep.subr.bf16.mxu0 0
      %1366 = vmatpush1.bf16.msra.mxu0 %v771
      %1367 = vmatprep.subr.bf16.mxu0 0
      %1368 = vmatpush1.bf16.msra.mxu0 %v770
      %1369 = vmatprep.subr.bf16.mxu0 0
      %1370 = vmatpush1.bf16.msra.mxu0 %v769
      %1371 = vmatprep.subr.bf16.mxu0 0
      %1372 = vmatpush1.bf16.msra.mxu0 %v768
      %1373 = vmatprep.subr.bf16.mxu0 0
      %1374 = vmatpush1.bf16.msra.mxu0 %v767
      %1375 = vmatprep.subr.bf16.mxu0 0
      %1376 = vmatpush1.bf16.msra.mxu0 %v766
      %1377 = vmatprep.subr.bf16.mxu0 0
      %1378 = vmatpush1.bf16.msra.mxu0 %v765
      %1379 = vmatprep.subr.bf16.mxu0 0
      %1380 = vmatpush1.bf16.msra.mxu0 %v764
      %1381 = vmatprep.subr.bf16.mxu0 0
      %1382 = vmatpush2.bf16.msra.mxu0 %v779
      %1383 = vmatprep.subr.bf16.mxu0 0
      %1384 = vmatpush2.bf16.msra.mxu0 %v778
      %1385 = vmatprep.subr.bf16.mxu0 0
      %1386 = vmatpush2.bf16.msra.mxu0 %v777
      %1387 = vmatprep.subr.bf16.mxu0 0
      %1388 = vmatpush2.bf16.msra.mxu0 %v776
      %1389 = vmatprep.subr.bf16.mxu0 0
      %1390 = vmatpush2.bf16.msra.mxu0 %v775
      %1391 = vmatprep.subr.bf16.mxu0 0
      %1392 = vmatpush2.bf16.msra.mxu0 %v774
      %1393 = vmatprep.subr.bf16.mxu0 0
      %1394 = vmatpush2.bf16.msra.mxu0 %v773
      %1395 = vmatprep.subr.bf16.mxu0 0
      %1396 = vmatpush2.bf16.msra.mxu0 %v772
      %1397 = vmatprep.mubr.bf16.mxu0 %v1189
      %1398 = vmatmul.mubr.bf16.gmra.mxu0 %v1188
      %v1399 = vpop.f32.mrf.mxu0
      %v1400 = vadd.f32 %v1351, %v1399
      %v1401 = vpop.f32.mrf.mxu0
      %v1402 = vpop.f32.mrf.mxu0
      %v1403 = vadd.f32 %v1354, %v1402
      %v1404 = vpop.f32.mrf.mxu0
      %1405 = vmatprep.mubr.bf16.mxu0 %v1198
      %1406 = vmatmul.mubr.bf16.gmra.mxu0 %v1197
      %v1407 = vpop.f32.mrf.mxu0
      %v1408 = vadd.f32 %v1359, %v1407
      %v1409 = vpop.f32.mrf.mxu0
      %v1410 = vpop.f32.mrf.mxu0
      %v1411 = vadd.f32 %v1362, %v1410
      %v1412 = vpop.f32.mrf.mxu0
      %1413 = vdwg.mxu0
      %1414 = vmatprep.subr.bf16.mxu0 0
      %1415 = vmatpush1.bf16.msra.mxu0 %v787
      %1416 = vmatprep.subr.bf16.mxu0 0
      %1417 = vmatpush1.bf16.msra.mxu0 %v786
      %1418 = vmatprep.subr.bf16.mxu0 0
      %1419 = vmatpush1.bf16.msra.mxu0 %v785
      %1420 = vmatprep.subr.bf16.mxu0 0
      %1421 = vmatpush1.bf16.msra.mxu0 %v784
      %1422 = vmatprep.subr.bf16.mxu0 0
      %1423 = vmatpush1.bf16.msra.mxu0 %v783
      %1424 = vmatprep.subr.bf16.mxu0 0
      %1425 = vmatpush1.bf16.msra.mxu0 %v782
      %1426 = vmatprep.subr.bf16.mxu0 0
      %1427 = vmatpush1.bf16.msra.mxu0 %v781
      %1428 = vmatprep.subr.bf16.mxu0 0
      %1429 = vmatpush1.bf16.msra.mxu0 %v780
      %1430 = vmatprep.subr.bf16.mxu0 0
      %1431 = vmatpush2.bf16.msra.mxu0 0
      %1432 = vmatprep.subr.bf16.mxu0 0
      %1433 = vmatpush2.bf16.msra.mxu0 0
      %1434 = vmatprep.subr.bf16.mxu0 0
      %1435 = vmatpush2.bf16.msra.mxu0 0
      %1436 = vmatprep.subr.bf16.mxu0 0
      %1437 = vmatpush2.bf16.msra.mxu0 0
      %1438 = vmatprep.subr.bf16.mxu0 0
      %1439 = vmatpush2.bf16.msra.mxu0 0
      %1440 = vmatprep.subr.bf16.mxu0 0
      %1441 = vmatpush2.bf16.msra.mxu0 0
      %1442 = vmatprep.subr.bf16.mxu0 0
      %1443 = vmatpush2.bf16.msra.mxu0 0
      %1444 = vmatprep.subr.bf16.mxu0 0
      %1445 = vmatpush2.bf16.msra.mxu0 0
      %1446 = vmatprep.mubr.bf16.mxu0 0
      %1447 = vmatmul.mubr.bf16.gmra.mxu0 %v1190
      %v1448 = vpop.f32.mrf.mxu0
      %v1449 = vadd.f32 %v1400, %v1448
      %v1450 = vpop.f32.mrf.mxu0
      %v1451 = vpop.f32.mrf.mxu0
      %v1452 = vadd.f32 %v1403, %v1451
      %v1453 = vpop.f32.mrf.mxu0
      %1454 = vmatprep.mubr.bf16.mxu0 0
      %1455 = vmatmul.mubr.bf16.gmra.mxu0 %v1199
      %v1456 = vpop.f32.mrf.mxu0
      %v1457 = vadd.f32 %v1408, %v1456
      %v1458 = vpop.f32.mrf.mxu0
      %v1459 = vpop.f32.mrf.mxu0
      %v1460 = vadd.f32 %v1411, %v1459
      %v1461 = vpop.f32.mrf.mxu0
      %1462 = vdwg.mxu0
      %v1463 = vmax.f32 %v1091, %v1449
      %v1464 = vmax.f32 %v1094, %v1452
      %v1465 = vmax.f32 %v1099, %v1457
      %v1466 = vmax.f32 %v1102, %v1460
      %s1467 = scalar_lea.vmem %s165, 288
      %v1468 = vld [vmem:[%s1467] sm:$0xff]
      %v1469 = vld [vmem:[%s1467 + $0x8] sm:$0xff]
      %v1470 = vld [vmem:[%s1467 + $0x10] sm:$0xff]
      %v1471 = vld [vmem:[%s1467 + $0x18] sm:$0xff]
      %v1472 = vld [vmem:[%s1467 + $0x20] sm:$0xf]
      %v1473 = vld [vmem:[%s1467 + $0x24] sm:$0xff]
      %v1474 = vld [vmem:[%s1467 + $0x2c] sm:$0xff]
      %v1475 = vld [vmem:[%s1467 + $0x34] sm:$0xff]
      %v1476 = vld [vmem:[%s1467 + $0x3c] sm:$0xff]
      %v1477 = vld [vmem:[%s1467 + $0x44] sm:$0xf]
      %v1478 = vld [vmem:[%s1467 + $0x48] sm:$0xff]
      %v1479 = vld [vmem:[%s1467 + $0x50] sm:$0xff]
      %v1480 = vld [vmem:[%s1467 + $0x58] sm:$0xff]
      %v1481 = vld [vmem:[%s1467 + $0x60] sm:$0xff]
      %v1482 = vld [vmem:[%s1467 + $0x68] sm:$0xf]
      %v1483 = vld [vmem:[%s1467 + $0x6c] sm:$0x11]
      %v1484 = vld [vmem:[%s1467 + $0x74] sm:$0x11]
      %v1485 = vld [vmem:[%s1467 + $0x7c] sm:$0x11]
      %v1486 = vld [vmem:[%s1467 + $0x84] sm:$0x11]
      %v1487 = vld [vmem:[%s1467 + $0x8c] sm:$0x1]
      %v1508 = vunpack.c.l.b16 %v1468
      %v1509 = vunpack.c.h.b16 %v1468
      %v1510 = vunpack.c.l.b16 %v1469
      %v1511 = vunpack.c.h.b16 %v1469
      %v1512 = vunpack.c.l.b16 %v1470
      %v1513 = vunpack.c.h.b16 %v1470
      %v1514 = vunpack.c.l.b16 %v1471
      %v1515 = vunpack.c.h.b16 %v1471
      %v1516 = vunpack.c.l.b16 %v1472
      %v1517 = vunpack.c.l.b16 %v1473
      %v1518 = vunpack.c.h.b16 %v1473
      %v1519 = vunpack.c.l.b16 %v1474
      %v1520 = vunpack.c.h.b16 %v1474
      %v1521 = vunpack.c.l.b16 %v1475
      %v1522 = vunpack.c.h.b16 %v1475
      %v1523 = vunpack.c.l.b16 %v1476
      %v1524 = vunpack.c.h.b16 %v1476
      %v1525 = vunpack.c.l.b16 %v1477
      %v1526 = vunpack.c.l.b16 %v1478
      %v1527 = vunpack.c.h.b16 %v1478
      %v1528 = vunpack.c.l.b16 %v1479
      %v1529 = vunpack.c.h.b16 %v1479
      %v1530 = vunpack.c.l.b16 %v1480
      %v1531 = vunpack.c.h.b16 %v1480
      %v1532 = vunpack.c.l.b16 %v1481
      %v1533 = vunpack.c.h.b16 %v1481
      %v1534 = vunpack.c.l.b16 %v1482
      %v1535 = vunpack.c.l.b16 %v1483
      %v1536 = vunpack.c.h.b16 %v1483
      %v1537 = vunpack.c.l.b16 %v1484
      %v1538 = vunpack.c.h.b16 %v1484
      %v1539 = vunpack.c.l.b16 %v1485
      %v1540 = vunpack.c.h.b16 %v1485
      %v1541 = vunpack.c.l.b16 %v1486
      %v1542 = vunpack.c.h.b16 %v1486
      %v1543 = vunpack.c.l.b16 %v1487
      %v1544 = vpack.c.b16 %v1517, %v1508
      %v1545 = vpack.c.b16 %v1518, %v1509
      %v1546 = vpack.c.b16 %v1519, %v1510
      %v1547 = vpack.c.b16 %v1520, %v1511
      %v1548 = vpack.c.b16 %v1521, %v1512
      %v1549 = vpack.c.b16 %v1522, %v1513
      %v1550 = vpack.c.b16 %v1523, %v1514
      %v1551 = vpack.c.b16 %v1524, %v1515
      %v1552 = vpack.c.b16 %v1525, %v1516
      %v1553 = vpack.c.b16 %v1535, %v1526
      %v1554 = vpack.c.b16 %v1536, %v1527
      %v1555 = vpack.c.b16 %v1537, %v1528
      %v1556 = vpack.c.b16 %v1538, %v1529
      %v1557 = vpack.c.b16 %v1539, %v1530
      %v1558 = vpack.c.b16 %v1540, %v1531
      %v1559 = vpack.c.b16 %v1541, %v1532
      %v1560 = vpack.c.b16 %v1542, %v1533
      %v1561 = vpack.c.b16 %v1543, %v1534
      %1580 = vmatprep.subr.bf16.mxu0 0
      %1581 = vmatpush1.bf16.msra.mxu0 %v723
      %1582 = vmatprep.subr.bf16.mxu0 0
      %1583 = vmatpush1.bf16.msra.mxu0 %v722
      %1584 = vmatprep.subr.bf16.mxu0 0
      %1585 = vmatpush1.bf16.msra.mxu0 %v721
      %1586 = vmatprep.subr.bf16.mxu0 0
      %1587 = vmatpush1.bf16.msra.mxu0 %v720
      %1588 = vmatprep.subr.bf16.mxu0 0
      %1589 = vmatpush1.bf16.msra.mxu0 %v719
      %1590 = vmatprep.subr.bf16.mxu0 0
      %1591 = vmatpush1.bf16.msra.mxu0 %v718
      %1592 = vmatprep.subr.bf16.mxu0 0
      %1593 = vmatpush1.bf16.msra.mxu0 %v717
      %1594 = vmatprep.subr.bf16.mxu0 0
      %1595 = vmatpush1.bf16.msra.mxu0 %v716
      %1596 = vmatprep.subr.bf16.mxu0 0
      %1597 = vmatpush2.bf16.msra.mxu0 %v731
      %1598 = vmatprep.subr.bf16.mxu0 0
      %1599 = vmatpush2.bf16.msra.mxu0 %v730
      %1600 = vmatprep.subr.bf16.mxu0 0
      %1601 = vmatpush2.bf16.msra.mxu0 %v729
      %1602 = vmatprep.subr.bf16.mxu0 0
      %1603 = vmatpush2.bf16.msra.mxu0 %v728
      %1604 = vmatprep.subr.bf16.mxu0 0
      %1605 = vmatpush2.bf16.msra.mxu0 %v727
      %1606 = vmatprep.subr.bf16.mxu0 0
      %1607 = vmatpush2.bf16.msra.mxu0 %v726
      %1608 = vmatprep.subr.bf16.mxu0 0
      %1609 = vmatpush2.bf16.msra.mxu0 %v725
      %1610 = vmatprep.subr.bf16.mxu0 0
      %1611 = vmatpush2.bf16.msra.mxu0 %v724
      %1612 = vmatprep.mubr.bf16.mxu0 %v1545
      %1613 = vmatmul.mubr.bf16.gmra.mxu0 %v1544
      %v1614 = vpop.f32.mrf.mxu0
      %v1615 = vadd.f32 0.0, %v1614
      %v1616 = vpop.f32.mrf.mxu0
      %v1617 = vpop.f32.mrf.mxu0
      %v1618 = vadd.f32 0.0, %v1617
      %v1619 = vpop.f32.mrf.mxu0
      %1620 = vmatprep.mubr.bf16.mxu0 %v1554
      %1621 = vmatmul.mubr.bf16.gmra.mxu0 %v1553
      %v1622 = vpop.f32.mrf.mxu0
      %v1623 = vadd.f32 0.0, %v1622
      %v1624 = vpop.f32.mrf.mxu0
      %v1625 = vpop.f32.mrf.mxu0
      %v1626 = vadd.f32 0.0, %v1625
      %v1627 = vpop.f32.mrf.mxu0
      %1628 = vdwg.mxu0
      %1629 = vmatprep.subr.bf16.mxu0 0
      %1630 = vmatpush1.bf16.msra.mxu0 %v739
      %1631 = vmatprep.subr.bf16.mxu0 0
      %1632 = vmatpush1.bf16.msra.mxu0 %v738
      %1633 = vmatprep.subr.bf16.mxu0 0
      %1634 = vmatpush1.bf16.msra.mxu0 %v737
      %1635 = vmatprep.subr.bf16.mxu0 0
      %1636 = vmatpush1.bf16.msra.mxu0 %v736
      %1637 = vmatprep.subr.bf16.mxu0 0
      %1638 = vmatpush1.bf16.msra.mxu0 %v735
      %1639 = vmatprep.subr.bf16.mxu0 0
      %1640 = vmatpush1.bf16.msra.mxu0 %v734
      %1641 = vmatprep.subr.bf16.mxu0 0
      %1642 = vmatpush1.bf16.msra.mxu0 %v733
      %1643 = vmatprep.subr.bf16.mxu0 0
      %1644 = vmatpush1.bf16.msra.mxu0 %v732
      %1645 = vmatprep.subr.bf16.mxu0 0
      %1646 = vmatpush2.bf16.msra.mxu0 %v747
      %1647 = vmatprep.subr.bf16.mxu0 0
      %1648 = vmatpush2.bf16.msra.mxu0 %v746
      %1649 = vmatprep.subr.bf16.mxu0 0
      %1650 = vmatpush2.bf16.msra.mxu0 %v745
      %1651 = vmatprep.subr.bf16.mxu0 0
      %1652 = vmatpush2.bf16.msra.mxu0 %v744
      %1653 = vmatprep.subr.bf16.mxu0 0
      %1654 = vmatpush2.bf16.msra.mxu0 %v743
      %1655 = vmatprep.subr.bf16.mxu0 0
      %1656 = vmatpush2.bf16.msra.mxu0 %v742
      %1657 = vmatprep.subr.bf16.mxu0 0
      %1658 = vmatpush2.bf16.msra.mxu0 %v741
      %1659 = vmatprep.subr.bf16.mxu0 0
      %1660 = vmatpush2.bf16.msra.mxu0 %v740
      %1661 = vmatprep.mubr.bf16.mxu0 %v1547
      %1662 = vmatmul.mubr.bf16.gmra.mxu0 %v1546
      %v1663 = vpop.f32.mrf.mxu0
      %v1664 = vadd.f32 %v1615, %v1663
      %v1665 = vpop.f32.mrf.mxu0
      %v1666 = vpop.f32.mrf.mxu0
      %v1667 = vadd.f32 %v1618, %v1666
      %v1668 = vpop.f32.mrf.mxu0
      %1669 = vmatprep.mubr.bf16.mxu0 %v1556
      %1670 = vmatmul.mubr.bf16.gmra.mxu0 %v1555
      %v1671 = vpop.f32.mrf.mxu0
      %v1672 = vadd.f32 %v1623, %v1671
      %v1673 = vpop.f32.mrf.mxu0
      %v1674 = vpop.f32.mrf.mxu0
      %v1675 = vadd.f32 %v1626, %v1674
      %v1676 = vpop.f32.mrf.mxu0
      %1677 = vdwg.mxu0
      %1678 = vmatprep.subr.bf16.mxu0 0
      %1679 = vmatpush1.bf16.msra.mxu0 %v755
      %1680 = vmatprep.subr.bf16.mxu0 0
      %1681 = vmatpush1.bf16.msra.mxu0 %v754
      %1682 = vmatprep.subr.bf16.mxu0 0
      %1683 = vmatpush1.bf16.msra.mxu0 %v753
      %1684 = vmatprep.subr.bf16.mxu0 0
      %1685 = vmatpush1.bf16.msra.mxu0 %v752
      %1686 = vmatprep.subr.bf16.mxu0 0
      %1687 = vmatpush1.bf16.msra.mxu0 %v751
      %1688 = vmatprep.subr.bf16.mxu0 0
      %1689 = vmatpush1.bf16.msra.mxu0 %v750
      %1690 = vmatprep.subr.bf16.mxu0 0
      %1691 = vmatpush1.bf16.msra.mxu0 %v749
      %1692 = vmatprep.subr.bf16.mxu0 0
      %1693 = vmatpush1.bf16.msra.mxu0 %v748
      %1694 = vmatprep.subr.bf16.mxu0 0
      %1695 = vmatpush2.bf16.msra.mxu0 %v763
      %1696 = vmatprep.subr.bf16.mxu0 0
      %1697 = vmatpush2.bf16.msra.mxu0 %v762
      %1698 = vmatprep.subr.bf16.mxu0 0
      %1699 = vmatpush2.bf16.msra.mxu0 %v761
      %1700 = vmatprep.subr.bf16.mxu0 0
      %1701 = vmatpush2.bf16.msra.mxu0 %v760
      %1702 = vmatprep.subr.bf16.mxu0 0
      %1703 = vmatpush2.bf16.msra.mxu0 %v759
      %1704 = vmatprep.subr.bf16.mxu0 0
      %1705 = vmatpush2.bf16.msra.mxu0 %v758
      %1706 = vmatprep.subr.bf16.mxu0 0
      %1707 = vmatpush2.bf16.msra.mxu0 %v757
      %1708 = vmatprep.subr.bf16.mxu0 0
      %1709 = vmatpush2.bf16.msra.mxu0 %v756
      %1710 = vmatprep.mubr.bf16.mxu0 %v1549
      %1711 = vmatmul.mubr.bf16.gmra.mxu0 %v1548
      %v1712 = vpop.f32.mrf.mxu0
      %v1713 = vadd.f32 %v1664, %v1712
      %v1714 = vpop.f32.mrf.mxu0
      %v1715 = vpop.f32.mrf.mxu0
      %v1716 = vadd.f32 %v1667, %v1715
      %v1717 = vpop.f32.mrf.mxu0
      %1718 = vmatprep.mubr.bf16.mxu0 %v1558
      %1719 = vmatmul.mubr.bf16.gmra.mxu0 %v1557
      %v1720 = vpop.f32.mrf.mxu0
      %v1721 = vadd.f32 %v1672, %v1720
      %v1722 = vpop.f32.mrf.mxu0
      %v1723 = vpop.f32.mrf.mxu0
      %v1724 = vadd.f32 %v1675, %v1723
      %v1725 = vpop.f32.mrf.mxu0
      %1726 = vdwg.mxu0
      %1727 = vmatprep.subr.bf16.mxu0 0
      %1728 = vmatpush1.bf16.msra.mxu0 %v771
      %1729 = vmatprep.subr.bf16.mxu0 0
      %1730 = vmatpush1.bf16.msra.mxu0 %v770
      %1731 = vmatprep.subr.bf16.mxu0 0
      %1732 = vmatpush1.bf16.msra.mxu0 %v769
      %1733 = vmatprep.subr.bf16.mxu0 0
      %1734 = vmatpush1.bf16.msra.mxu0 %v768
      %1735 = vmatprep.subr.bf16.mxu0 0
      %1736 = vmatpush1.bf16.msra.mxu0 %v767
      %1737 = vmatprep.subr.bf16.mxu0 0
      %1738 = vmatpush1.bf16.msra.mxu0 %v766
      %1739 = vmatprep.subr.bf16.mxu0 0
      %1740 = vmatpush1.bf16.msra.mxu0 %v765
      %1741 = vmatprep.subr.bf16.mxu0 0
      %1742 = vmatpush1.bf16.msra.mxu0 %v764
      %1743 = vmatprep.subr.bf16.mxu0 0
      %1744 = vmatpush2.bf16.msra.mxu0 %v779
      %1745 = vmatprep.subr.bf16.mxu0 0
      %1746 = vmatpush2.bf16.msra.mxu0 %v778
      %1747 = vmatprep.subr.bf16.mxu0 0
      %1748 = vmatpush2.bf16.msra.mxu0 %v777
      %1749 = vmatprep.subr.bf16.mxu0 0
      %1750 = vmatpush2.bf16.msra.mxu0 %v776
      %1751 = vmatprep.subr.bf16.mxu0 0
      %1752 = vmatpush2.bf16.msra.mxu0 %v775
      %1753 = vmatprep.subr.bf16.mxu0 0
      %1754 = vmatpush2.bf16.msra.mxu0 %v774
      %1755 = vmatprep.subr.bf16.mxu0 0
      %1756 = vmatpush2.bf16.msra.mxu0 %v773
      %1757 = vmatprep.subr.bf16.mxu0 0
      %1758 = vmatpush2.bf16.msra.mxu0 %v772
      %1759 = vmatprep.mubr.bf16.mxu0 %v1551
      %1760 = vmatmul.mubr.bf16.gmra.mxu0 %v1550
      %v1761 = vpop.f32.mrf.mxu0
      %v1762 = vadd.f32 %v1713, %v1761
      %v1763 = vpop.f32.mrf.mxu0
      %v1764 = vpop.f32.mrf.mxu0
      %v1765 = vadd.f32 %v1716, %v1764
      %v1766 = vpop.f32.mrf.mxu0
      %1767 = vmatprep.mubr.bf16.mxu0 %v1560
      %1768 = vmatmul.mubr.bf16.gmra.mxu0 %v1559
      %v1769 = vpop.f32.mrf.mxu0
      %v1770 = vadd.f32 %v1721, %v1769
      %v1771 = vpop.f32.mrf.mxu0
      %v1772 = vpop.f32.mrf.mxu0
      %v1773 = vadd.f32 %v1724, %v1772
      %v1774 = vpop.f32.mrf.mxu0
      %1775 = vdwg.mxu0
      %1776 = vmatprep.subr.bf16.mxu0 0
      %1777 = vmatpush1.bf16.msra.mxu0 %v787
      %1778 = vmatprep.subr.bf16.mxu0 0
      %1779 = vmatpush1.bf16.msra.mxu0 %v786
      %1780 = vmatprep.subr.bf16.mxu0 0
      %1781 = vmatpush1.bf16.msra.mxu0 %v785
      %1782 = vmatprep.subr.bf16.mxu0 0
      %1783 = vmatpush1.bf16.msra.mxu0 %v784
      %1784 = vmatprep.subr.bf16.mxu0 0
      %1785 = vmatpush1.bf16.msra.mxu0 %v783
      %1786 = vmatprep.subr.bf16.mxu0 0
      %1787 = vmatpush1.bf16.msra.mxu0 %v782
      %1788 = vmatprep.subr.bf16.mxu0 0
      %1789 = vmatpush1.bf16.msra.mxu0 %v781
      %1790 = vmatprep.subr.bf16.mxu0 0
      %1791 = vmatpush1.bf16.msra.mxu0 %v780
      %1792 = vmatprep.subr.bf16.mxu0 0
      %1793 = vmatpush2.bf16.msra.mxu0 0
      %1794 = vmatprep.subr.bf16.mxu0 0
      %1795 = vmatpush2.bf16.msra.mxu0 0
      %1796 = vmatprep.subr.bf16.mxu0 0
      %1797 = vmatpush2.bf16.msra.mxu0 0
      %1798 = vmatprep.subr.bf16.mxu0 0
      %1799 = vmatpush2.bf16.msra.mxu0 0
      %1800 = vmatprep.subr.bf16.mxu0 0
      %1801 = vmatpush2.bf16.msra.mxu0 0
      %1802 = vmatprep.subr.bf16.mxu0 0
      %1803 = vmatpush2.bf16.msra.mxu0 0
      %1804 = vmatprep.subr.bf16.mxu0 0
      %1805 = vmatpush2.bf16.msra.mxu0 0
      %1806 = vmatprep.subr.bf16.mxu0 0
      %1807 = vmatpush2.bf16.msra.mxu0 0
      %1808 = vmatprep.mubr.bf16.mxu0 0
      %1809 = vmatmul.mubr.bf16.gmra.mxu0 %v1552
      %v1810 = vpop.f32.mrf.mxu0
      %v1811 = vadd.f32 %v1762, %v1810
      %v1812 = vpop.f32.mrf.mxu0
      %v1813 = vpop.f32.mrf.mxu0
      %v1814 = vadd.f32 %v1765, %v1813
      %v1815 = vpop.f32.mrf.mxu0
      %1816 = vmatprep.mubr.bf16.mxu0 0
      %1817 = vmatmul.mubr.bf16.gmra.mxu0 %v1561
      %v1818 = vpop.f32.mrf.mxu0
      %v1819 = vadd.f32 %v1770, %v1818
      %v1820 = vpop.f32.mrf.mxu0
      %v1821 = vpop.f32.mrf.mxu0
      %v1822 = vadd.f32 %v1773, %v1821
      %v1823 = vpop.f32.mrf.mxu0
      %1824 = vdwg.mxu0
      %v1825 = vmax.f32 %v1463, %v1811
      %v1826 = vmax.f32 %v1464, %v1814
      %v1827 = vmax.f32 %v1465, %v1819
      %v1828 = vmax.f32 %v1466, %v1822
      %s1829 = scalar_lea.vmem %s165, 432
      %v1830 = vld [vmem:[%s1829] sm:$0xff]
      %v1831 = vld [vmem:[%s1829 + $0x8] sm:$0xff]
      %v1832 = vld [vmem:[%s1829 + $0x10] sm:$0xff]
      %v1833 = vld [vmem:[%s1829 + $0x18] sm:$0xff]
      %v1834 = vld [vmem:[%s1829 + $0x20] sm:$0xf]
      %v1835 = vld [vmem:[%s1829 + $0x24] sm:$0xff]
      %v1836 = vld [vmem:[%s1829 + $0x2c] sm:$0xff]
      %v1837 = vld [vmem:[%s1829 + $0x34] sm:$0xff]
      %v1838 = vld [vmem:[%s1829 + $0x3c] sm:$0xff]
      %v1839 = vld [vmem:[%s1829 + $0x44] sm:$0xf]
      %v1840 = vld [vmem:[%s1829 + $0x48] sm:$0xff]
      %v1841 = vld [vmem:[%s1829 + $0x50] sm:$0xff]
      %v1842 = vld [vmem:[%s1829 + $0x58] sm:$0xff]
      %v1843 = vld [vmem:[%s1829 + $0x60] sm:$0xff]
      %v1844 = vld [vmem:[%s1829 + $0x68] sm:$0xf]
      %v1845 = vld [vmem:[%s1829 + $0x6c] sm:$0x11]
      %v1846 = vld [vmem:[%s1829 + $0x74] sm:$0x11]
      %v1847 = vld [vmem:[%s1829 + $0x7c] sm:$0x11]
      %v1848 = vld [vmem:[%s1829 + $0x84] sm:$0x11]
      %v1849 = vld [vmem:[%s1829 + $0x8c] sm:$0x1]
      %v1870 = vunpack.c.l.b16 %v1830
      %v1871 = vunpack.c.h.b16 %v1830
      %v1872 = vunpack.c.l.b16 %v1831
      %v1873 = vunpack.c.h.b16 %v1831
      %v1874 = vunpack.c.l.b16 %v1832
      %v1875 = vunpack.c.h.b16 %v1832
      %v1876 = vunpack.c.l.b16 %v1833
      %v1877 = vunpack.c.h.b16 %v1833
      %v1878 = vunpack.c.l.b16 %v1834
      %v1879 = vunpack.c.l.b16 %v1835
      %v1880 = vunpack.c.h.b16 %v1835
      %v1881 = vunpack.c.l.b16 %v1836
      %v1882 = vunpack.c.h.b16 %v1836
      %v1883 = vunpack.c.l.b16 %v1837
      %v1884 = vunpack.c.h.b16 %v1837
      %v1885 = vunpack.c.l.b16 %v1838
      %v1886 = vunpack.c.h.b16 %v1838
      %v1887 = vunpack.c.l.b16 %v1839
      %v1888 = vunpack.c.l.b16 %v1840
      %v1889 = vunpack.c.h.b16 %v1840
      %v1890 = vunpack.c.l.b16 %v1841
      %v1891 = vunpack.c.h.b16 %v1841
      %v1892 = vunpack.c.l.b16 %v1842
      %v1893 = vunpack.c.h.b16 %v1842
      %v1894 = vunpack.c.l.b16 %v1843
      %v1895 = vunpack.c.h.b16 %v1843
      %v1896 = vunpack.c.l.b16 %v1844
      %v1897 = vunpack.c.l.b16 %v1845
      %v1898 = vunpack.c.h.b16 %v1845
      %v1899 = vunpack.c.l.b16 %v1846
      %v1900 = vunpack.c.h.b16 %v1846
      %v1901 = vunpack.c.l.b16 %v1847
      %v1902 = vunpack.c.h.b16 %v1847
      %v1903 = vunpack.c.l.b16 %v1848
      %v1904 = vunpack.c.h.b16 %v1848
      %v1905 = vunpack.c.l.b16 %v1849
      %v1906 = vpack.c.b16 %v1879, %v1870
      %v1907 = vpack.c.b16 %v1880, %v1871
      %v1908 = vpack.c.b16 %v1881, %v1872
      %v1909 = vpack.c.b16 %v1882, %v1873
      %v1910 = vpack.c.b16 %v1883, %v1874
      %v1911 = vpack.c.b16 %v1884, %v1875
      %v1912 = vpack.c.b16 %v1885, %v1876
      %v1913 = vpack.c.b16 %v1886, %v1877
      %v1914 = vpack.c.b16 %v1887, %v1878
      %v1915 = vpack.c.b16 %v1897, %v1888
      %v1916 = vpack.c.b16 %v1898, %v1889
      %v1917 = vpack.c.b16 %v1899, %v1890
      %v1918 = vpack.c.b16 %v1900, %v1891
      %v1919 = vpack.c.b16 %v1901, %v1892
      %v1920 = vpack.c.b16 %v1902, %v1893
      %v1921 = vpack.c.b16 %v1903, %v1894
      %v1922 = vpack.c.b16 %v1904, %v1895
      %v1923 = vpack.c.b16 %v1905, %v1896
      %1942 = vmatprep.subr.bf16.mxu0 0
      %1943 = vmatpush1.bf16.msra.mxu0 %v723
      %1944 = vmatprep.subr.bf16.mxu0 0
      %1945 = vmatpush1.bf16.msra.mxu0 %v722
      %1946 = vmatprep.subr.bf16.mxu0 0
      %1947 = vmatpush1.bf16.msra.mxu0 %v721
      %1948 = vmatprep.subr.bf16.mxu0 0
      %1949 = vmatpush1.bf16.msra.mxu0 %v720
      %1950 = vmatprep.subr.bf16.mxu0 0
      %1951 = vmatpush1.bf16.msra.mxu0 %v719
      %1952 = vmatprep.subr.bf16.mxu0 0
      %1953 = vmatpush1.bf16.msra.mxu0 %v718
      %1954 = vmatprep.subr.bf16.mxu0 0
      %1955 = vmatpush1.bf16.msra.mxu0 %v717
      %1956 = vmatprep.subr.bf16.mxu0 0
      %1957 = vmatpush1.bf16.msra.mxu0 %v716
      %1958 = vmatprep.subr.bf16.mxu0 0
      %1959 = vmatpush2.bf16.msra.mxu0 %v731
      %1960 = vmatprep.subr.bf16.mxu0 0
      %1961 = vmatpush2.bf16.msra.mxu0 %v730
      %1962 = vmatprep.subr.bf16.mxu0 0
      %1963 = vmatpush2.bf16.msra.mxu0 %v729
      %1964 = vmatprep.subr.bf16.mxu0 0
      %1965 = vmatpush2.bf16.msra.mxu0 %v728
      %1966 = vmatprep.subr.bf16.mxu0 0
      %1967 = vmatpush2.bf16.msra.mxu0 %v727
      %1968 = vmatprep.subr.bf16.mxu0 0
      %1969 = vmatpush2.bf16.msra.mxu0 %v726
      %1970 = vmatprep.subr.bf16.mxu0 0
      %1971 = vmatpush2.bf16.msra.mxu0 %v725
      %1972 = vmatprep.subr.bf16.mxu0 0
      %1973 = vmatpush2.bf16.msra.mxu0 %v724
      %1974 = vmatprep.mubr.bf16.mxu0 %v1907
      %1975 = vmatmul.mubr.bf16.gmra.mxu0 %v1906
      %v1976 = vpop.f32.mrf.mxu0
      %v1977 = vadd.f32 0.0, %v1976
      %v1978 = vpop.f32.mrf.mxu0
      %v1979 = vpop.f32.mrf.mxu0
      %v1980 = vadd.f32 0.0, %v1979
      %v1981 = vpop.f32.mrf.mxu0
      %1982 = vmatprep.mubr.bf16.mxu0 %v1916
      %1983 = vmatmul.mubr.bf16.gmra.mxu0 %v1915
      %v1984 = vpop.f32.mrf.mxu0
      %v1985 = vadd.f32 0.0, %v1984
      %v1986 = vpop.f32.mrf.mxu0
      %v1987 = vpop.f32.mrf.mxu0
      %v1988 = vadd.f32 0.0, %v1987
      %v1989 = vpop.f32.mrf.mxu0
      %1990 = vdwg.mxu0
      %1991 = vmatprep.subr.bf16.mxu0 0
      %1992 = vmatpush1.bf16.msra.mxu0 %v739
      %1993 = vmatprep.subr.bf16.mxu0 0
      %1994 = vmatpush1.bf16.msra.mxu0 %v738
      %1995 = vmatprep.subr.bf16.mxu0 0
      %1996 = vmatpush1.bf16.msra.mxu0 %v737
      %1997 = vmatprep.subr.bf16.mxu0 0
      %1998 = vmatpush1.bf16.msra.mxu0 %v736
      %1999 = vmatprep.subr.bf16.mxu0 0
      %2000 = vmatpush1.bf16.msra.mxu0 %v735
      %2001 = vmatprep.subr.bf16.mxu0 0
      %2002 = vmatpush1.bf16.msra.mxu0 %v734
      %2003 = vmatprep.subr.bf16.mxu0 0
      %2004 = vmatpush1.bf16.msra.mxu0 %v733
      %2005 = vmatprep.subr.bf16.mxu0 0
      %2006 = vmatpush1.bf16.msra.mxu0 %v732
      %2007 = vmatprep.subr.bf16.mxu0 0
      %2008 = vmatpush2.bf16.msra.mxu0 %v747
      %2009 = vmatprep.subr.bf16.mxu0 0
      %2010 = vmatpush2.bf16.msra.mxu0 %v746
      %2011 = vmatprep.subr.bf16.mxu0 0
      %2012 = vmatpush2.bf16.msra.mxu0 %v745
      %2013 = vmatprep.subr.bf16.mxu0 0
      %2014 = vmatpush2.bf16.msra.mxu0 %v744
      %2015 = vmatprep.subr.bf16.mxu0 0
      %2016 = vmatpush2.bf16.msra.mxu0 %v743
      %2017 = vmatprep.subr.bf16.mxu0 0
      %2018 = vmatpush2.bf16.msra.mxu0 %v742
      %2019 = vmatprep.subr.bf16.mxu0 0
      %2020 = vmatpush2.bf16.msra.mxu0 %v741
      %2021 = vmatprep.subr.bf16.mxu0 0
      %2022 = vmatpush2.bf16.msra.mxu0 %v740
      %2023 = vmatprep.mubr.bf16.mxu0 %v1909
      %2024 = vmatmul.mubr.bf16.gmra.mxu0 %v1908
      %v2025 = vpop.f32.mrf.mxu0
      %v2026 = vadd.f32 %v1977, %v2025
      %v2027 = vpop.f32.mrf.mxu0
      %v2028 = vpop.f32.mrf.mxu0
      %v2029 = vadd.f32 %v1980, %v2028
      %v2030 = vpop.f32.mrf.mxu0
      %2031 = vmatprep.mubr.bf16.mxu0 %v1918
      %2032 = vmatmul.mubr.bf16.gmra.mxu0 %v1917
      %v2033 = vpop.f32.mrf.mxu0
      %v2034 = vadd.f32 %v1985, %v2033
      %v2035 = vpop.f32.mrf.mxu0
      %v2036 = vpop.f32.mrf.mxu0
      %v2037 = vadd.f32 %v1988, %v2036
      %v2038 = vpop.f32.mrf.mxu0
      %2039 = vdwg.mxu0
      %2040 = vmatprep.subr.bf16.mxu0 0
      %2041 = vmatpush1.bf16.msra.mxu0 %v755
      %2042 = vmatprep.subr.bf16.mxu0 0
      %2043 = vmatpush1.bf16.msra.mxu0 %v754
      %2044 = vmatprep.subr.bf16.mxu0 0
      %2045 = vmatpush1.bf16.msra.mxu0 %v753
      %2046 = vmatprep.subr.bf16.mxu0 0
      %2047 = vmatpush1.bf16.msra.mxu0 %v752
      %2048 = vmatprep.subr.bf16.mxu0 0
      %2049 = vmatpush1.bf16.msra.mxu0 %v751
      %2050 = vmatprep.subr.bf16.mxu0 0
      %2051 = vmatpush1.bf16.msra.mxu0 %v750
      %2052 = vmatprep.subr.bf16.mxu0 0
      %2053 = vmatpush1.bf16.msra.mxu0 %v749
      %2054 = vmatprep.subr.bf16.mxu0 0
      %2055 = vmatpush1.bf16.msra.mxu0 %v748
      %2056 = vmatprep.subr.bf16.mxu0 0
      %2057 = vmatpush2.bf16.msra.mxu0 %v763
      %2058 = vmatprep.subr.bf16.mxu0 0
      %2059 = vmatpush2.bf16.msra.mxu0 %v762
      %2060 = vmatprep.subr.bf16.mxu0 0
      %2061 = vmatpush2.bf16.msra.mxu0 %v761
      %2062 = vmatprep.subr.bf16.mxu0 0
      %2063 = vmatpush2.bf16.msra.mxu0 %v760
      %2064 = vmatprep.subr.bf16.mxu0 0
      %2065 = vmatpush2.bf16.msra.mxu0 %v759
      %2066 = vmatprep.subr.bf16.mxu0 0
      %2067 = vmatpush2.bf16.msra.mxu0 %v758
      %2068 = vmatprep.subr.bf16.mxu0 0
      %2069 = vmatpush2.bf16.msra.mxu0 %v757
      %2070 = vmatprep.subr.bf16.mxu0 0
      %2071 = vmatpush2.bf16.msra.mxu0 %v756
      %2072 = vmatprep.mubr.bf16.mxu0 %v1911
      %2073 = vmatmul.mubr.bf16.gmra.mxu0 %v1910
      %v2074 = vpop.f32.mrf.mxu0
      %v2075 = vadd.f32 %v2026, %v2074
      %v2076 = vpop.f32.mrf.mxu0
      %v2077 = vpop.f32.mrf.mxu0
      %v2078 = vadd.f32 %v2029, %v2077
      %v2079 = vpop.f32.mrf.mxu0
      %2080 = vmatprep.mubr.bf16.mxu0 %v1920
      %2081 = vmatmul.mubr.bf16.gmra.mxu0 %v1919
      %v2082 = vpop.f32.mrf.mxu0
      %v2083 = vadd.f32 %v2034, %v2082
      %v2084 = vpop.f32.mrf.mxu0
      %v2085 = vpop.f32.mrf.mxu0
      %v2086 = vadd.f32 %v2037, %v2085
      %v2087 = vpop.f32.mrf.mxu0
      %2088 = vdwg.mxu0
      %2089 = vmatprep.subr.bf16.mxu0 0
      %2090 = vmatpush1.bf16.msra.mxu0 %v771
      %2091 = vmatprep.subr.bf16.mxu0 0
      %2092 = vmatpush1.bf16.msra.mxu0 %v770
      %2093 = vmatprep.subr.bf16.mxu0 0
      %2094 = vmatpush1.bf16.msra.mxu0 %v769
      %2095 = vmatprep.subr.bf16.mxu0 0
      %2096 = vmatpush1.bf16.msra.mxu0 %v768
      %2097 = vmatprep.subr.bf16.mxu0 0
      %2098 = vmatpush1.bf16.msra.mxu0 %v767
      %2099 = vmatprep.subr.bf16.mxu0 0
      %2100 = vmatpush1.bf16.msra.mxu0 %v766
      %2101 = vmatprep.subr.bf16.mxu0 0
      %2102 = vmatpush1.bf16.msra.mxu0 %v765
      %2103 = vmatprep.subr.bf16.mxu0 0
      %2104 = vmatpush1.bf16.msra.mxu0 %v764
      %2105 = vmatprep.subr.bf16.mxu0 0
      %2106 = vmatpush2.bf16.msra.mxu0 %v779
      %2107 = vmatprep.subr.bf16.mxu0 0
      %2108 = vmatpush2.bf16.msra.mxu0 %v778
      %2109 = vmatprep.subr.bf16.mxu0 0
      %2110 = vmatpush2.bf16.msra.mxu0 %v777
      %2111 = vmatprep.subr.bf16.mxu0 0
      %2112 = vmatpush2.bf16.msra.mxu0 %v776
      %2113 = vmatprep.subr.bf16.mxu0 0
      %2114 = vmatpush2.bf16.msra.mxu0 %v775
      %2115 = vmatprep.subr.bf16.mxu0 0
      %2116 = vmatpush2.bf16.msra.mxu0 %v774
      %2117 = vmatprep.subr.bf16.mxu0 0
      %2118 = vmatpush2.bf16.msra.mxu0 %v773
      %2119 = vmatprep.subr.bf16.mxu0 0
      %2120 = vmatpush2.bf16.msra.mxu0 %v772
      %2121 = vmatprep.mubr.bf16.mxu0 %v1913
      %2122 = vmatmul.mubr.bf16.gmra.mxu0 %v1912
      %v2123 = vpop.f32.mrf.mxu0
      %v2124 = vadd.f32 %v2075, %v2123
      %v2125 = vpop.f32.mrf.mxu0
      %v2126 = vpop.f32.mrf.mxu0
      %v2127 = vadd.f32 %v2078, %v2126
      %v2128 = vpop.f32.mrf.mxu0
      %2129 = vmatprep.mubr.bf16.mxu0 %v1922
      %2130 = vmatmul.mubr.bf16.gmra.mxu0 %v1921
      %v2131 = vpop.f32.mrf.mxu0
      %v2132 = vadd.f32 %v2083, %v2131
      %v2133 = vpop.f32.mrf.mxu0
      %v2134 = vpop.f32.mrf.mxu0
      %v2135 = vadd.f32 %v2086, %v2134
      %v2136 = vpop.f32.mrf.mxu0
      %2137 = vdwg.mxu0
      %2138 = vmatprep.subr.bf16.mxu0 0
      %2139 = vmatpush1.bf16.msra.mxu0 %v787
      %2140 = vmatprep.subr.bf16.mxu0 0
      %2141 = vmatpush1.bf16.msra.mxu0 %v786
      %2142 = vmatprep.subr.bf16.mxu0 0
      %2143 = vmatpush1.bf16.msra.mxu0 %v785
      %2144 = vmatprep.subr.bf16.mxu0 0
      %2145 = vmatpush1.bf16.msra.mxu0 %v784
      %2146 = vmatprep.subr.bf16.mxu0 0
      %2147 = vmatpush1.bf16.msra.mxu0 %v783
      %2148 = vmatprep.subr.bf16.mxu0 0
      %2149 = vmatpush1.bf16.msra.mxu0 %v782
      %2150 = vmatprep.subr.bf16.mxu0 0
      %2151 = vmatpush1.bf16.msra.mxu0 %v781
      %2152 = vmatprep.subr.bf16.mxu0 0
      %2153 = vmatpush1.bf16.msra.mxu0 %v780
      %2154 = vmatprep.subr.bf16.mxu0 0
      %2155 = vmatpush2.bf16.msra.mxu0 0
      %2156 = vmatprep.subr.bf16.mxu0 0
      %2157 = vmatpush2.bf16.msra.mxu0 0
      %2158 = vmatprep.subr.bf16.mxu0 0
      %2159 = vmatpush2.bf16.msra.mxu0 0
      %2160 = vmatprep.subr.bf16.mxu0 0
      %2161 = vmatpush2.bf16.msra.mxu0 0
      %2162 = vmatprep.subr.bf16.mxu0 0
      %2163 = vmatpush2.bf16.msra.mxu0 0
      %2164 = vmatprep.subr.bf16.mxu0 0
      %2165 = vmatpush2.bf16.msra.mxu0 0
      %2166 = vmatprep.subr.bf16.mxu0 0
      %2167 = vmatpush2.bf16.msra.mxu0 0
      %2168 = vmatprep.subr.bf16.mxu0 0
      %2169 = vmatpush2.bf16.msra.mxu0 0
      %2170 = vmatprep.mubr.bf16.mxu0 0
      %2171 = vmatmul.mubr.bf16.gmra.mxu0 %v1914
      %v2172 = vpop.f32.mrf.mxu0
      %v2173 = vadd.f32 %v2124, %v2172
      %v2174 = vpop.f32.mrf.mxu0
      %v2175 = vpop.f32.mrf.mxu0
      %v2176 = vadd.f32 %v2127, %v2175
      %v2177 = vpop.f32.mrf.mxu0
      %2178 = vmatprep.mubr.bf16.mxu0 0
      %2179 = vmatmul.mubr.bf16.gmra.mxu0 %v1923
      %v2180 = vpop.f32.mrf.mxu0
      %v2181 = vadd.f32 %v2132, %v2180
      %v2182 = vpop.f32.mrf.mxu0
      %v2183 = vpop.f32.mrf.mxu0
      %v2184 = vadd.f32 %v2135, %v2183
      %v2185 = vpop.f32.mrf.mxu0
      %2186 = vdwg.mxu0
      %v2187 = vmax.f32 %v1825, %v2173
      %v2188 = vmax.f32 %v1826, %v2176
      %v2189 = vmax.f32 %v1827, %v2181
      %v2190 = vmax.f32 %v1828, %v2184
      %v2191 = vld [vmem:[%s2] sm:$0x1]
      %v2193 = vlaneseq
      %v2194 = vshrl.u32 %v2193, 7
      %v2195 = vsub.s32 0, %v2194
      %v2196 = vrot.slane %v2191, %v2195
      %v2198 = vadd.f32 %v2187, %v2196
      %v2199 = vadd.f32 %v2188, %v2196
      %v2200 = vadd.f32 %v2189, %v2196
      %v2201 = vadd.f32 %v2190, %v2196
      %v2202 = vmax.f32 %v2198, 0.0
      %v2203 = vmax.f32 %v2199, 0.0
      %v2204 = vmax.f32 %v2200, 0.0
      %v2205 = vmax.f32 %v2201, 0.0
      %vm2206 = vcmask 523264
      %2207 = vst.msk [vmem:[%s170] sm:$0xff] %vm2206, %v2202
      %2208 = vst.msk [vmem:[%s170 + $0x8] sm:$0xff] %vm2206, %v2203
      %2209 = vst.msk [vmem:[%s170 + $0x10] sm:$0xff] %vm2206, %v2204
      %vm2210 = vcmask 516096
      %2211 = vst.msk [vmem:[%s170 + $0x18] sm:$0x1] %vm2210, %v2205
      %p2212 = scmp.lt.s32.totalorder %s14, 1
      %s2213 = scalar_select %p2212, %s14, 1
      %s2214 = smul.addr %s2213, 4
      %s2215 = smul.addr %s2214, 8
      %s2216 = scalar_lea.vmem %s3, %s2215
      // Predicated region
      $region33: #{pytorch_cnn_forward.4} parent=31 // pred_check
        %p2217 = pneg %p100
      $region34: #{pytorch_cnn_forward.4} parent=31 // pred_check_branch
        %2219 = sbr.rel (%p2217) target = $region36
      $region35: #{pytorch_cnn_forward.4} parent=31 // pred_region
        _
      $region36: #{pytorch_cnn_forward.4} parent=31 // pred_fallthru
        _
    $region32: #{pytorch_cnn_forward.4} parent=5 // pred_fallthru
      _
    %p2220 = scmp.le.s32.totalorder 2, %s9
    // Predicated region
    $region37: #{pytorch_cnn_forward.4} parent=5 // pred_check
      %p2221 = pneg %p2220
    $region38: #{pytorch_cnn_forward.4} parent=5 // pred_check_branch
      %2223 = sbr.rel (%p2221) target = $region40
    $region39: #{pytorch_cnn_forward.4} parent=5 // pred_region
      %s2224 = ssub.s32 %s9, 2
      // Predicated region
      $region41: #{pytorch_cnn_forward.4} parent=39 // pred_check
        %p2225 = pneg %p106
      $region42: #{pytorch_cnn_forward.4} parent=39 // pred_check_branch
        %2227 = sbr.rel (%p2225) target = $region44
      $region43: #{pytorch_cnn_forward.4} parent=39 // pred_region
        %p2228 = scmp.lt.s32.totalorder %s15, 1
        %s2229 = scalar_select %p2228, %s15, 1
        %s2230 = smul.addr %s2229, 4
        %s2231 = smul.addr %s2230, 8
        %s2232 = scalar_lea.vmem %s3, %s2231
      $region44: #{pytorch_cnn_forward.4} parent=39 // pred_fallthru
        _
    $region40: #{pytorch_cnn_forward.4} parent=5 // pred_fallthru
      _
  $region6: #{pytorch_cnn_forward.4} parent=0 // loop_footer
    %s13 = sadd.s32 1, %s9
  $region7: #{pytorch_cnn_forward.4} parent=0 // loop_footer_branch
    %8 = sbr.rel target = $region3
  $region8: #{pytorch_cnn_forward.4} parent=0 // loop_exit
    _

// kernel: pytorch_cnn_forward.5
$region0: #{pytorch_cnn_forward.5}
  #allocation0 [shape = 'u32[]', space=smem, size = 0x4, offset = 0x4, fixed_abs, tag = 'smem constant byte address 0x4 - core index']
  #allocation1 [shape = 'u32[144,128]{1,0:T(1,128)}', space=vmem, size = 0x12000, scoped, tag = 'internal scratch']
  %s0 = inlined_call_operand.vmem [shape: bf16[2,1600], index: 0, kind: input, shape index: {}]
  %s1 = inlined_call_operand.vmem [shape: bf16[1600,128], index: 1, kind: input, shape index: {}]
  %s2 = inlined_call_operand.vmem [shape: f32[1,128], index: 2, kind: input, shape index: {}]
  %s3 = inlined_call_operand.vmem [shape: f32[128,10], index: 3, kind: input, shape index: {}]
  %s4 = inlined_call_operand.vmem [shape: f32[1,10], index: 4, kind: input, shape index: {}]
  %s5 = inlined_call_operand.hbm [shape: f32[2,10], index: 5, kind: output, shape index: {}]
  %s6 = sld [smem:[#allocation0]]
  $region30: #{pytorch_cnn_forward.5} parent=0
    _
  %s8 = ssub.s32 1, %s6
  %s9 = scalar_select 0, %s8, %s6
  $region1: #{pytorch_cnn_forward.5} parent=0
    #allocation2 [shape = 'u8[1024]{0}', space=vmem, size = 0x400, scoped, tag = 'output window, operand 0, single buffered']
    #allocation3 [shape = 's32[1]{0}', space=sflag, size = 0x4, scoped, tag = 'scoped memory for pytorch_cnn_forward.5']
    %10 = vsyncpa [#allocation3], 0
    // Predicated region
    $region2: #{pytorch_cnn_forward.5} parent=1 // pred_check
      _
    $region3: #{pytorch_cnn_forward.5} parent=1 // pred_check_branch
      %12 = sbr.rel (0) target = $region5
    $region4: #{pytorch_cnn_forward.5} parent=1 // pred_region
      _
    $region5: #{pytorch_cnn_forward.5} parent=1 // pred_fallthru
      _
    // Predicated region
    $region6: #{pytorch_cnn_forward.5} parent=1 // pred_check
      _
    $region7: #{pytorch_cnn_forward.5} parent=1 // pred_check_branch
      %14 = sbr.rel (0) target = $region9
    $region8: #{pytorch_cnn_forward.5} parent=1 // pred_region
      _
    $region9: #{pytorch_cnn_forward.5} parent=1 // pred_fallthru
      _
    // Predicated region
    $region10: #{pytorch_cnn_forward.5} parent=1 // pred_check
      _
    $region11: #{pytorch_cnn_forward.5} parent=1 // pred_check_branch
      %16 = sbr.rel (0) target = $region13
    $region12: #{pytorch_cnn_forward.5} parent=1 // pred_region
      _
    $region13: #{pytorch_cnn_forward.5} parent=1 // pred_fallthru
      _
    // Predicated region
    $region14: #{pytorch_cnn_forward.5} parent=1 // pred_check
      _
    $region15: #{pytorch_cnn_forward.5} parent=1 // pred_check_branch
      %18 = sbr.rel (0) target = $region17
    $region16: #{pytorch_cnn_forward.5} parent=1 // pred_region
      _
    $region17: #{pytorch_cnn_forward.5} parent=1 // pred_fallthru
      _
    // Predicated region
    $region18: #{pytorch_cnn_forward.5} parent=1 // pred_check
      _
    $region19: #{pytorch_cnn_forward.5} parent=1 // pred_check_branch
      %20 = sbr.rel (0) target = $region21
    $region20: #{pytorch_cnn_forward.5} parent=1 // pred_region
      _
    $region21: #{pytorch_cnn_forward.5} parent=1 // pred_fallthru
      _
    %v22 = vld [vmem:[%s0] sm:$0xff]
    %v23 = vld [vmem:[%s0 + $0x8] sm:$0x1f]
    %v24 = vld [vmem:[%s1] sm:$0xf]
    %v25 = vld [vmem:[%s1 + $0x4] sm:$0xf]
    %v26 = vld [vmem:[%s1 + $0x8] sm:$0xf]
    %v27 = vld [vmem:[%s1 + $0xc] sm:$0xf]
    %v28 = vld [vmem:[%s1 + $0x10] sm:$0xf]
    %v29 = vld [vmem:[%s1 + $0x14] sm:$0xf]
    %v30 = vld [vmem:[%s1 + $0x18] sm:$0xf]
    %v31 = vld [vmem:[%s1 + $0x1c] sm:$0xf]
    %v32 = vld [vmem:[%s1 + $0x20] sm:$0xf]
    %v33 = vld [vmem:[%s1 + $0x24] sm:$0xf]
    %v34 = vld [vmem:[%s1 + $0x28] sm:$0xf]
    %v35 = vld [vmem:[%s1 + $0x2c] sm:$0xf]
    %v36 = vld [vmem:[%s1 + $0x30] sm:$0xf]
    %v37 = vld [vmem:[%s1 + $0x34] sm:$0xf]
    %v38 = vld [vmem:[%s1 + $0x38] sm:$0xf]
    %v39 = vld [vmem:[%s1 + $0x3c] sm:$0xf]
    %v40 = vld [vmem:[%s1 + $0x40] sm:$0xf]
    %v41 = vld [vmem:[%s1 + $0x44] sm:$0xf]
    %v42 = vld [vmem:[%s1 + $0x48] sm:$0xf]
    %v43 = vld [vmem:[%s1 + $0x4c] sm:$0xf]
    %v44 = vld [vmem:[%s1 + $0x50] sm:$0xf]
    %v45 = vld [vmem:[%s1 + $0x54] sm:$0xf]
    %v46 = vld [vmem:[%s1 + $0x58] sm:$0xf]
    %v47 = vld [vmem:[%s1 + $0x5c] sm:$0xf]
    %v48 = vld [vmem:[%s1 + $0x60] sm:$0xf]
    %v49 = vld [vmem:[%s1 + $0x64] sm:$0xf]
    %v50 = vld [vmem:[%s1 + $0x68] sm:$0xf]
    %v51 = vld [vmem:[%s1 + $0x6c] sm:$0xf]
    %v52 = vld [vmem:[%s1 + $0x70] sm:$0xf]
    %v53 = vld [vmem:[%s1 + $0x74] sm:$0xf]
    %v54 = vld [vmem:[%s1 + $0x78] sm:$0xf]
    %v55 = vld [vmem:[%s1 + $0x7c] sm:$0xf]
    %v56 = vld [vmem:[%s1 + $0x80] sm:$0xf]
    %v57 = vld [vmem:[%s1 + $0x84] sm:$0xf]
    %v58 = vld [vmem:[%s1 + $0x88] sm:$0xf]
    %v59 = vld [vmem:[%s1 + $0x8c] sm:$0xf]
    %v60 = vld [vmem:[%s1 + $0x90] sm:$0xf]
    %v61 = vld [vmem:[%s1 + $0x94] sm:$0xf]
    %v62 = vld [vmem:[%s1 + $0x98] sm:$0xf]
    %v63 = vld [vmem:[%s1 + $0x9c] sm:$0xf]
    %v64 = vld [vmem:[%s1 + $0xa0] sm:$0xf]
    %v65 = vld [vmem:[%s1 + $0xa4] sm:$0xf]
    %v66 = vld [vmem:[%s1 + $0xa8] sm:$0xf]
    %v67 = vld [vmem:[%s1 + $0xac] sm:$0xf]
    %v68 = vld [vmem:[%s1 + $0xb0] sm:$0xf]
    %v69 = vld [vmem:[%s1 + $0xb4] sm:$0xf]
    %v70 = vld [vmem:[%s1 + $0xb8] sm:$0xf]
    %v71 = vld [vmem:[%s1 + $0xbc] sm:$0xf]
    %v72 = vld [vmem:[%s1 + $0xc0] sm:$0xf]
    %v73 = vld [vmem:[%s1 + $0xc4] sm:$0xf]
    %v74 = vld [vmem:[%s1 + $0xc8] sm:$0xf]
    %v75 = vld [vmem:[%s1 + $0xcc] sm:$0xf]
    %v76 = vld [vmem:[%s1 + $0xd0] sm:$0xf]
    %v77 = vld [vmem:[%s1 + $0xd4] sm:$0xf]
    %v78 = vld [vmem:[%s1 + $0xd8] sm:$0xf]
    %v79 = vld [vmem:[%s1 + $0xdc] sm:$0xf]
    %v80 = vld [vmem:[%s1 + $0xe0] sm:$0xf]
    %v81 = vld [vmem:[%s1 + $0xe4] sm:$0xf]
    %v82 = vld [vmem:[%s1 + $0xe8] sm:$0xf]
    %v83 = vld [vmem:[%s1 + $0xec] sm:$0xf]
    %v84 = vld [vmem:[%s1 + $0xf0] sm:$0xf]
    %v85 = vld [vmem:[%s1 + $0xf4] sm:$0xf]
    %v86 = vld [vmem:[%s1 + $0xf8] sm:$0xf]
    %v87 = vld [vmem:[%s1 + $0xfc] sm:$0xf]
    %v88 = vld [vmem:[%s1 + $0x100] sm:$0xf]
    %v89 = vld [vmem:[%s1 + $0x104] sm:$0xf]
    %v90 = vld [vmem:[%s1 + $0x108] sm:$0xf]
    %v91 = vld [vmem:[%s1 + $0x10c] sm:$0xf]
    %v92 = vld [vmem:[%s1 + $0x110] sm:$0xf]
    %v93 = vld [vmem:[%s1 + $0x114] sm:$0xf]
    %v94 = vld [vmem:[%s1 + $0x118] sm:$0xf]
    %v95 = vld [vmem:[%s1 + $0x11c] sm:$0xf]
    %v96 = vld [vmem:[%s1 + $0x120] sm:$0xf]
    %v97 = vld [vmem:[%s1 + $0x124] sm:$0xf]
    %v98 = vld [vmem:[%s1 + $0x128] sm:$0xf]
    %v99 = vld [vmem:[%s1 + $0x12c] sm:$0xf]
    %v100 = vld [vmem:[%s1 + $0x130] sm:$0xf]
    %v101 = vld [vmem:[%s1 + $0x134] sm:$0xf]
    %v102 = vld [vmem:[%s1 + $0x138] sm:$0xf]
    %v103 = vld [vmem:[%s1 + $0x13c] sm:$0xf]
    %v104 = vld [vmem:[%s1 + $0x140] sm:$0xf]
    %v105 = vld [vmem:[%s1 + $0x144] sm:$0xf]
    %v106 = vld [vmem:[%s1 + $0x148] sm:$0xf]
    %v107 = vld [vmem:[%s1 + $0x14c] sm:$0xf]
    %v108 = vld [vmem:[%s1 + $0x150] sm:$0xf]
    %v109 = vld [vmem:[%s1 + $0x154] sm:$0xf]
    %v110 = vld [vmem:[%s1 + $0x158] sm:$0xf]
    %v111 = vld [vmem:[%s1 + $0x15c] sm:$0xf]
    %v112 = vld [vmem:[%s1 + $0x160] sm:$0xf]
    %v113 = vld [vmem:[%s1 + $0x164] sm:$0xf]
    %v114 = vld [vmem:[%s1 + $0x168] sm:$0xf]
    %v115 = vld [vmem:[%s1 + $0x16c] sm:$0xf]
    %v116 = vld [vmem:[%s1 + $0x170] sm:$0xf]
    %v117 = vld [vmem:[%s1 + $0x174] sm:$0xf]
    %v118 = vld [vmem:[%s1 + $0x178] sm:$0xf]
    %v119 = vld [vmem:[%s1 + $0x17c] sm:$0xf]
    %v120 = vld [vmem:[%s1 + $0x180] sm:$0xf]
    %v121 = vld [vmem:[%s1 + $0x184] sm:$0xf]
    %v122 = vld [vmem:[%s1 + $0x188] sm:$0xf]
    %v123 = vld [vmem:[%s1 + $0x18c] sm:$0xf]
    %v124 = vld [vmem:[%s1 + $0x190] sm:$0xf]
    %v125 = vld [vmem:[%s1 + $0x194] sm:$0xf]
    %v126 = vld [vmem:[%s1 + $0x198] sm:$0xf]
    %v127 = vld [vmem:[%s1 + $0x19c] sm:$0xf]
    %v128 = vld [vmem:[%s1 + $0x1a0] sm:$0xf]
    %v129 = vld [vmem:[%s1 + $0x1a4] sm:$0xf]
    %v130 = vld [vmem:[%s1 + $0x1a8] sm:$0xf]
    %v131 = vld [vmem:[%s1 + $0x1ac] sm:$0xf]
    %v132 = vld [vmem:[%s1 + $0x1b0] sm:$0xf]
    %v133 = vld [vmem:[%s1 + $0x1b4] sm:$0xf]
    %v134 = vld [vmem:[%s1 + $0x1b8] sm:$0xf]
    %v135 = vld [vmem:[%s1 + $0x1bc] sm:$0xf]
    %v136 = vld [vmem:[%s1 + $0x1c0] sm:$0xf]
    %v137 = vld [vmem:[%s1 + $0x1c4] sm:$0xf]
    %v138 = vld [vmem:[%s1 + $0x1c8] sm:$0xf]
    %v139 = vld [vmem:[%s1 + $0x1cc] sm:$0xf]
    %v140 = vld [vmem:[%s1 + $0x1d0] sm:$0xf]
    %v141 = vld [vmem:[%s1 + $0x1d4] sm:$0xf]
    %v142 = vld [vmem:[%s1 + $0x1d8] sm:$0xf]
    %v143 = vld [vmem:[%s1 + $0x1dc] sm:$0xf]
    %v144 = vld [vmem:[%s1 + $0x1e0] sm:$0xf]
    %v145 = vld [vmem:[%s1 + $0x1e4] sm:$0xf]
    %v146 = vld [vmem:[%s1 + $0x1e8] sm:$0xf]
    %v147 = vld [vmem:[%s1 + $0x1ec] sm:$0xf]
    %v148 = vld [vmem:[%s1 + $0x1f0] sm:$0xf]
    %v149 = vld [vmem:[%s1 + $0x1f4] sm:$0xf]
    %v150 = vld [vmem:[%s1 + $0x1f8] sm:$0xf]
    %v151 = vld [vmem:[%s1 + $0x1fc] sm:$0xf]
    %v152 = vld [vmem:[%s1 + $0x200] sm:$0xf]
    %v153 = vld [vmem:[%s1 + $0x204] sm:$0xf]
    %v154 = vld [vmem:[%s1 + $0x208] sm:$0xf]
    %v155 = vld [vmem:[%s1 + $0x20c] sm:$0xf]
    %v156 = vld [vmem:[%s1 + $0x210] sm:$0xf]
    %v157 = vld [vmem:[%s1 + $0x214] sm:$0xf]
    %v158 = vld [vmem:[%s1 + $0x218] sm:$0xf]
    %v159 = vld [vmem:[%s1 + $0x21c] sm:$0xf]
    %v160 = vld [vmem:[%s1 + $0x220] sm:$0xf]
    %v161 = vld [vmem:[%s1 + $0x224] sm:$0xf]
    %v162 = vld [vmem:[%s1 + $0x228] sm:$0xf]
    %v163 = vld [vmem:[%s1 + $0x22c] sm:$0xf]
    %v164 = vld [vmem:[%s1 + $0x230] sm:$0xf]
    %v165 = vld [vmem:[%s1 + $0x234] sm:$0xf]
    %v166 = vld [vmem:[%s1 + $0x238] sm:$0xf]
    %v167 = vld [vmem:[%s1 + $0x23c] sm:$0xf]
    %v168 = vld [vmem:[%s1 + $0x240] sm:$0xf]
    %v169 = vld [vmem:[%s1 + $0x244] sm:$0xf]
    %v170 = vld [vmem:[%s1 + $0x248] sm:$0xf]
    %v171 = vld [vmem:[%s1 + $0x24c] sm:$0xf]
    %v172 = vld [vmem:[%s1 + $0x250] sm:$0xf]
    %v173 = vld [vmem:[%s1 + $0x254] sm:$0xf]
    %v174 = vld [vmem:[%s1 + $0x258] sm:$0xf]
    %v175 = vld [vmem:[%s1 + $0x25c] sm:$0xf]
    %v176 = vld [vmem:[%s1 + $0x260] sm:$0xf]
    %v177 = vld [vmem:[%s1 + $0x264] sm:$0xf]
    %v178 = vld [vmem:[%s1 + $0x268] sm:$0xf]
    %v179 = vld [vmem:[%s1 + $0x26c] sm:$0xf]
    %v180 = vld [vmem:[%s1 + $0x270] sm:$0xf]
    %v181 = vld [vmem:[%s1 + $0x274] sm:$0xf]
    %v182 = vld [vmem:[%s1 + $0x278] sm:$0xf]
    %v183 = vld [vmem:[%s1 + $0x27c] sm:$0xf]
    %v184 = vld [vmem:[%s1 + $0x280] sm:$0xf]
    %v185 = vld [vmem:[%s1 + $0x284] sm:$0xf]
    %v186 = vld [vmem:[%s1 + $0x288] sm:$0xf]
    %v187 = vld [vmem:[%s1 + $0x28c] sm:$0xf]
    %v188 = vld [vmem:[%s1 + $0x290] sm:$0xf]
    %v189 = vld [vmem:[%s1 + $0x294] sm:$0xf]
    %v190 = vld [vmem:[%s1 + $0x298] sm:$0xf]
    %v191 = vld [vmem:[%s1 + $0x29c] sm:$0xf]
    %v192 = vld [vmem:[%s1 + $0x2a0] sm:$0xf]
    %v193 = vld [vmem:[%s1 + $0x2a4] sm:$0xf]
    %v194 = vld [vmem:[%s1 + $0x2a8] sm:$0xf]
    %v195 = vld [vmem:[%s1 + $0x2ac] sm:$0xf]
    %v196 = vld [vmem:[%s1 + $0x2b0] sm:$0xf]
    %v197 = vld [vmem:[%s1 + $0x2b4] sm:$0xf]
    %v198 = vld [vmem:[%s1 + $0x2b8] sm:$0xf]
    %v199 = vld [vmem:[%s1 + $0x2bc] sm:$0xf]
    %v200 = vld [vmem:[%s1 + $0x2c0] sm:$0xf]
    %v201 = vld [vmem:[%s1 + $0x2c4] sm:$0xf]
    %v202 = vld [vmem:[%s1 + $0x2c8] sm:$0xf]
    %v203 = vld [vmem:[%s1 + $0x2cc] sm:$0xf]
    %v204 = vld [vmem:[%s1 + $0x2d0] sm:$0xf]
    %v205 = vld [vmem:[%s1 + $0x2d4] sm:$0xf]
    %v206 = vld [vmem:[%s1 + $0x2d8] sm:$0xf]
    %v207 = vld [vmem:[%s1 + $0x2dc] sm:$0xf]
    %v208 = vld [vmem:[%s1 + $0x2e0] sm:$0xf]
    %v209 = vld [vmem:[%s1 + $0x2e4] sm:$0xf]
    %v210 = vld [vmem:[%s1 + $0x2e8] sm:$0xf]
    %v211 = vld [vmem:[%s1 + $0x2ec] sm:$0xf]
    %v212 = vld [vmem:[%s1 + $0x2f0] sm:$0xf]
    %v213 = vld [vmem:[%s1 + $0x2f4] sm:$0xf]
    %v214 = vld [vmem:[%s1 + $0x2f8] sm:$0xf]
    %v215 = vld [vmem:[%s1 + $0x2fc] sm:$0xf]
    %v216 = vld [vmem:[%s1 + $0x300] sm:$0xf]
    %v217 = vld [vmem:[%s1 + $0x304] sm:$0xf]
    %v218 = vld [vmem:[%s1 + $0x308] sm:$0xf]
    %v219 = vld [vmem:[%s1 + $0x30c] sm:$0xf]
    %v220 = vld [vmem:[%s1 + $0x310] sm:$0xf]
    %v221 = vld [vmem:[%s1 + $0x314] sm:$0xf]
    %v222 = vld [vmem:[%s1 + $0x318] sm:$0xf]
    %v223 = vld [vmem:[%s1 + $0x31c] sm:$0xf]
    %v224 = vld [vmem:[%s2] sm:$0x1]
    %v226 = vlaneseq
    %v227 = vshrl.u32 %v226, 7
    %v228 = vsub.s32 0, %v227
    %v229 = vrot.slane %v224, %v228
    %v233 = vcombine.high %v22, %v22
    %v235 = vunpack.c.l.s4 1966171168
    %v236 = vunpack.c.0.s8 %v235
    %v237 = vlaneseq
    %v238 = vshrl.u32 %v237, 7
    %v239 = vsub.s32 %v236, %v238
    %v240 = vrot.slane %v22, %v239
    %v242 = vunpack.c.l.s4 1966171168
    %v243 = vunpack.c.0.s8 %v242
    %v244 = vlaneseq
    %v245 = vshrl.u32 %v244, 7
    %v246 = vsub.s32 %v243, %v245
    %v247 = vrot.slane %v233, %v246
    %v248 = vcombine.high %v240, %v240
    %v249 = vcombine.high %v247, %v247
    %v251 = vunpack.c.l.s4 1966171168
    %v252 = vunpack.c.0.s8 %v251
    %v253 = vlaneseq
    %v254 = vshrl.u32 %v253, 7
    %v255 = vsub.s32 %v252, %v254
    %v256 = vrot.slane %v240, %v255
    %v258 = vunpack.c.l.s4 1966171168
    %v259 = vunpack.c.0.s8 %v258
    %v260 = vlaneseq
    %v261 = vshrl.u32 %v260, 7
    %v262 = vsub.s32 %v259, %v261
    %v263 = vrot.slane %v247, %v262
    %v265 = vunpack.c.l.s4 1966171168
    %v266 = vunpack.c.0.s8 %v265
    %v267 = vlaneseq
    %v268 = vshrl.u32 %v267, 7
    %v269 = vsub.s32 %v266, %v268
    %v270 = vrot.slane %v248, %v269
    %v272 = vunpack.c.l.s4 1966171168
    %v273 = vunpack.c.0.s8 %v272
    %v274 = vlaneseq
    %v275 = vshrl.u32 %v274, 7
    %v276 = vsub.s32 %v273, %v275
    %v277 = vrot.slane %v249, %v276
    %v278 = vcombine.high %v256, %v256
    %v279 = vcombine.high %v263, %v263
    %v280 = vcombine.high %v270, %v270
    %v281 = vcombine.high %v277, %v277
    %v282 = vcombine.high %v23, %v23
    %v284 = vunpack.c.l.s4 1966171168
    %v285 = vunpack.c.0.s8 %v284
    %v286 = vlaneseq
    %v287 = vshrl.u32 %v286, 7
    %v288 = vsub.s32 %v285, %v287
    %v289 = vrot.slane %v23, %v288
    %v291 = vunpack.c.l.s4 1966171168
    %v292 = vunpack.c.0.s8 %v291
    %v293 = vlaneseq
    %v294 = vshrl.u32 %v293, 7
    %v295 = vsub.s32 %v292, %v294
    %v296 = vrot.slane %v282, %v295
    %v297 = vcombine.high %v289, %v289
    %v299 = vunpack.c.l.s4 1966171168
    %v300 = vunpack.c.0.s8 %v299
    %v301 = vlaneseq
    %v302 = vshrl.u32 %v301, 7
    %v303 = vsub.s32 %v300, %v302
    %v304 = vrot.slane %v289, %v303
    %v306 = vunpack.c.l.s4 1966171168
    %v307 = vunpack.c.0.s8 %v306
    %v308 = vlaneseq
    %v309 = vshrl.u32 %v308, 7
    %v310 = vsub.s32 %v307, %v309
    %v311 = vrot.slane %v296, %v310
    %v313 = vunpack.c.l.s4 1966171168
    %v314 = vunpack.c.0.s8 %v313
    %v315 = vlaneseq
    %v316 = vshrl.u32 %v315, 7
    %v317 = vsub.s32 %v314, %v316
    %v318 = vrot.slane %v297, %v317
    %v319 = vcombine.high %v304, %v304
    %v320 = vcombine.high %v318, %v318
    %v533 = vunpack.c.l.b16 %v24
    %v534 = vunpack.c.l.b16 %v25
    %v535 = vunpack.c.l.b16 %v26
    %v536 = vunpack.c.l.b16 %v27
    %v537 = vunpack.c.l.b16 %v28
    %v538 = vunpack.c.l.b16 %v29
    %v539 = vunpack.c.l.b16 %v30
    %v540 = vunpack.c.l.b16 %v31
    %v541 = vunpack.c.l.b16 %v32
    %v542 = vunpack.c.l.b16 %v33
    %v543 = vunpack.c.l.b16 %v34
    %v544 = vunpack.c.l.b16 %v35
    %v545 = vunpack.c.l.b16 %v36
    %v546 = vunpack.c.l.b16 %v37
    %v547 = vunpack.c.l.b16 %v38
    %v548 = vunpack.c.l.b16 %v39
    %v549 = vunpack.c.l.b16 %v40
    %v550 = vunpack.c.l.b16 %v41
    %v551 = vunpack.c.l.b16 %v42
    %v552 = vunpack.c.l.b16 %v43
    %v553 = vunpack.c.l.b16 %v44
    %v554 = vunpack.c.l.b16 %v45
    %v555 = vunpack.c.l.b16 %v46
    %v556 = vunpack.c.l.b16 %v47
    %v557 = vunpack.c.l.b16 %v48
    %v558 = vunpack.c.l.b16 %v49
    %v559 = vunpack.c.l.b16 %v50
    %v560 = vunpack.c.l.b16 %v51
    %v561 = vunpack.c.l.b16 %v52
    %v562 = vunpack.c.l.b16 %v53
    %v563 = vunpack.c.l.b16 %v54
    %v564 = vunpack.c.l.b16 %v55
    %v565 = vunpack.c.l.b16 %v56
    %v566 = vunpack.c.l.b16 %v57
    %v567 = vunpack.c.l.b16 %v58
    %v568 = vunpack.c.l.b16 %v59
    %v569 = vunpack.c.l.b16 %v60
    %v570 = vunpack.c.l.b16 %v61
    %v571 = vunpack.c.l.b16 %v62
    %v572 = vunpack.c.l.b16 %v63
    %v573 = vunpack.c.l.b16 %v64
    %v574 = vunpack.c.l.b16 %v65
    %v575 = vunpack.c.l.b16 %v66
    %v576 = vunpack.c.l.b16 %v67
    %v577 = vunpack.c.l.b16 %v68
    %v578 = vunpack.c.l.b16 %v69
    %v579 = vunpack.c.l.b16 %v70
    %v580 = vunpack.c.l.b16 %v71
    %v581 = vunpack.c.l.b16 %v72
    %v582 = vunpack.c.l.b16 %v73
    %v583 = vunpack.c.l.b16 %v74
    %v584 = vunpack.c.l.b16 %v75
    %v585 = vunpack.c.l.b16 %v76
    %v586 = vunpack.c.l.b16 %v77
    %v587 = vunpack.c.l.b16 %v78
    %v588 = vunpack.c.l.b16 %v79
    %v589 = vunpack.c.l.b16 %v80
    %v590 = vunpack.c.l.b16 %v81
    %v591 = vunpack.c.l.b16 %v82
    %v592 = vunpack.c.l.b16 %v83
    %v593 = vunpack.c.l.b16 %v84
    %v594 = vunpack.c.l.b16 %v85
    %v595 = vunpack.c.l.b16 %v86
    %v596 = vunpack.c.l.b16 %v87
    %v597 = vunpack.c.l.b16 %v88
    %v598 = vunpack.c.l.b16 %v89
    %v599 = vunpack.c.l.b16 %v90
    %v600 = vunpack.c.l.b16 %v91
    %v601 = vunpack.c.l.b16 %v92
    %v602 = vunpack.c.l.b16 %v93
    %v603 = vunpack.c.l.b16 %v94
    %v604 = vunpack.c.l.b16 %v95
    %v605 = vunpack.c.l.b16 %v96
    %v606 = vunpack.c.l.b16 %v97
    %v607 = vunpack.c.l.b16 %v98
    %v608 = vunpack.c.l.b16 %v99
    %v609 = vunpack.c.l.b16 %v100
    %v610 = vunpack.c.l.b16 %v101
    %v611 = vunpack.c.l.b16 %v102
    %v612 = vunpack.c.l.b16 %v103
    %v613 = vunpack.c.l.b16 %v104
    %v614 = vunpack.c.l.b16 %v105
    %v615 = vunpack.c.l.b16 %v106
    %v616 = vunpack.c.l.b16 %v107
    %v617 = vunpack.c.l.b16 %v108
    %v618 = vunpack.c.l.b16 %v109
    %v619 = vunpack.c.l.b16 %v110
    %v620 = vunpack.c.l.b16 %v111
    %v621 = vunpack.c.l.b16 %v112
    %v622 = vunpack.c.l.b16 %v113
    %v623 = vunpack.c.l.b16 %v114
    %v624 = vunpack.c.l.b16 %v115
    %v625 = vunpack.c.l.b16 %v116
    %v626 = vunpack.c.l.b16 %v117
    %v627 = vunpack.c.l.b16 %v118
    %v628 = vunpack.c.l.b16 %v119
    %v629 = vunpack.c.l.b16 %v120
    %v630 = vunpack.c.l.b16 %v121
    %v631 = vunpack.c.l.b16 %v122
    %v632 = vunpack.c.l.b16 %v123
    %v633 = vunpack.c.l.b16 %v124
    %v634 = vunpack.c.l.b16 %v125
    %v635 = vunpack.c.l.b16 %v126
    %v636 = vunpack.c.l.b16 %v127
    %v637 = vunpack.c.l.b16 %v128
    %v638 = vunpack.c.l.b16 %v129
    %v639 = vunpack.c.l.b16 %v130
    %v640 = vunpack.c.l.b16 %v131
    %v641 = vunpack.c.l.b16 %v132
    %v642 = vunpack.c.l.b16 %v133
    %v643 = vunpack.c.l.b16 %v134
    %v644 = vunpack.c.l.b16 %v135
    %v645 = vunpack.c.l.b16 %v136
    %v646 = vunpack.c.l.b16 %v137
    %v647 = vunpack.c.l.b16 %v138
    %v648 = vunpack.c.l.b16 %v139
    %v649 = vunpack.c.l.b16 %v140
    %v650 = vunpack.c.l.b16 %v141
    %v651 = vunpack.c.l.b16 %v142
    %v652 = vunpack.c.l.b16 %v143
    %v653 = vunpack.c.l.b16 %v144
    %v654 = vunpack.c.l.b16 %v145
    %v655 = vunpack.c.l.b16 %v146
    %v656 = vunpack.c.l.b16 %v147
    %v657 = vunpack.c.l.b16 %v148
    %v658 = vunpack.c.l.b16 %v149
    %v659 = vunpack.c.l.b16 %v150
    %v660 = vunpack.c.l.b16 %v151
    %v661 = vunpack.c.l.b16 %v152
    %v662 = vunpack.c.l.b16 %v153
    %v663 = vunpack.c.l.b16 %v154
    %v664 = vunpack.c.l.b16 %v155
    %v665 = vunpack.c.l.b16 %v156
    %v666 = vunpack.c.l.b16 %v157
    %v667 = vunpack.c.l.b16 %v158
    %v668 = vunpack.c.l.b16 %v159
    %v669 = vunpack.c.l.b16 %v160
    %v670 = vunpack.c.l.b16 %v161
    %v671 = vunpack.c.l.b16 %v162
    %v672 = vunpack.c.l.b16 %v163
    %v673 = vunpack.c.l.b16 %v164
    %v674 = vunpack.c.l.b16 %v165
    %v675 = vunpack.c.l.b16 %v166
    %v676 = vunpack.c.l.b16 %v167
    %v677 = vunpack.c.l.b16 %v168
    %v678 = vunpack.c.l.b16 %v169
    %v679 = vunpack.c.l.b16 %v170
    %v680 = vunpack.c.l.b16 %v171
    %v681 = vunpack.c.l.b16 %v172
    %v682 = vunpack.c.l.b16 %v173
    %v683 = vunpack.c.l.b16 %v174
    %v684 = vunpack.c.l.b16 %v175
    %v685 = vunpack.c.l.b16 %v176
    %v686 = vunpack.c.l.b16 %v177
    %v687 = vunpack.c.l.b16 %v178
    %v688 = vunpack.c.l.b16 %v179
    %v689 = vunpack.c.l.b16 %v180
    %v690 = vunpack.c.l.b16 %v181
    %v691 = vunpack.c.l.b16 %v182
    %v692 = vunpack.c.l.b16 %v183
    %v693 = vunpack.c.l.b16 %v184
    %v694 = vunpack.c.l.b16 %v185
    %v695 = vunpack.c.l.b16 %v186
    %v696 = vunpack.c.l.b16 %v187
    %v697 = vunpack.c.l.b16 %v188
    %v698 = vunpack.c.l.b16 %v189
    %v699 = vunpack.c.l.b16 %v190
    %v700 = vunpack.c.l.b16 %v191
    %v701 = vunpack.c.l.b16 %v192
    %v702 = vunpack.c.l.b16 %v193
    %v703 = vunpack.c.l.b16 %v194
    %v704 = vunpack.c.l.b16 %v195
    %v705 = vunpack.c.l.b16 %v196
    %v706 = vunpack.c.l.b16 %v197
    %v707 = vunpack.c.l.b16 %v198
    %v708 = vunpack.c.l.b16 %v199
    %v709 = vunpack.c.l.b16 %v200
    %v710 = vunpack.c.l.b16 %v201
    %v711 = vunpack.c.l.b16 %v202
    %v712 = vunpack.c.l.b16 %v203
    %v713 = vunpack.c.l.b16 %v204
    %v714 = vunpack.c.l.b16 %v205
    %v715 = vunpack.c.l.b16 %v206
    %v716 = vunpack.c.l.b16 %v207
    %v717 = vunpack.c.l.b16 %v208
    %v718 = vunpack.c.l.b16 %v209
    %v719 = vunpack.c.l.b16 %v210
    %v720 = vunpack.c.l.b16 %v211
    %v721 = vunpack.c.l.b16 %v212
    %v722 = vunpack.c.l.b16 %v213
    %v723 = vunpack.c.l.b16 %v214
    %v724 = vunpack.c.l.b16 %v215
    %v725 = vunpack.c.l.b16 %v216
    %v726 = vunpack.c.l.b16 %v217
    %v727 = vunpack.c.l.b16 %v218
    %v728 = vunpack.c.l.b16 %v219
    %v729 = vunpack.c.l.b16 %v220
    %v730 = vunpack.c.l.b16 %v221
    %v731 = vunpack.c.l.b16 %v222
    %v732 = vunpack.c.l.b16 %v223
    %v733 = vpack.c.b16 %v534, %v533
    %v734 = vpack.c.b16 %v536, %v535
    %v735 = vpack.c.b16 %v538, %v537
    %v736 = vpack.c.b16 %v540, %v539
    %v737 = vpack.c.b16 %v542, %v541
    %v738 = vpack.c.b16 %v544, %v543
    %v739 = vpack.c.b16 %v546, %v545
    %v740 = vpack.c.b16 %v548, %v547
    %v741 = vpack.c.b16 %v550, %v549
    %v742 = vpack.c.b16 %v552, %v551
    %v743 = vpack.c.b16 %v554, %v553
    %v744 = vpack.c.b16 %v556, %v555
    %v745 = vpack.c.b16 %v558, %v557
    %v746 = vpack.c.b16 %v560, %v559
    %v747 = vpack.c.b16 %v562, %v561
    %v748 = vpack.c.b16 %v564, %v563
    %v749 = vpack.c.b16 %v566, %v565
    %v750 = vpack.c.b16 %v568, %v567
    %v751 = vpack.c.b16 %v570, %v569
    %v752 = vpack.c.b16 %v572, %v571
    %v753 = vpack.c.b16 %v574, %v573
    %v754 = vpack.c.b16 %v576, %v575
    %v755 = vpack.c.b16 %v578, %v577
    %v756 = vpack.c.b16 %v580, %v579
    %v757 = vpack.c.b16 %v582, %v581
    %v758 = vpack.c.b16 %v584, %v583
    %v759 = vpack.c.b16 %v586, %v585
    %v760 = vpack.c.b16 %v588, %v587
    %v761 = vpack.c.b16 %v590, %v589
    %v762 = vpack.c.b16 %v592, %v591
    %v763 = vpack.c.b16 %v594, %v593
    %v764 = vpack.c.b16 %v596, %v595
    %v765 = vpack.c.b16 %v598, %v597
    %v766 = vpack.c.b16 %v600, %v599
    %v767 = vpack.c.b16 %v602, %v601
    %v768 = vpack.c.b16 %v604, %v603
    %v769 = vpack.c.b16 %v606, %v605
    %v770 = vpack.c.b16 %v608, %v607
    %v771 = vpack.c.b16 %v610, %v609
    %v772 = vpack.c.b16 %v612, %v611
    %v773 = vpack.c.b16 %v614, %v613
    %v774 = vpack.c.b16 %v616, %v615
    %v775 = vpack.c.b16 %v618, %v617
    %v776 = vpack.c.b16 %v620, %v619
    %v777 = vpack.c.b16 %v622, %v621
    %v778 = vpack.c.b16 %v624, %v623
    %v779 = vpack.c.b16 %v626, %v625
    %v780 = vpack.c.b16 %v628, %v627
    %v781 = vpack.c.b16 %v630, %v629
    %v782 = vpack.c.b16 %v632, %v631
    %v783 = vpack.c.b16 %v634, %v633
    %v784 = vpack.c.b16 %v636, %v635
    %v785 = vpack.c.b16 %v638, %v637
    %v786 = vpack.c.b16 %v640, %v639
    %v787 = vpack.c.b16 %v642, %v641
    %v788 = vpack.c.b16 %v644, %v643
    %v789 = vpack.c.b16 %v646, %v645
    %v790 = vpack.c.b16 %v648, %v647
    %v791 = vpack.c.b16 %v650, %v649
    %v792 = vpack.c.b16 %v652, %v651
    %v793 = vpack.c.b16 %v654, %v653
    %v794 = vpack.c.b16 %v656, %v655
    %v795 = vpack.c.b16 %v658, %v657
    %v796 = vpack.c.b16 %v660, %v659
    %v797 = vpack.c.b16 %v662, %v661
    %v798 = vpack.c.b16 %v664, %v663
    %v799 = vpack.c.b16 %v666, %v665
    %v800 = vpack.c.b16 %v668, %v667
    %v801 = vpack.c.b16 %v670, %v669
    %v802 = vpack.c.b16 %v672, %v671
    %v803 = vpack.c.b16 %v674, %v673
    %v804 = vpack.c.b16 %v676, %v675
    %v805 = vpack.c.b16 %v678, %v677
    %v806 = vpack.c.b16 %v680, %v679
    %v807 = vpack.c.b16 %v682, %v681
    %v808 = vpack.c.b16 %v684, %v683
    %v809 = vpack.c.b16 %v686, %v685
    %v810 = vpack.c.b16 %v688, %v687
    %v811 = vpack.c.b16 %v690, %v689
    %v812 = vpack.c.b16 %v692, %v691
    %v813 = vpack.c.b16 %v694, %v693
    %v814 = vpack.c.b16 %v696, %v695
    %v815 = vpack.c.b16 %v698, %v697
    %v816 = vpack.c.b16 %v700, %v699
    %v817 = vpack.c.b16 %v702, %v701
    %v818 = vpack.c.b16 %v704, %v703
    %v819 = vpack.c.b16 %v706, %v705
    %v820 = vpack.c.b16 %v708, %v707
    %v821 = vpack.c.b16 %v710, %v709
    %v822 = vpack.c.b16 %v712, %v711
    %v823 = vpack.c.b16 %v714, %v713
    %v824 = vpack.c.b16 %v716, %v715
    %v825 = vpack.c.b16 %v718, %v717
    %v826 = vpack.c.b16 %v720, %v719
    %v827 = vpack.c.b16 %v722, %v721
    %v828 = vpack.c.b16 %v724, %v723
    %v829 = vpack.c.b16 %v726, %v725
    %v830 = vpack.c.b16 %v728, %v727
    %v831 = vpack.c.b16 %v730, %v729
    %v832 = vpack.c.b16 %v732, %v731
    %vm933 = vcmask 523264
    %v935 = vsel %vm933, %v311, 0
    %937 = vmatprep.subr.bf16.mxu0 0
    %938 = vmatpush1.bf16.msra.mxu0 %v740
    %939 = vmatprep.subr.bf16.mxu0 0
    %940 = vmatpush1.bf16.msra.mxu0 %v739
    %941 = vmatprep.subr.bf16.mxu0 0
    %942 = vmatpush1.bf16.msra.mxu0 %v738
    %943 = vmatprep.subr.bf16.mxu0 0
    %944 = vmatpush1.bf16.msra.mxu0 %v737
    %945 = vmatprep.subr.bf16.mxu0 0
    %946 = vmatpush1.bf16.msra.mxu0 %v736
    %947 = vmatprep.subr.bf16.mxu0 0
    %948 = vmatpush1.bf16.msra.mxu0 %v735
    %949 = vmatprep.subr.bf16.mxu0 0
    %950 = vmatpush1.bf16.msra.mxu0 %v734
    %951 = vmatprep.subr.bf16.mxu0 0
    %952 = vmatpush1.bf16.msra.mxu0 %v733
    %953 = vmatprep.subr.bf16.mxu0 0
    %954 = vmatpush2.bf16.msra.mxu0 %v748
    %955 = vmatprep.subr.bf16.mxu0 0
    %956 = vmatpush2.bf16.msra.mxu0 %v747
    %957 = vmatprep.subr.bf16.mxu0 0
    %958 = vmatpush2.bf16.msra.mxu0 %v746
    %959 = vmatprep.subr.bf16.mxu0 0
    %960 = vmatpush2.bf16.msra.mxu0 %v745
    %961 = vmatprep.subr.bf16.mxu0 0
    %962 = vmatpush2.bf16.msra.mxu0 %v744
    %963 = vmatprep.subr.bf16.mxu0 0
    %964 = vmatpush2.bf16.msra.mxu0 %v743
    %965 = vmatprep.subr.bf16.mxu0 0
    %966 = vmatpush2.bf16.msra.mxu0 %v742
    %967 = vmatprep.subr.bf16.mxu0 0
    %968 = vmatpush2.bf16.msra.mxu0 %v741
    %969 = vmatprep.mubr.bf16.mxu0 %v270
    %970 = vmatmul.mubr.bf16.gmra.mxu0 %v256
    %v971 = vpop.f32.mrf.mxu0
    %v972 = vadd.f32 %v229, %v971
    %v973 = vpop.f32.mrf.mxu0
    %v974 = vpop.f32.mrf.mxu0
    %v975 = vpop.f32.mrf.mxu0
    %976 = vdwg.mxu0
    %977 = vmatprep.subr.bf16.mxu0 0
    %978 = vmatpush1.bf16.msra.mxu0 %v756
    %979 = vmatprep.subr.bf16.mxu0 0
    %980 = vmatpush1.bf16.msra.mxu0 %v755
    %981 = vmatprep.subr.bf16.mxu0 0
    %982 = vmatpush1.bf16.msra.mxu0 %v754
    %983 = vmatprep.subr.bf16.mxu0 0
    %984 = vmatpush1.bf16.msra.mxu0 %v753
    %985 = vmatprep.subr.bf16.mxu0 0
    %986 = vmatpush1.bf16.msra.mxu0 %v752
    %987 = vmatprep.subr.bf16.mxu0 0
    %988 = vmatpush1.bf16.msra.mxu0 %v751
    %989 = vmatprep.subr.bf16.mxu0 0
    %990 = vmatpush1.bf16.msra.mxu0 %v750
    %991 = vmatprep.subr.bf16.mxu0 0
    %992 = vmatpush1.bf16.msra.mxu0 %v749
    %993 = vmatprep.subr.bf16.mxu0 0
    %994 = vmatpush2.bf16.msra.mxu0 %v764
    %995 = vmatprep.subr.bf16.mxu0 0
    %996 = vmatpush2.bf16.msra.mxu0 %v763
    %997 = vmatprep.subr.bf16.mxu0 0
    %998 = vmatpush2.bf16.msra.mxu0 %v762
    %999 = vmatprep.subr.bf16.mxu0 0
    %1000 = vmatpush2.bf16.msra.mxu0 %v761
    %1001 = vmatprep.subr.bf16.mxu0 0
    %1002 = vmatpush2.bf16.msra.mxu0 %v760
    %1003 = vmatprep.subr.bf16.mxu0 0
    %1004 = vmatpush2.bf16.msra.mxu0 %v759
    %1005 = vmatprep.subr.bf16.mxu0 0
    %1006 = vmatpush2.bf16.msra.mxu0 %v758
    %1007 = vmatprep.subr.bf16.mxu0 0
    %1008 = vmatpush2.bf16.msra.mxu0 %v757
    %1009 = vmatprep.mubr.bf16.mxu0 %v280
    %1010 = vmatmul.mubr.bf16.gmra.mxu0 %v278
    %v1011 = vpop.f32.mrf.mxu0
    %v1012 = vadd.f32 %v972, %v1011
    %v1013 = vpop.f32.mrf.mxu0
    %v1014 = vpop.f32.mrf.mxu0
    %v1015 = vpop.f32.mrf.mxu0
    %1016 = vdwg.mxu0
    %1017 = vmatprep.subr.bf16.mxu0 0
    %1018 = vmatpush1.bf16.msra.mxu0 %v772
    %1019 = vmatprep.subr.bf16.mxu0 0
    %1020 = vmatpush1.bf16.msra.mxu0 %v771
    %1021 = vmatprep.subr.bf16.mxu0 0
    %1022 = vmatpush1.bf16.msra.mxu0 %v770
    %1023 = vmatprep.subr.bf16.mxu0 0
    %1024 = vmatpush1.bf16.msra.mxu0 %v769
    %1025 = vmatprep.subr.bf16.mxu0 0
    %1026 = vmatpush1.bf16.msra.mxu0 %v768
    %1027 = vmatprep.subr.bf16.mxu0 0
    %1028 = vmatpush1.bf16.msra.mxu0 %v767
    %1029 = vmatprep.subr.bf16.mxu0 0
    %1030 = vmatpush1.bf16.msra.mxu0 %v766
    %1031 = vmatprep.subr.bf16.mxu0 0
    %1032 = vmatpush1.bf16.msra.mxu0 %v765
    %1033 = vmatprep.subr.bf16.mxu0 0
    %1034 = vmatpush2.bf16.msra.mxu0 %v780
    %1035 = vmatprep.subr.bf16.mxu0 0
    %1036 = vmatpush2.bf16.msra.mxu0 %v779
    %1037 = vmatprep.subr.bf16.mxu0 0
    %1038 = vmatpush2.bf16.msra.mxu0 %v778
    %1039 = vmatprep.subr.bf16.mxu0 0
    %1040 = vmatpush2.bf16.msra.mxu0 %v777
    %1041 = vmatprep.subr.bf16.mxu0 0
    %1042 = vmatpush2.bf16.msra.mxu0 %v776
    %1043 = vmatprep.subr.bf16.mxu0 0
    %1044 = vmatpush2.bf16.msra.mxu0 %v775
    %1045 = vmatprep.subr.bf16.mxu0 0
    %1046 = vmatpush2.bf16.msra.mxu0 %v774
    %1047 = vmatprep.subr.bf16.mxu0 0
    %1048 = vmatpush2.bf16.msra.mxu0 %v773
    %1049 = vmatprep.mubr.bf16.mxu0 %v277
    %1050 = vmatmul.mubr.bf16.gmra.mxu0 %v263
    %v1051 = vpop.f32.mrf.mxu0
    %v1052 = vadd.f32 %v1012, %v1051
    %v1053 = vpop.f32.mrf.mxu0
    %v1054 = vpop.f32.mrf.mxu0
    %v1055 = vpop.f32.mrf.mxu0
    %1056 = vdwg.mxu0
    %1057 = vmatprep.subr.bf16.mxu0 0
    %1058 = vmatpush1.bf16.msra.mxu0 %v788
    %1059 = vmatprep.subr.bf16.mxu0 0
    %1060 = vmatpush1.bf16.msra.mxu0 %v787
    %1061 = vmatprep.subr.bf16.mxu0 0
    %1062 = vmatpush1.bf16.msra.mxu0 %v786
    %1063 = vmatprep.subr.bf16.mxu0 0
    %1064 = vmatpush1.bf16.msra.mxu0 %v785
    %1065 = vmatprep.subr.bf16.mxu0 0
    %1066 = vmatpush1.bf16.msra.mxu0 %v784
    %1067 = vmatprep.subr.bf16.mxu0 0
    %1068 = vmatpush1.bf16.msra.mxu0 %v783
    %1069 = vmatprep.subr.bf16.mxu0 0
    %1070 = vmatpush1.bf16.msra.mxu0 %v782
    %1071 = vmatprep.subr.bf16.mxu0 0
    %1072 = vmatpush1.bf16.msra.mxu0 %v781
    %1073 = vmatprep.subr.bf16.mxu0 0
    %1074 = vmatpush2.bf16.msra.mxu0 %v796
    %1075 = vmatprep.subr.bf16.mxu0 0
    %1076 = vmatpush2.bf16.msra.mxu0 %v795
    %1077 = vmatprep.subr.bf16.mxu0 0
    %1078 = vmatpush2.bf16.msra.mxu0 %v794
    %1079 = vmatprep.subr.bf16.mxu0 0
    %1080 = vmatpush2.bf16.msra.mxu0 %v793
    %1081 = vmatprep.subr.bf16.mxu0 0
    %1082 = vmatpush2.bf16.msra.mxu0 %v792
    %1083 = vmatprep.subr.bf16.mxu0 0
    %1084 = vmatpush2.bf16.msra.mxu0 %v791
    %1085 = vmatprep.subr.bf16.mxu0 0
    %1086 = vmatpush2.bf16.msra.mxu0 %v790
    %1087 = vmatprep.subr.bf16.mxu0 0
    %1088 = vmatpush2.bf16.msra.mxu0 %v789
    %1089 = vmatprep.mubr.bf16.mxu0 %v281
    %1090 = vmatmul.mubr.bf16.gmra.mxu0 %v279
    %v1091 = vpop.f32.mrf.mxu0
    %v1092 = vadd.f32 %v1052, %v1091
    %v1093 = vpop.f32.mrf.mxu0
    %v1094 = vpop.f32.mrf.mxu0
    %v1095 = vpop.f32.mrf.mxu0
    %1096 = vdwg.mxu0
    %1097 = vmatprep.subr.bf16.mxu0 0
    %1098 = vmatpush1.bf16.msra.mxu0 %v804
    %1099 = vmatprep.subr.bf16.mxu0 0
    %1100 = vmatpush1.bf16.msra.mxu0 %v803
    %1101 = vmatprep.subr.bf16.mxu0 0
    %1102 = vmatpush1.bf16.msra.mxu0 %v802
    %1103 = vmatprep.subr.bf16.mxu0 0
    %1104 = vmatpush1.bf16.msra.mxu0 %v801
    %1105 = vmatprep.subr.bf16.mxu0 0
    %1106 = vmatpush1.bf16.msra.mxu0 %v800
    %1107 = vmatprep.subr.bf16.mxu0 0
    %1108 = vmatpush1.bf16.msra.mxu0 %v799
    %1109 = vmatprep.subr.bf16.mxu0 0
    %1110 = vmatpush1.bf16.msra.mxu0 %v798
    %1111 = vmatprep.subr.bf16.mxu0 0
    %1112 = vmatpush1.bf16.msra.mxu0 %v797
    %1113 = vmatprep.subr.bf16.mxu0 0
    %1114 = vmatpush2.bf16.msra.mxu0 %v812
    %1115 = vmatprep.subr.bf16.mxu0 0
    %1116 = vmatpush2.bf16.msra.mxu0 %v811
    %1117 = vmatprep.subr.bf16.mxu0 0
    %1118 = vmatpush2.bf16.msra.mxu0 %v810
    %1119 = vmatprep.subr.bf16.mxu0 0
    %1120 = vmatpush2.bf16.msra.mxu0 %v809
    %1121 = vmatprep.subr.bf16.mxu0 0
    %1122 = vmatpush2.bf16.msra.mxu0 %v808
    %1123 = vmatprep.subr.bf16.mxu0 0
    %1124 = vmatpush2.bf16.msra.mxu0 %v807
    %1125 = vmatprep.subr.bf16.mxu0 0
    %1126 = vmatpush2.bf16.msra.mxu0 %v806
    %1127 = vmatprep.subr.bf16.mxu0 0
    %1128 = vmatpush2.bf16.msra.mxu0 %v805
    %1129 = vmatprep.mubr.bf16.mxu0 %v318
    %1130 = vmatmul.mubr.bf16.gmra.mxu0 %v304
    %v1131 = vpop.f32.mrf.mxu0
    %v1132 = vadd.f32 %v1092, %v1131
    %v1133 = vpop.f32.mrf.mxu0
    %v1134 = vpop.f32.mrf.mxu0
    %v1135 = vpop.f32.mrf.mxu0
    %1136 = vdwg.mxu0
    %1137 = vmatprep.subr.bf16.mxu0 0
    %1138 = vmatpush1.bf16.msra.mxu0 %v820
    %1139 = vmatprep.subr.bf16.mxu0 0
    %1140 = vmatpush1.bf16.msra.mxu0 %v819
    %1141 = vmatprep.subr.bf16.mxu0 0
    %1142 = vmatpush1.bf16.msra.mxu0 %v818
    %1143 = vmatprep.subr.bf16.mxu0 0
    %1144 = vmatpush1.bf16.msra.mxu0 %v817
    %1145 = vmatprep.subr.bf16.mxu0 0
    %1146 = vmatpush1.bf16.msra.mxu0 %v816
    %1147 = vmatprep.subr.bf16.mxu0 0
    %1148 = vmatpush1.bf16.msra.mxu0 %v815
    %1149 = vmatprep.subr.bf16.mxu0 0
    %1150 = vmatpush1.bf16.msra.mxu0 %v814
    %1151 = vmatprep.subr.bf16.mxu0 0
    %1152 = vmatpush1.bf16.msra.mxu0 %v813
    %1153 = vmatprep.subr.bf16.mxu0 0
    %1154 = vmatpush2.bf16.msra.mxu0 %v828
    %1155 = vmatprep.subr.bf16.mxu0 0
    %1156 = vmatpush2.bf16.msra.mxu0 %v827
    %1157 = vmatprep.subr.bf16.mxu0 0
    %1158 = vmatpush2.bf16.msra.mxu0 %v826
    %1159 = vmatprep.subr.bf16.mxu0 0
    %1160 = vmatpush2.bf16.msra.mxu0 %v825
    %1161 = vmatprep.subr.bf16.mxu0 0
    %1162 = vmatpush2.bf16.msra.mxu0 %v824
    %1163 = vmatprep.subr.bf16.mxu0 0
    %1164 = vmatpush2.bf16.msra.mxu0 %v823
    %1165 = vmatprep.subr.bf16.mxu0 0
    %1166 = vmatpush2.bf16.msra.mxu0 %v822
    %1167 = vmatprep.subr.bf16.mxu0 0
    %1168 = vmatpush2.bf16.msra.mxu0 %v821
    %1169 = vmatprep.mubr.bf16.mxu0 %v320
    %1170 = vmatmul.mubr.bf16.gmra.mxu0 %v319
    %v1171 = vpop.f32.mrf.mxu0
    %v1172 = vadd.f32 %v1132, %v1171
    %v1173 = vpop.f32.mrf.mxu0
    %v1174 = vpop.f32.mrf.mxu0
    %v1175 = vpop.f32.mrf.mxu0
    %1176 = vdwg.mxu0
    %1177 = vmatprep.subr.bf16.mxu0 0
    %1178 = vmatpush1.bf16.msra.mxu0 0
    %1179 = vmatprep.subr.bf16.mxu0 0
    %1180 = vmatpush1.bf16.msra.mxu0 0
    %1181 = vmatprep.subr.bf16.mxu0 0
    %1182 = vmatpush1.bf16.msra.mxu0 0
    %1183 = vmatprep.subr.bf16.mxu0 0
    %1184 = vmatpush1.bf16.msra.mxu0 0
    %1185 = vmatprep.subr.bf16.mxu0 0
    %1186 = vmatpush1.bf16.msra.mxu0 %v832
    %1187 = vmatprep.subr.bf16.mxu0 0
    %1188 = vmatpush1.bf16.msra.mxu0 %v831
    %1189 = vmatprep.subr.bf16.mxu0 0
    %1190 = vmatpush1.bf16.msra.mxu0 %v830
    %1191 = vmatprep.subr.bf16.mxu0 0
    %1192 = vmatpush1.bf16.msra.mxu0 %v829
    %1193 = vmatprep.subr.bf16.mxu0 0
    %1194 = vmatpush2.bf16.msra.mxu0 0
    %1195 = vmatprep.subr.bf16.mxu0 0
    %1196 = vmatpush2.bf16.msra.mxu0 0
    %1197 = vmatprep.subr.bf16.mxu0 0
    %1198 = vmatpush2.bf16.msra.mxu0 0
    %1199 = vmatprep.subr.bf16.mxu0 0
    %1200 = vmatpush2.bf16.msra.mxu0 0
    %1201 = vmatprep.subr.bf16.mxu0 0
    %1202 = vmatpush2.bf16.msra.mxu0 0
    %1203 = vmatprep.subr.bf16.mxu0 0
    %1204 = vmatpush2.bf16.msra.mxu0 0
    %1205 = vmatprep.subr.bf16.mxu0 0
    %1206 = vmatpush2.bf16.msra.mxu0 0
    %1207 = vmatprep.subr.bf16.mxu0 0
    %1208 = vmatpush2.bf16.msra.mxu0 0
    %1209 = vmatprep.mubr.bf16.mxu0 0
    %1210 = vmatmul.mubr.bf16.gmra.mxu0 %v935
    %v1211 = vpop.f32.mrf.mxu0
    %v1212 = vadd.f32 %v1172, %v1211
    %v1213 = vpop.f32.mrf.mxu0
    %v1214 = vpop.f32.mrf.mxu0
    %v1215 = vpop.f32.mrf.mxu0
    %1216 = vdwg.mxu0
    %v1217 = vmax.f32 %v1212, 0.0
    %v1218 = vld [vmem:[%s3] sm:$0xff]
    %v1219 = vld [vmem:[%s3 + $0x8] sm:$0xff]
    %v1220 = vld [vmem:[%s3 + $0x10] sm:$0xff]
    %v1221 = vld [vmem:[%s3 + $0x18] sm:$0xff]
    %v1222 = vld [vmem:[%s3 + $0x20] sm:$0xff]
    %v1223 = vld [vmem:[%s3 + $0x28] sm:$0xff]
    %v1224 = vld [vmem:[%s3 + $0x30] sm:$0xff]
    %v1225 = vld [vmem:[%s3 + $0x38] sm:$0xff]
    %v1226 = vld [vmem:[%s3 + $0x40] sm:$0xff]
    %v1227 = vld [vmem:[%s3 + $0x48] sm:$0xff]
    %v1228 = vld [vmem:[%s3 + $0x50] sm:$0xff]
    %v1229 = vld [vmem:[%s3 + $0x58] sm:$0xff]
    %v1230 = vld [vmem:[%s3 + $0x60] sm:$0xff]
    %v1231 = vld [vmem:[%s3 + $0x68] sm:$0xff]
    %v1232 = vld [vmem:[%s3 + $0x70] sm:$0xff]
    %v1233 = vld [vmem:[%s3 + $0x78] sm:$0xff]
    %v1234 = vld [vmem:[%s4] sm:$0x1]
    %v1236 = vlaneseq
    %v1237 = vshrl.u32 %v1236, 7
    %v1238 = vsub.s32 0, %v1237
    %v1239 = vrot.slane %v1234, %v1238
    %1241 = vmatprep.subr.mxu0 0.0
    %1242 = vmatpush1.msra.mxu0 %v1233
    %1243 = vmatprep.subr.mxu0 0.0
    %1244 = vmatpush1.msra.mxu0 %v1232
    %1245 = vmatprep.subr.mxu0 0.0
    %1246 = vmatpush1.msra.mxu0 %v1231
    %1247 = vmatprep.subr.mxu0 0.0
    %1248 = vmatpush1.msra.mxu0 %v1230
    %1249 = vmatprep.subr.mxu0 0.0
    %1250 = vmatpush1.msra.mxu0 %v1229
    %1251 = vmatprep.subr.mxu0 0.0
    %1252 = vmatpush1.msra.mxu0 %v1228
    %1253 = vmatprep.subr.mxu0 0.0
    %1254 = vmatpush1.msra.mxu0 %v1227
    %1255 = vmatprep.subr.mxu0 0.0
    %1256 = vmatpush1.msra.mxu0 %v1226
    %1257 = vmatprep.subr.mxu0 0.0
    %1258 = vmatpush1.msra.mxu0 %v1225
    %1259 = vmatprep.subr.mxu0 0.0
    %1260 = vmatpush1.msra.mxu0 %v1224
    %1261 = vmatprep.subr.mxu0 0.0
    %1262 = vmatpush1.msra.mxu0 %v1223
    %1263 = vmatprep.subr.mxu0 0.0
    %1264 = vmatpush1.msra.mxu0 %v1222
    %1265 = vmatprep.subr.mxu0 0.0
    %1266 = vmatpush1.msra.mxu0 %v1221
    %1267 = vmatprep.subr.mxu0 0.0
    %1268 = vmatpush1.msra.mxu0 %v1220
    %1269 = vmatprep.subr.mxu0 0.0
    %1270 = vmatpush1.msra.mxu0 %v1219
    %1271 = vmatprep.subr.mxu0 0.0
    %1272 = vmatpush1.msra.mxu0 %v1218
    %1273 = vmatprep.subr.mxu0 0.0
    %1274 = vmatpush2.msra.mxu0 0.0
    %1275 = vmatprep.subr.mxu0 0.0
    %1276 = vmatpush2.msra.mxu0 0.0
    %1277 = vmatprep.subr.mxu0 0.0
    %1278 = vmatpush2.msra.mxu0 0.0
    %1279 = vmatprep.subr.mxu0 0.0
    %1280 = vmatpush2.msra.mxu0 0.0
    %1281 = vmatprep.subr.mxu0 0.0
    %1282 = vmatpush2.msra.mxu0 0.0
    %1283 = vmatprep.subr.mxu0 0.0
    %1284 = vmatpush2.msra.mxu0 0.0
    %1285 = vmatprep.subr.mxu0 0.0
    %1286 = vmatpush2.msra.mxu0 0.0
    %1287 = vmatprep.subr.mxu0 0.0
    %1288 = vmatpush2.msra.mxu0 0.0
    %1289 = vmatprep.subr.mxu0 0.0
    %1290 = vmatpush2.msra.mxu0 0.0
    %1291 = vmatprep.subr.mxu0 0.0
    %1292 = vmatpush2.msra.mxu0 0.0
    %1293 = vmatprep.subr.mxu0 0.0
    %1294 = vmatpush2.msra.mxu0 0.0
    %1295 = vmatprep.subr.mxu0 0.0
    %1296 = vmatpush2.msra.mxu0 0.0
    %1297 = vmatprep.subr.mxu0 0.0
    %1298 = vmatpush2.msra.mxu0 0.0
    %1299 = vmatprep.subr.mxu0 0.0
    %1300 = vmatpush2.msra.mxu0 0.0
    %1301 = vmatprep.subr.mxu0 0.0
    %1302 = vmatpush2.msra.mxu0 0.0
    %1303 = vmatprep.subr.mxu0 0.0
    %1304 = vmatpush2.msra.mxu0 0.0
    %1305 = vmatprep.mubr.f32.mxu0 0.0
    %1306 = vmatmul.mubr.f32.gmra.mxu0 %v1217
    %v1307 = vpop.f32.mrf.mxu0
    %v1308 = vadd.f32 %v1239, %v1307
    %v1309 = vpop.f32.mrf.mxu0
    %1310 = vdwg.mxu0
    %vm1311 = vcmask 74752
    %v1312 = vsel %vm1311, %v1308, -inf
    %1313 = vmax.xlane.f32.xlu0 %v1312
    %v1314 = vpop.xlane.xlu0 %1313
    %v1315 = vsub.f32 %v1308, %v1314
    %v1316 = vmul.f32 %v1315, 1.442695
    %v1317 = vpow.pop %v1316
    %v1318 = vsel %vm1311, %v1317, 0.0
    %1319 = vadd.xlane.f32.xlu0 %v1318
    %v1320 = vpop.xlane.xlu0 %1319
    %v1321 = vrcp.pop %v1320
    %v1322 = vmul.f32 %v1317, %v1321
    %1323 = vst.msk [vmem:[#allocation2] sm:$0x3] %vm1311, %v1322
    // Predicated region
    $region22: #{pytorch_cnn_forward.5} parent=1 // pred_check
      _
    $region23: #{pytorch_cnn_forward.5} parent=1 // pred_check_branch
      %1325 = sbr.rel (0) target = $region25
    $region24: #{pytorch_cnn_forward.5} parent=1 // pred_region
      %s1327 = ssub.s32 32, 32
      %1328 = vsyncadd [#allocation3], %s1327
      %s1330 = sshll.u32 [#allocation2], 4
      %s1331 = int_to_ptr.vmem [resolvable:$true] %s1330
      %1333 = dma.vmem_to_hbm [thread:$0]  %s1331, 32, %s5, [#allocation3]
    $region25: #{pytorch_cnn_forward.5} parent=1 // pred_fallthru
      _
    // Predicated region
    $region26: #{pytorch_cnn_forward.5} parent=1 // pred_check
      _
    $region27: #{pytorch_cnn_forward.5} parent=1 // pred_check_branch
      %1335 = sbr.rel (0) target = $region29
    $region28: #{pytorch_cnn_forward.5} parent=1 // pred_region
      %1336 = dma.done [#allocation3], 32
    $region29: #{pytorch_cnn_forward.5} parent=1 // pred_fallthru
      _
    %1337 = vsyncpa [#allocation3], 1

</llo_original>
